<compile_context>
chip_gen: v6e
topology: v6e:2x2x1
jax: 0.10.0
libtpu: 0.0.40
codegen_flags: <defaults>
</compile_context>

<pallas_src>
import jax
import jax.numpy as jnp
import numpy as np
from jax import lax
from jax.experimental import pallas as pl
from jax.experimental.pallas import tpu as pltpu

EPS = 1e-5                     # nn.BatchNorm2d default
COUTP = 384                    # 360 padded up to 3x128 lanes
TM = 512                       # M-tile for matmul / BN-apply kernels


def _round_up(x, m):
    return (x + m - 1) // m * m


def _pick_vmem_limit():
    # ~3/4 of physical VMEM, capped at 96 MiB -> ~96 MiB on v5e/v6e (128 MiB
    # physical), ~48 MiB on v7x (64 MiB physical).  Conservative fallback.
    try:
        cap = int(pltpu.get_tpu_info().vmem_capacity_bytes)
    except Exception:
        cap = 64 * 1024 * 1024
    return min((cap // 4) * 3, 96 * 1024 * 1024)


VMEM_LIMIT = _pick_vmem_limit()


# ------------------------------- glue helpers ------------------------------ #

def parity_split(x):
    """x: (N,H,W,C) -> (N,2,2,Ho+1,Wo+1,C) with xp[:,p,q] = x[:,p::2,q::2].

    Zero-padded to a common (Ho+1, Wo+1).  The padding is never read by the
    3x3/stride-2 conv or pool taps for H,W >= 3: a tap at parity (p,q) reads
    rows rs..rs+Ho-1 and cols cs..cs+Wo-1 with rs,cs in {0,1}, all of which
    exist in that parity sub-grid.  Total volume ~1x the input (no im2col)."""
    N, H, W, C = x.shape
    Ho = (H - 3) // 2 + 1
    Wo = (W - 3) // 2 + 1
    Hh, Wh = Ho + 1, Wo + 1
    rows = []
    for p_ in range(2):
        cols = []
        for q_ in range(2):
            s = x[:, p_::2, q_::2, :]
            s = jnp.pad(s, ((0, 0), (0, Hh - s.shape[1]),
                            (0, Wh - s.shape[2]), (0, 0)))
            cols.append(s)
        rows.append(jnp.stack(cols, axis=1))
    return jnp.stack(rows, axis=1)          # (N, 2, 2, Hh, Wh, C)


def bn_scale_shift(stats, m_real, gamma, beta):
    """Fold partial (sum, sumsq) into per-channel BN (scale, shift), f32.

    NOTE: var = E[x^2] - E[x]^2 in f32 can catastrophically cancel when
    |mean| >> std at very large M; fine for training-mode batch stats at this
    scale.  Only valid for training-mode BN (bias-drop / BN-fold rely on it)."""
    tot = stats.sum(axis=0)                  # (2, coutp)
    cout = gamma.shape[0]
    mean = tot[0, :cout] / m_real
    var = jnp.maximum(tot[1, :cout] / m_real - mean * mean, 0.0)
    scale = gamma * lax.rsqrt(var + EPS)
    shift = beta - mean * scale
    return scale.astype(jnp.float32), shift.astype(jnp.float32)


def _pack_scale_shift(scale, shift, coutp):
    pad = coutp - scale.shape[0]
    return jnp.stack([jnp.pad(scale, (0, pad)),
                      jnp.pad(shift, (0, pad))], axis=0)     # (2, coutp) f32


# ----------------------- Pallas kernels + wrappers ------------------------- #

def matmul_stats(x_flat, w, coutp, *, out_dtype=jnp.bfloat16):
    """1x1 conv as an M-tiled bf16 matmul that also emits per-tile BN partials.

    Returns (y: (Mp, coutp) out_dtype, stats: (ntiles, 2, coutp) f32).  Rows
    are zero-padded to the tile size; since conv biases are dropped, padded
    rows contribute exactly zero to the stats."""
    M, K = x_flat.shape
    cout = w.shape[-1]
    tm = min(TM, _round_up(M, 8))
    Mp = _round_up(M, tm)
    ntiles = Mp // tm
    xb = jnp.pad(x_flat.astype(jnp.bfloat16), ((0, Mp - M), (0, 0)))
    wb = jnp.pad(w, ((0, 0), (0, coutp - cout))).astype(jnp.bfloat16)

    def kernel(x_ref, w_ref, y_ref, st_ref):
        y = jnp.dot(x_ref[...], w_ref[...], preferred_element_type=jnp.float32)
        y_ref[...] = y.astype(y_ref.dtype)
        st_ref[0:1, :] = jnp.sum(y, axis=0, keepdims=True)
        st_ref[1:2, :] = jnp.sum(y * y, axis=0, keepdims=True)

    y, st = pl.pallas_call(
        kernel,
        out_shape=(jax.ShapeDtypeStruct((Mp, coutp), out_dtype),
                   jax.ShapeDtypeStruct((ntiles, 2, coutp), jnp.float32)),
        grid=(ntiles,),
        in_specs=[pl.BlockSpec((tm, K), lambda i: (i, 0)),
                  pl.BlockSpec((K, coutp), lambda i: (0, 0))],
        out_specs=(pl.BlockSpec((tm, coutp), lambda i: (i, 0)),
                   pl.BlockSpec((None, 2, coutp), lambda i: (i, 0, 0))),
        compiler_params=pltpu.CompilerParams(
            dimension_semantics=("parallel",),
            vmem_limit_bytes=VMEM_LIMIT),
        cost_estimate=pl.CostEstimate(
            flops=2 * Mp * K * coutp, transcendentals=0,
            bytes_accessed=int(xb.size) * 2 + int(wb.size) * 2
                           + Mp * coutp * 2),
    )(xb, wb)
    return y, st


def conv3x3s2_stats(xp, w, coutp, *, out_dtype=jnp.bfloat16, with_pool=False):
    """Direct 3x3/stride-2 VALID conv + BN partial stats (+ optional fused
    3x3/s2 max-pool), consuming the parity-split input.  No HBM im2col.

    xp: (N,2,2,Ho+1,Wo+1,C), f32 when with_pool (pool stays exact) else bf16.
    w : (3,3,C,cout) f32, flattened to (9*C, coutp) for a K-packed operand.

    Per grid step (one image) the 9 taps are written into a VMEM patch scratch
    (Ho*Wo, 9*C) with static slices, then ONE MXU dot (Ho*Wo, 9C) x (9C, coutp)
    produces the whole image: large M, K packed 9x, one dense output store,
    and a single per-tile stats reduction.  Live ranges stay small because the
    patch lives in VMEM scratch, not vregs."""
    N, _, _, Hh, Wh, C = xp.shape
    Ho, Wo = Hh - 1, Wh - 1
    M_img = Ho * Wo
    cout = w.shape[-1]
    wf = jnp.pad(w.reshape(9 * C, cout),
                 ((0, 0), (0, coutp - cout))).astype(jnp.bfloat16)
    taps = [(ki, kj) for ki in range(3) for kj in range(3)]   # t = ki*3 + kj

    def kernel(xp_ref, w_ref, *refs):
        if with_pool:
            y_ref, st_ref, pool_ref, patch_ref = refs
        else:
            y_ref, st_ref, patch_ref = refs

        # Build the K-packed patch matrix in VMEM: tap t -> lanes [t*C,(t+1)*C).
        for i in range(Ho):
            for t, (ki, kj) in enumerate(taps):
                p_, rs = ki % 2, ki // 2
                q_, cs = kj % 2, kj // 2
                v = xp_ref[p_, q_, i + rs, cs:cs + Wo, :]
                patch_ref[i * Wo:(i + 1) * Wo, t * C:(t + 1) * C] = (
                    v.astype(jnp.float32))

        # One MXU dot per image, bf16 inputs, f32 accumulation.
        y = jnp.dot(patch_ref[...].astype(jnp.bfloat16), w_ref[...],
                    preferred_element_type=jnp.float32)
        y_ref[...] = y.astype(y_ref.dtype)

        # BN partial stats: single per-tile reduction (hoisted out of row loop).
        st_ref[0:1, :] = jnp.sum(y, axis=0, keepdims=True)
        st_ref[1:2, :] = jnp.sum(y * y, axis=0, keepdims=True)

        # Fused branch2: 3x3/s2 max-pool on the same (exact f32) xp read.
        if with_pool:
            m = xp_ref[0, 0, 0:Ho, 0:Wo, :]
            for (ki, kj) in taps[1:]:
                p_, rs = ki % 2, ki // 2
                q_, cs = kj % 2, kj // 2
                m = jnp.maximum(m, xp_ref[p_, q_, rs:rs + Ho, cs:cs + Wo, :])
            pool_ref[...] = m

    out_shape = [jax.ShapeDtypeStruct((N, M_img, coutp), out_dtype),
                 jax.ShapeDtypeStruct((N, 2, coutp), jnp.float32)]
    out_specs = [pl.BlockSpec((None, M_img, coutp), lambda n: (n, 0, 0)),
                 pl.BlockSpec((None, 2, coutp), lambda n: (n, 0, 0))]
    if with_pool:
        out_shape.append(jax.ShapeDtypeStruct((N, Ho, Wo, C), xp.dtype))
        out_specs.append(pl.BlockSpec((None, Ho, Wo, C), lambda n: (n, 0, 0, 0)))

    # TODO(synk): for large images / v7x, add a second "parallel" grid axis
    # (row blocks or 128-wide coutp tiles) so both TensorCores stay busy even
    # at small N; at N=2 each core already gets one image.
    outs = pl.pallas_call(
        kernel,
        out_shape=tuple(out_shape),
        grid=(N,),
        in_specs=[pl.BlockSpec((None, 2, 2, Hh, Wh, C),
                               lambda n: (n, 0, 0, 0, 0, 0)),
                  pl.BlockSpec((9 * C, coutp), lambda n: (0, 0))],
        out_specs=tuple(out_specs),
        scratch_shapes=[pltpu.VMEM((M_img, 9 * C), jnp.float32)],
        compiler_params=pltpu.CompilerParams(
            dimension_semantics=("parallel",),
            vmem_limit_bytes=VMEM_LIMIT),
        cost_estimate=pl.CostEstimate(
            flops=2 * N * M_img * 9 * C * coutp,
            transcendentals=0,
            bytes_accessed=int(xp.size) * xp.dtype.itemsize
                           + int(wf.size) * 2 + N * M_img * coutp * 2),
    )(xp, wf)

    y = outs[0].reshape(N * M_img, coutp)
    if with_pool:
        return y, outs[1], outs[2]
    return y, outs[1]


def bn_apply_concat(y0, y1, ss0, ss1, m_out):
    """Single BN-apply pass for both branches, writing one lane-padded concat
    buffer: out[:, 0:384] = y0*sc0+sh0, out[:, 384:768] = y1*sc1+sh1.
    Both stores are 128-lane aligned and dense; inputs are bf16, FMA in f32."""
    tm = min(TM, _round_up(m_out, 8))
    Mp = _round_up(m_out, tm)

    def prep(y):
        y = y[:m_out]
        return jnp.pad(y, ((0, Mp - m_out), (0, 0))) if Mp != m_out else y

    y0, y1 = prep(y0), prep(y1)

    def kernel(y0_ref, y1_ref, s0_ref, s1_ref, o_ref):
        o_ref[:, 0:COUTP] = (y0_ref[...].astype(jnp.float32) * s0_ref[0:1, :]
                             + s0_ref[1:2, :])
        o_ref[:, COUTP:2 * COUTP] = (y1_ref[...].astype(jnp.float32)
                                     * s1_ref[0:1, :] + s1_ref[1:2, :])

    out = pl.pallas_call(
        kernel,
        out_shape=jax.ShapeDtypeStruct((Mp, 2 * COUTP), jnp.float32),
        grid=(Mp // tm,),
        in_specs=[pl.BlockSpec((tm, COUTP), lambda i: (i, 0)),
                  pl.BlockSpec((tm, COUTP), lambda i: (i, 0)),
                  pl.BlockSpec((2, COUTP), lambda i: (0, 0)),
                  pl.BlockSpec((2, COUTP), lambda i: (0, 0))],
        out_specs=pl.BlockSpec((tm, 2 * COUTP), lambda i: (i, 0)),
        compiler_params=pltpu.CompilerParams(
            dimension_semantics=("parallel",),
            vmem_limit_bytes=VMEM_LIMIT),
    )(y0, y1, ss0, ss1)
    return out[:m_out]


# ------------------------------ InceptB forward ----------------------------- #

@jax.jit
def incept_b_forward(x_nchw, p):
    x = jnp.transpose(x_nchw, (0, 2, 3, 1)).astype(jnp.float32)   # NCHW -> NHWC
    N, H, W, Cin = x.shape

    # Shared parity view of the input (f32, read once by the fused kernel).
    xp = parity_split(x)
    Ho, Wo = xp.shape[3] - 1, xp.shape[4] - 1
    Mo = N * Ho * Wo

    # branch0: Conv3x3/s2 (Cin->360) + BN stats, fused with branch2 max-pool.
    y0, st0, x2 = conv3x3s2_stats(xp, p["w0"], COUTP,
                                  out_dtype=jnp.bfloat16, with_pool=True)
    sc0, sh0 = bn_scale_shift(st0, Mo, p["g0"], p["be0"])

    # branch1a: Conv1x1 (Cin->128) + BN stats.  The BN scale folds into the
    # next conv's weights; its shift and the conv biases become per-output-
    # channel constants cancelled exactly by the next BN's mean subtraction.
    y1a, st1a = matmul_stats(x.reshape(N * H * W, Cin), p["w1a"], 128,
                             out_dtype=jnp.bfloat16)
    sc1a, _ = bn_scale_shift(st1a, N * H * W, p["g1a"], p["be1a"])
    # TODO(synk): fold this parity_split into the matmul kernel's out_specs
    # (or an in-kernel strided DMA) to save the one remaining XLA bf16 pass.
    xp1 = parity_split(y1a[:N * H * W].reshape(N, H, W, 128))      # bf16, 1 pass

    # branch1b: Conv3x3/s2 (128->128) with BN(1a) scale folded into weights.
    w1b_f = p["w1b"] * sc1a.reshape(1, 1, 128, 1)
    y1b, st1b = conv3x3s2_stats(xp1, w1b_f, 128, out_dtype=jnp.bfloat16)
    sc1b, _ = bn_scale_shift(st1b, Mo, p["g1b"], p["be1b"])

    # branch1c: Conv1x1 (128->360) with BN(1b) scale folded in; BN applied.
    w1c_f = p["w1c"] * sc1b.reshape(128, 1)
    y1c, st1c = matmul_stats(y1b, w1c_f, COUTP, out_dtype=jnp.bfloat16)
    sc1c, sh1c = bn_scale_shift(st1c, Mo, p["g1c"], p["be1c"])

    # One BN-apply pass writing the lane-padded [x0 | x1] concat buffer.
    buf = bn_apply_concat(y0, y1c,
                          _pack_scale_shift(sc0, sh0, COUTP),
                          _pack_scale_shift(sc1c, sh1c, COUTP), Mo)
    x0x1 = buf.reshape(N, Ho, Wo, 2 * COUTP)

    # Single final trim of the lane padding + pool append + NCHW transpose.
    # TODO(synk): skip the NCHW transpose if the consumer accepts NHWC.
    out = jnp.concatenate([x0x1[..., :360], x0x1[..., COUTP:COUTP + 360], x2],
                          axis=-1)
    return jnp.transpose(out, (0, 3, 1, 2))


# --------------------------- Pure-JAX reference ----------------------------- #

def _ref_conv(x, w_hwio, b, stride):
    y = lax.conv_general_dilated(x, w_hwio, (stride, stride), "VALID",
                                 dimension_numbers=("NHWC", "HWIO", "NHWC"))
    return y + b


def _ref_bn(y, g, b):
    mean = y.mean(axis=(0, 1, 2), keepdims=True)
    var = ((y - mean) ** 2).mean(axis=(0, 1, 2), keepdims=True)
    return (y - mean) * lax.rsqrt(var + EPS) * g + b


@jax.jit
def ref_forward(x_nchw, p):
    x = jnp.transpose(x_nchw, (0, 2, 3, 1))
    Cin = x.shape[-1]
    x0 = _ref_bn(_ref_conv(x, p["w0"], p["b0"], 2), p["g0"], p["be0"])
    x1 = _ref_bn(_ref_conv(x, p["w1a"].reshape(1, 1, Cin, 128), p["b1a"], 1),
                 p["g1a"], p["be1a"])
    x1 = _ref_bn(_ref_conv(x1, p["w1b"], p["b1b"], 2), p["g1b"], p["be1b"])
    x1 = _ref_bn(_ref_conv(x1, p["w1c"].reshape(1, 1, 128, 360), p["b1c"], 1),
                 p["g1c"], p["be1c"])
    x2 = lax.reduce_window(x, -jnp.inf, lax.max,
                           (1, 3, 3, 1), (1, 2, 2, 1), "VALID")
    out = jnp.concatenate([x0, x1, x2], axis=-1)
    return jnp.transpose(out, (0, 3, 1, 2))


# ------------------------------- Params init -------------------------------- #

def init_params(key, cin):
    ks = jax.random.split(key, 16)
    n = lambda k, s, sc=0.05: sc * jax.random.normal(k, s, jnp.float32)
    g = lambda k, s: 1.0 + 0.1 * jax.random.normal(k, s, jnp.float32)
    # Conv biases are kept for the reference path; the Pallas path omits them
    # because training-mode BN cancels them exactly.
    return dict(
        w0=n(ks[0], (3, 3, cin, 360)), b0=n(ks[1], (360,)),
        g0=g(ks[2], (360,)), be0=n(ks[3], (360,)),
        w1a=n(ks[4], (cin, 128)), b1a=n(ks[5], (128,)),
        g1a=g(ks[6], (128,)), be1a=n(ks[7], (128,)),
        w1b=n(ks[8], (3, 3, 128, 128)), b1b=n(ks[9], (128,)),
        g1b=g(ks[10], (128,)), be1b=n(ks[11], (128,)),
        w1c=n(ks[12], (128, 360)), b1c=n(ks[13], (360,)),
        g1c=g(ks[14], (360,)), be1c=n(ks[15], (360,)),
    )


if __name__ == "__main__":
    key = jax.random.PRNGKey(0)
    kx, kp = jax.random.split(key)

    # Small shapes consistent with the module (in_planes is a ctor arg).
    N, Cin, H, W = 2, 16, 9, 9            # -> output (2, 360+360+16, 4, 4)
    x = jax.random.normal(kx, (N, Cin, H, W), jnp.float32)
    params = init_params(kp, Cin)

    out = jax.block_until_ready(incept_b_forward(x, params))
    ref = jax.block_until_ready(ref_forward(x, params))

    assert out.shape == (N, 360 + 360 + Cin, 4, 4), out.shape
    # bf16 MXU inputs AND bf16 intermediates (vs. the all-f32 reference)
    # across three stacked conv+BN stages justify the relaxed tolerance;
    # the fused max-pool branch stays exact f32.
    np.testing.assert_allclose(np.asarray(out), np.asarray(ref),
                               rtol=4e-2, atol=4e-2)
    print("KERNEL_OK")
</pallas_src>

<mosaic_0001>
module attributes {stable_mosaic.version = 11 : i64} {
  func.func @kernel(%arg0: i32, %arg1: memref<168x16xbf16, #tpu.memory_space<vmem>>, %arg2: memref<16x128xbf16, #tpu.memory_space<vmem>>, %arg3: memref<168x128xbf16, #tpu.memory_space<vmem>>, %arg4: memref<1x2x128xf32, #tpu.memory_space<vmem>>) attributes {dimension_semantics = [#tpu.dimension_semantics<parallel>], iteration_bounds = array<i64: 1>, scalar_prefetch = 0 : i64, scratch_operands = 0 : i64, tpu.core_type = #tpu.core_type<tc>, window_params = [{transform_indices = @transform_0, window_bounds = array<i64: 168, 16>}, {pipeline_mode = #tpu.pipeline_mode<synchronous>, transform_indices = @transform_1, window_bounds = array<i64: 16, 128>}, {transform_indices = @transform_2, window_bounds = array<i64: 168, 128>}, {transform_indices = @transform_3, window_bounds = array<i64: 1, 2, 128>}]} {
    %c0 = arith.constant 0 : index
    %c0_0 = arith.constant 0 : index
    %0 = vector.load %arg1[%c0, %c0_0] : memref<168x16xbf16, #tpu.memory_space<vmem>>, vector<168x16xbf16>
    %c0_1 = arith.constant 0 : index
    %c0_2 = arith.constant 0 : index
    %1 = vector.load %arg2[%c0_1, %c0_2] : memref<16x128xbf16, #tpu.memory_space<vmem>>, vector<16x128xbf16>
    %cst = arith.constant dense<0.000000e+00> : vector<168x128xf32>
    %2 = tpu.matmul %0, %1, %cst {dimension_numbers = #tpu.dot_dimension_numbers<[1], [0], [0], [1], [0, 0, 1, 1], [], []>} : vector<168x16xbf16>, vector<16x128xbf16>, vector<168x128xf32> -> vector<168x128xf32>
    %3 = arith.truncf %2 : vector<168x128xf32> to vector<168x128xbf16>
    %c0_3 = arith.constant 0 : index
    %c0_4 = arith.constant 0 : index
    %4 = vector.load %arg3[%c0_3, %c0_4] : memref<168x128xbf16, #tpu.memory_space<vmem>>, vector<168x128xbf16>
    tpu.vector_store %arg3[%c0_3, %c0_4], %3 {strides = array<i32>} : memref<168x128xbf16, #tpu.memory_space<vmem>>, vector<168x128xbf16>,
    %cst_5 = arith.constant dense<0.000000e+00> : vector<128xf32>
    %5 = vector.multi_reduction <add>, %2, %cst_5 [0] : vector<168x128xf32> to vector<128xf32>
    %6 = vector.shape_cast %5 : vector<128xf32> to vector<1x128xf32>
    %c0_6 = arith.constant 0 : index
    %c0_7 = arith.constant 0 : index
    %c0_8 = arith.constant 0 : index
    %7 = vector.load %arg4[%c0_6, %c0_7, %c0_8] : memref<1x2x128xf32, #tpu.memory_space<vmem>>, vector<1x1x128xf32>
    %8 = vector.shape_cast %7 : vector<1x1x128xf32> to vector<1x128xf32>
    %9 = vector.shape_cast %6 : vector<1x128xf32> to vector<1x1x128xf32>
    tpu.vector_store %arg4[%c0_6, %c0_7, %c0_8], %9 {strides = array<i32>} : memref<1x2x128xf32, #tpu.memory_space<vmem>>, vector<1x1x128xf32>,
    %10 = arith.mulf %2, %2 : vector<168x128xf32>
    %cst_9 = arith.constant dense<0.000000e+00> : vector<128xf32>
    %11 = vector.multi_reduction <add>, %10, %cst_9 [0] : vector<168x128xf32> to vector<128xf32>
    %12 = vector.shape_cast %11 : vector<128xf32> to vector<1x128xf32>
    %c0_10 = arith.constant 0 : index
    %c1 = arith.constant 1 : index
    %c0_11 = arith.constant 0 : index
    %13 = vector.load %arg4[%c0_10, %c1, %c0_11] : memref<1x2x128xf32, #tpu.memory_space<vmem>>, vector<1x1x128xf32>
    %14 = vector.shape_cast %13 : vector<1x1x128xf32> to vector<1x128xf32>
    %15 = vector.shape_cast %12 : vector<1x128xf32> to vector<1x1x128xf32>
    tpu.vector_store %arg4[%c0_10, %c1, %c0_11], %15 {strides = array<i32>} : memref<1x2x128xf32, #tpu.memory_space<vmem>>, vector<1x1x128xf32>,
    return
  }
  func.func @transform_0(%arg0: i32) -> (i32, i32) {
    %c0_i32 = arith.constant 0 : i32
    %c0_i32_0 = arith.constant 0 : i32
    return %arg0, %c0_i32 : i32, i32
  }
  func.func @transform_1(%arg0: i32) -> (i32, i32) {
    %c0_i32 = arith.constant 0 : i32
    %c0_i32_0 = arith.constant 0 : i32
    %c0_i32_1 = arith.constant 0 : i32
    return %c0_i32, %c0_i32_0 : i32, i32
  }
  func.func @transform_2(%arg0: i32) -> (i32, i32) {
    %c0_i32 = arith.constant 0 : i32
    %c0_i32_0 = arith.constant 0 : i32
    return %arg0, %c0_i32 : i32, i32
  }
  func.func @transform_3(%arg0: i32) -> (i32, i32, i32) {
    %c0_i32 = arith.constant 0 : i32
    %c0_i32_0 = arith.constant 0 : i32
    %c0_i32_1 = arith.constant 0 : i32
    return %arg0, %c0_i32, %c0_i32_0 : i32, i32, i32
  }
}

module attributes {stable_mosaic.version = 11 : i64} {
  func.func @kernel(%arg0: i32, %arg1: memref<1x2x2x5x5x128xbf16, #tpu.memory_space<vmem>>, %arg2: memref<1152x128xbf16, #tpu.memory_space<vmem>>, %arg3: memref<1x16x128xbf16, #tpu.memory_space<vmem>>, %arg4: memref<1x2x128xf32, #tpu.memory_space<vmem>>, %arg5: memref<16x1152xf32, #tpu.memory_space<vmem>>) attributes {dimension_semantics = [#tpu.dimension_semantics<parallel>], iteration_bounds = array<i64: 2>, scalar_prefetch = 0 : i64, scratch_operands = 1 : i64, tpu.core_type = #tpu.core_type<tc>, window_params = [{transform_indices = @transform_0, window_bounds = array<i64: 1, 2, 2, 5, 5, 128>}, {pipeline_mode = #tpu.pipeline_mode<synchronous>, transform_indices = @transform_1, window_bounds = array<i64: 1152, 128>}, {transform_indices = @transform_2, window_bounds = array<i64: 1, 16, 128>}, {transform_indices = @transform_3, window_bounds = array<i64: 1, 2, 128>}]} {
    %c0 = arith.constant 0 : index
    %c0_0 = arith.constant 0 : index
    %c0_1 = arith.constant 0 : index
    %c0_2 = arith.constant 0 : index
    %c0_3 = arith.constant 0 : index
    %c0_4 = arith.constant 0 : index
    %0 = vector.load %arg1[%c0, %c0_0, %c0_1, %c0_2, %c0_3, %c0_4] : memref<1x2x2x5x5x128xbf16, #tpu.memory_space<vmem>>, vector<1x1x1x1x4x128xbf16>
    %1 = vector.shape_cast %0 : vector<1x1x1x1x4x128xbf16> to vector<4x128xbf16>
    %2 = arith.extf %1 : vector<4x128xbf16> to vector<4x128xf32>
    %c0_5 = arith.constant 0 : index
    %c0_6 = arith.constant 0 : index
    %3 = vector.load %arg5[%c0_5, %c0_6] : memref<16x1152xf32, #tpu.memory_space<vmem>>, vector<4x128xf32>
    tpu.vector_store %arg5[%c0_5, %c0_6], %2 {strides = array<i32>} : memref<16x1152xf32, #tpu.memory_space<vmem>>, vector<4x128xf32>,
    %c0_7 = arith.constant 0 : index
    %c0_8 = arith.constant 0 : index
    %c1 = arith.constant 1 : index
    %c0_9 = arith.constant 0 : index
    %c0_10 = arith.constant 0 : index
    %c0_11 = arith.constant 0 : index
    %4 = vector.load %arg1[%c0_7, %c0_8, %c1, %c0_9, %c0_10, %c0_11] : memref<1x2x2x5x5x128xbf16, #tpu.memory_space<vmem>>, vector<1x1x1x1x4x128xbf16>
    %5 = vector.shape_cast %4 : vector<1x1x1x1x4x128xbf16> to vector<4x128xbf16>
    %6 = arith.extf %5 : vector<4x128xbf16> to vector<4x128xf32>
    %c0_12 = arith.constant 0 : index
    %c128 = arith.constant 128 : index
    %7 = vector.load %arg5[%c0_12, %c128] : memref<16x1152xf32, #tpu.memory_space<vmem>>, vector<4x128xf32>
    tpu.vector_store %arg5[%c0_12, %c128], %6 {strides = array<i32>} : memref<16x1152xf32, #tpu.memory_space<vmem>>, vector<4x128xf32>,
    %c0_13 = arith.constant 0 : index
    %c0_14 = arith.constant 0 : index
    %c0_15 = arith.constant 0 : index
    %c0_16 = arith.constant 0 : index
    %c1_17 = arith.constant 1 : index
    %c0_18 = arith.constant 0 : index
    %8 = vector.load %arg1[%c0_13, %c0_14, %c0_15, %c0_16, %c1_17, %c0_18] : memref<1x2x2x5x5x128xbf16, #tpu.memory_space<vmem>>, vector<1x1x1x1x4x128xbf16>
    %9 = vector.shape_cast %8 : vector<1x1x1x1x4x128xbf16> to vector<4x128xbf16>
    %10 = arith.extf %9 : vector<4x128xbf16> to vector<4x128xf32>
    %c0_19 = arith.constant 0 : index
    %c256 = arith.constant 256 : index
    %11 = vector.load %arg5[%c0_19, %c256] : memref<16x1152xf32, #tpu.memory_space<vmem>>, vector<4x128xf32>
    tpu.vector_store %arg5[%c0_19, %c256], %10 {strides = array<i32>} : memref<16x1152xf32, #tpu.memory_space<vmem>>, vector<4x128xf32>,
    %c0_20 = arith.constant 0 : index
    %c1_21 = arith.constant 1 : index
    %c0_22 = arith.constant 0 : index
    %c0_23 = arith.constant 0 : index
    %c0_24 = arith.constant 0 : index
    %c0_25 = arith.constant 0 : index
    %12 = vector.load %arg1[%c0_20, %c1_21, %c0_22, %c0_23, %c0_24, %c0_25] : memref<1x2x2x5x5x128xbf16, #tpu.memory_space<vmem>>, vector<1x1x1x1x4x128xbf16>
    %13 = vector.shape_cast %12 : vector<1x1x1x1x4x128xbf16> to vector<4x128xbf16>
    %14 = arith.extf %13 : vector<4x128xbf16> to vector<4x128xf32>
    %c0_26 = arith.constant 0 : index
    %c384 = arith.constant 384 : index
    %15 = vector.load %arg5[%c0_26, %c384] : memref<16x1152xf32, #tpu.memory_space<vmem>>, vector<4x128xf32>
    tpu.vector_store %arg5[%c0_26, %c384], %14 {strides = array<i32>} : memref<16x1152xf32, #tpu.memory_space<vmem>>, vector<4x128xf32>,
    %c0_27 = arith.constant 0 : index
    %c1_28 = arith.constant 1 : index
    %c1_29 = arith.constant 1 : index
    %c0_30 = arith.constant 0 : index
    %c0_31 = arith.constant 0 : index
    %c0_32 = arith.constant 0 : index
    %16 = vector.load %arg1[%c0_27, %c1_28, %c1_29, %c0_30, %c0_31, %c0_32] : memref<1x2x2x5x5x128xbf16, #tpu.memory_space<vmem>>, vector<1x1x1x1x4x128xbf16>
    %17 = vector.shape_cast %16 : vector<1x1x1x1x4x128xbf16> to vector<4x128xbf16>
    %18 = arith.extf %17 : vector<4x128xbf16> to vector<4x128xf32>
    %c0_33 = arith.constant 0 : index
    %c512 = arith.constant 512 : index
    %19 = vector.load %arg5[%c0_33, %c512] : memref<16x1152xf32, #tpu.memory_space<vmem>>, vector<4x128xf32>
    tpu.vector_store %arg5[%c0_33, %c512], %18 {strides = array<i32>} : memref<16x1152xf32, #tpu.memory_space<vmem>>, vector<4x128xf32>,
    %c0_34 = arith.constant 0 : index
    %c1_35 = arith.constant 1 : index
    %c0_36 = arith.constant 0 : index
    %c0_37 = arith.constant 0 : index
    %c1_38 = arith.constant 1 : index
    %c0_39 = arith.constant 0 : index
    %20 = vector.load %arg1[%c0_34, %c1_35, %c0_36, %c0_37, %c1_38, %c0_39] : memref<1x2x2x5x5x128xbf16, #tpu.memory_space<vmem>>, vector<1x1x1x1x4x128xbf16>
    %21 = vector.shape_cast %20 : vector<1x1x1x1x4x128xbf16> to vector<4x128xbf16>
    %22 = arith.extf %21 : vector<4x128xbf16> to vector<4x128xf32>
    %c0_40 = arith.constant 0 : index
    %c640 = arith.constant 640 : index
    %23 = vector.load %arg5[%c0_40, %c640] : memref<16x1152xf32, #tpu.memory_space<vmem>>, vector<4x128xf32>
    tpu.vector_store %arg5[%c0_40, %c640], %22 {strides = array<i32>} : memref<16x1152xf32, #tpu.memory_space<vmem>>, vector<4x128xf32>,
    %c0_41 = arith.constant 0 : index
    %c0_42 = arith.constant 0 : index
    %c0_43 = arith.constant 0 : index
    %c1_44 = arith.constant 1 : index
    %c0_45 = arith.constant 0 : index
    %c0_46 = arith.constant 0 : index
    %24 = vector.load %arg1[%c0_41, %c0_42, %c0_43, %c1_44, %c0_45, %c0_46] : memref<1x2x2x5x5x128xbf16, #tpu.memory_space<vmem>>, vector<1x1x1x1x4x128xbf16>
    %25 = vector.shape_cast %24 : vector<1x1x1x1x4x128xbf16> to vector<4x128xbf16>
    %26 = arith.extf %25 : vector<4x128xbf16> to vector<4x128xf32>
    %c0_47 = arith.constant 0 : index
    %c768 = arith.constant 768 : index
    %27 = vector.load %arg5[%c0_47, %c768] : memref<16x1152xf32, #tpu.memory_space<vmem>>, vector<4x128xf32>
    tpu.vector_store %arg5[%c0_47, %c768], %26 {strides = array<i32>} : memref<16x1152xf32, #tpu.memory_space<vmem>>, vector<4x128xf32>,
    %c0_48 = arith.constant 0 : index
    %c0_49 = arith.constant 0 : index
    %c1_50 = arith.constant 1 : index
    %c1_51 = arith.constant 1 : index
    %c0_52 = arith.constant 0 : index
    %c0_53 = arith.constant 0 : index
    %28 = vector.load %arg1[%c0_48, %c0_49, %c1_50, %c1_51, %c0_52, %c0_53] : memref<1x2x2x5x5x128xbf16, #tpu.memory_space<vmem>>, vector<1x1x1x1x4x128xbf16>
    %29 = vector.shape_cast %28 : vector<1x1x1x1x4x128xbf16> to vector<4x128xbf16>
    %30 = arith.extf %29 : vector<4x128xbf16> to vector<4x128xf32>
    %c0_54 = arith.constant 0 : index
    %c896 = arith.constant 896 : index
    %31 = vector.load %arg5[%c0_54, %c896] : memref<16x1152xf32, #tpu.memory_space<vmem>>, vector<4x128xf32>
    tpu.vector_store %arg5[%c0_54, %c896], %30 {strides = array<i32>} : memref<16x1152xf32, #tpu.memory_space<vmem>>, vector<4x128xf32>,
    %c0_55 = arith.constant 0 : index
    %c0_56 = arith.constant 0 : index
    %c0_57 = arith.constant 0 : index
    %c1_58 = arith.constant 1 : index
    %c1_59 = arith.constant 1 : index
    %c0_60 = arith.constant 0 : index
    %32 = vector.load %arg1[%c0_55, %c0_56, %c0_57, %c1_58, %c1_59, %c0_60] : memref<1x2x2x5x5x128xbf16, #tpu.memory_space<vmem>>, vector<1x1x1x1x4x128xbf16>
    %33 = vector.shape_cast %32 : vector<1x1x1x1x4x128xbf16> to vector<4x128xbf16>
    %34 = arith.extf %33 : vector<4x128xbf16> to vector<4x128xf32>
    %c0_61 = arith.constant 0 : index
    %c1024 = arith.constant 1024 : index
    %35 = vector.load %arg5[%c0_61, %c1024] : memref<16x1152xf32, #tpu.memory_space<vmem>>, vector<4x128xf32>
    tpu.vector_store %arg5[%c0_61, %c1024], %34 {strides = array<i32>} : memref<16x1152xf32, #tpu.memory_space<vmem>>, vector<4x128xf32>,
    %c0_62 = arith.constant 0 : index
    %c0_63 = arith.constant 0 : index
    %c0_64 = arith.constant 0 : index
    %c1_65 = arith.constant 1 : index
    %c0_66 = arith.constant 0 : index
    %c0_67 = arith.constant 0 : index
    %36 = vector.load %arg1[%c0_62, %c0_63, %c0_64, %c1_65, %c0_66, %c0_67] : memref<1x2x2x5x5x128xbf16, #tpu.memory_space<vmem>>, vector<1x1x1x1x4x128xbf16>
    %37 = vector.shape_cast %36 : vector<1x1x1x1x4x128xbf16> to vector<4x128xbf16>
    %38 = arith.extf %37 : vector<4x128xbf16> to vector<4x128xf32>
    %c4 = arith.constant 4 : index
    %c0_68 = arith.constant 0 : index
    %39 = vector.load %arg5[%c4, %c0_68] : memref<16x1152xf32, #tpu.memory_space<vmem>>, vector<4x128xf32>
    tpu.vector_store %arg5[%c4, %c0_68], %38 {strides = array<i32>} : memref<16x1152xf32, #tpu.memory_space<vmem>>, vector<4x128xf32>,
    %c0_69 = arith.constant 0 : index
    %c0_70 = arith.constant 0 : index
    %c1_71 = arith.constant 1 : index
    %c1_72 = arith.constant 1 : index
    %c0_73 = arith.constant 0 : index
    %c0_74 = arith.constant 0 : index
    %40 = vector.load %arg1[%c0_69, %c0_70, %c1_71, %c1_72, %c0_73, %c0_74] : memref<1x2x2x5x5x128xbf16, #tpu.memory_space<vmem>>, vector<1x1x1x1x4x128xbf16>
    %41 = vector.shape_cast %40 : vector<1x1x1x1x4x128xbf16> to vector<4x128xbf16>
    %42 = arith.extf %41 : vector<4x128xbf16> to vector<4x128xf32>
    %c4_75 = arith.constant 4 : index
    %c128_76 = arith.constant 128 : index
    %43 = vector.load %arg5[%c4_75, %c128_76] : memref<16x1152xf32, #tpu.memory_space<vmem>>, vector<4x128xf32>
    tpu.vector_store %arg5[%c4_75, %c128_76], %42 {strides = array<i32>} : memref<16x1152xf32, #tpu.memory_space<vmem>>, vector<4x128xf32>,
    %c0_77 = arith.constant 0 : index
    %c0_78 = arith.constant 0 : index
    %c0_79 = arith.constant 0 : index
    %c1_80 = arith.constant 1 : index
    %c1_81 = arith.constant 1 : index
    %c0_82 = arith.constant 0 : index
    %44 = vector.load %arg1[%c0_77, %c0_78, %c0_79, %c1_80, %c1_81, %c0_82] : memref<1x2x2x5x5x128xbf16, #tpu.memory_space<vmem>>, vector<1x1x1x1x4x128xbf16>
    %45 = vector.shape_cast %44 : vector<1x1x1x1x4x128xbf16> to vector<4x128xbf16>
    %46 = arith.extf %45 : vector<4x128xbf16> to vector<4x128xf32>
    %c4_83 = arith.constant 4 : index
    %c256_84 = arith.constant 256 : index
    %47 = vector.load %arg5[%c4_83, %c256_84] : memref<16x1152xf32, #tpu.memory_space<vmem>>, vector<4x128xf32>
    tpu.vector_store %arg5[%c4_83, %c256_84], %46 {strides = array<i32>} : memref<16x1152xf32, #tpu.memory_space<vmem>>, vector<4x128xf32>,
    %c0_85 = arith.constant 0 : index
    %c1_86 = arith.constant 1 : index
    %c0_87 = arith.constant 0 : index
    %c1_88 = arith.constant 1 : index
    %c0_89 = arith.constant 0 : index
    %c0_90 = arith.constant 0 : index
    %48 = vector.load %arg1[%c0_85, %c1_86, %c0_87, %c1_88, %c0_89, %c0_90] : memref<1x2x2x5x5x128xbf16, #tpu.memory_space<vmem>>, vector<1x1x1x1x4x128xbf16>
    %49 = vector.shape_cast %48 : vector<1x1x1x1x4x128xbf16> to vector<4x128xbf16>
    %50 = arith.extf %49 : vector<4x128xbf16> to vector<4x128xf32>
    %c4_91 = arith.constant 4 : index
    %c384_92 = arith.constant 384 : index
    %51 = vector.load %arg5[%c4_91, %c384_92] : memref<16x1152xf32, #tpu.memory_space<vmem>>, vector<4x128xf32>
    tpu.vector_store %arg5[%c4_91, %c384_92], %50 {strides = array<i32>} : memref<16x1152xf32, #tpu.memory_space<vmem>>, vector<4x128xf32>,
    %c0_93 = arith.constant 0 : index
    %c1_94 = arith.constant 1 : index
    %c1_95 = arith.constant 1 : index
    %c1_96 = arith.constant 1 : index
    %c0_97 = arith.constant 0 : index
    %c0_98 = arith.constant 0 : index
    %52 = vector.load %arg1[%c0_93, %c1_94, %c1_95, %c1_96, %c0_97, %c0_98] : memref<1x2x2x5x5x128xbf16, #tpu.memory_space<vmem>>, vector<1x1x1x1x4x128xbf16>
    %53 = vector.shape_cast %52 : vector<1x1x1x1x4x128xbf16> to vector<4x128xbf16>
    %54 = arith.extf %53 : vector<4x128xbf16> to vector<4x128xf32>
    %c4_99 = arith.constant 4 : index
    %c512_100 = arith.constant 512 : index
    %55 = vector.load %arg5[%c4_99, %c512_100] : memref<16x1152xf32, #tpu.memory_space<vmem>>, vector<4x128xf32>
    tpu.vector_store %arg5[%c4_99, %c512_100], %54 {strides = array<i32>} : memref<16x1152xf32, #tpu.memory_space<vmem>>, vector<4x128xf32>,
    %c0_101 = arith.constant 0 : index
    %c1_102 = arith.constant 1 : index
    %c0_103 = arith.constant 0 : index
    %c1_104 = arith.constant 1 : index
    %c1_105 = arith.constant 1 : index
    %c0_106 = arith.constant 0 : index
    %56 = vector.load %arg1[%c0_101, %c1_102, %c0_103, %c1_104, %c1_105, %c0_106] : memref<1x2x2x5x5x128xbf16, #tpu.memory_space<vmem>>, vector<1x1x1x1x4x128xbf16>
    %57 = vector.shape_cast %56 : vector<1x1x1x1x4x128xbf16> to vector<4x128xbf16>
    %58 = arith.extf %57 : vector<4x128xbf16> to vector<4x128xf32>
    %c4_107 = arith.constant 4 : index
    %c640_108 = arith.constant 640 : index
    %59 = vector.load %arg5[%c4_107, %c640_108] : memref<16x1152xf32, #tpu.memory_space<vmem>>, vector<4x128xf32>
    tpu.vector_store %arg5[%c4_107, %c640_108], %58 {strides = array<i32>} : memref<16x1152xf32, #tpu.memory_space<vmem>>, vector<4x128xf32>,
    %c0_109 = arith.constant 0 : index
    %c0_110 = arith.constant 0 : index
    %c0_111 = arith.constant 0 : index
    %c2 = arith.constant 2 : index
    %c0_112 = arith.constant 0 : index
    %c0_113 = arith.constant 0 : index
    %60 = vector.load %arg1[%c0_109, %c0_110, %c0_111, %c2, %c0_112, %c0_113] : memref<1x2x2x5x5x128xbf16, #tpu.memory_space<vmem>>, vector<1x1x1x1x4x128xbf16>
    %61 = vector.shape_cast %60 : vector<1x1x1x1x4x128xbf16> to vector<4x128xbf16>
    %62 = arith.extf %61 : vector<4x128xbf16> to vector<4x128xf32>
    %c4_114 = arith.constant 4 : index
    %c768_115 = arith.constant 768 : index
    %63 = vector.load %arg5[%c4_114, %c768_115] : memref<16x1152xf32, #tpu.memory_space<vmem>>, vector<4x128xf32>
    tpu.vector_store %arg5[%c4_114, %c768_115], %62 {strides = array<i32>} : memref<16x1152xf32, #tpu.memory_space<vmem>>, vector<4x128xf32>,
    %c0_116 = arith.constant 0 : index
    %c0_117 = arith.constant 0 : index
    %c1_118 = arith.constant 1 : index
    %c2_119 = arith.constant 2 : index
    %c0_120 = arith.constant 0 : index
    %c0_121 = arith.constant 0 : index
    %64 = vector.load %arg1[%c0_116, %c0_117, %c1_118, %c2_119, %c0_120, %c0_121] : memref<1x2x2x5x5x128xbf16, #tpu.memory_space<vmem>>, vector<1x1x1x1x4x128xbf16>
    %65 = vector.shape_cast %64 : vector<1x1x1x1x4x128xbf16> to vector<4x128xbf16>
    %66 = arith.extf %65 : vector<4x128xbf16> to vector<4x128xf32>
    %c4_122 = arith.constant 4 : index
    %c896_123 = arith.constant 896 : index
    %67 = vector.load %arg5[%c4_122, %c896_123] : memref<16x1152xf32, #tpu.memory_space<vmem>>, vector<4x128xf32>
    tpu.vector_store %arg5[%c4_122, %c896_123], %66 {strides = array<i32>} : memref<16x1152xf32, #tpu.memory_space<vmem>>, vector<4x128xf32>,
    %c0_124 = arith.constant 0 : index
    %c0_125 = arith.constant 0 : index
    %c0_126 = arith.constant 0 : index
    %c2_127 = arith.constant 2 : index
    %c1_128 = arith.constant 1 : index
    %c0_129 = arith.constant 0 : index
    %68 = vector.load %arg1[%c0_124, %c0_125, %c0_126, %c2_127, %c1_128, %c0_129] : memref<1x2x2x5x5x128xbf16, #tpu.memory_space<vmem>>, vector<1x1x1x1x4x128xbf16>
    %69 = vector.shape_cast %68 : vector<1x1x1x1x4x128xbf16> to vector<4x128xbf16>
    %70 = arith.extf %69 : vector<4x128xbf16> to vector<4x128xf32>
    %c4_130 = arith.constant 4 : index
    %c1024_131 = arith.constant 1024 : index
    %71 = vector.load %arg5[%c4_130, %c1024_131] : memref<16x1152xf32, #tpu.memory_space<vmem>>, vector<4x128xf32>
    tpu.vector_store %arg5[%c4_130, %c1024_131], %70 {strides = array<i32>} : memref<16x1152xf32, #tpu.memory_space<vmem>>, vector<4x128xf32>,
    %c0_132 = arith.constant 0 : index
    %c0_133 = arith.constant 0 : index
    %c0_134 = arith.constant 0 : index
    %c2_135 = arith.constant 2 : index
    %c0_136 = arith.constant 0 : index
    %c0_137 = arith.constant 0 : index
    %72 = vector.load %arg1[%c0_132, %c0_133, %c0_134, %c2_135, %c0_136, %c0_137] : memref<1x2x2x5x5x128xbf16, #tpu.memory_space<vmem>>, vector<1x1x1x1x4x128xbf16>
    %73 = vector.shape_cast %72 : vector<1x1x1x1x4x128xbf16> to vector<4x128xbf16>
    %74 = arith.extf %73 : vector<4x128xbf16> to vector<4x128xf32>
    %c8 = arith.constant 8 : index
    %c0_138 = arith.constant 0 : index
    %75 = vector.load %arg5[%c8, %c0_138] : memref<16x1152xf32, #tpu.memory_space<vmem>>, vector<4x128xf32>
    tpu.vector_store %arg5[%c8, %c0_138], %74 {strides = array<i32>} : memref<16x1152xf32, #tpu.memory_space<vmem>>, vector<4x128xf32>,
    %c0_139 = arith.constant 0 : index
    %c0_140 = arith.constant 0 : index
    %c1_141 = arith.constant 1 : index
    %c2_142 = arith.constant 2 : index
    %c0_143 = arith.constant 0 : index
    %c0_144 = arith.constant 0 : index
    %76 = vector.load %arg1[%c0_139, %c0_140, %c1_141, %c2_142, %c0_143, %c0_144] : memref<1x2x2x5x5x128xbf16, #tpu.memory_space<vmem>>, vector<1x1x1x1x4x128xbf16>
    %77 = vector.shape_cast %76 : vector<1x1x1x1x4x128xbf16> to vector<4x128xbf16>
    %78 = arith.extf %77 : vector<4x128xbf16> to vector<4x128xf32>
    %c8_145 = arith.constant 8 : index
    %c128_146 = arith.constant 128 : index
    %79 = vector.load %arg5[%c8_145, %c128_146] : memref<16x1152xf32, #tpu.memory_space<vmem>>, vector<4x128xf32>
    tpu.vector_store %arg5[%c8_145, %c128_146], %78 {strides = array<i32>} : memref<16x1152xf32, #tpu.memory_space<vmem>>, vector<4x128xf32>,
    %c0_147 = arith.constant 0 : index
    %c0_148 = arith.constant 0 : index
    %c0_149 = arith.constant 0 : index
    %c2_150 = arith.constant 2 : index
    %c1_151 = arith.constant 1 : index
    %c0_152 = arith.constant 0 : index
    %80 = vector.load %arg1[%c0_147, %c0_148, %c0_149, %c2_150, %c1_151, %c0_152] : memref<1x2x2x5x5x128xbf16, #tpu.memory_space<vmem>>, vector<1x1x1x1x4x128xbf16>
    %81 = vector.shape_cast %80 : vector<1x1x1x1x4x128xbf16> to vector<4x128xbf16>
    %82 = arith.extf %81 : vector<4x128xbf16> to vector<4x128xf32>
    %c8_153 = arith.constant 8 : index
    %c256_154 = arith.constant 256 : index
    %83 = vector.load %arg5[%c8_153, %c256_154] : memref<16x1152xf32, #tpu.memory_space<vmem>>, vector<4x128xf32>
    tpu.vector_store %arg5[%c8_153, %c256_154], %82 {strides = array<i32>} : memref<16x1152xf32, #tpu.memory_space<vmem>>, vector<4x128xf32>,
    %c0_155 = arith.constant 0 : index
    %c1_156 = arith.constant 1 : index
    %c0_157 = arith.constant 0 : index
    %c2_158 = arith.constant 2 : index
    %c0_159 = arith.constant 0 : index
    %c0_160 = arith.constant 0 : index
    %84 = vector.load %arg1[%c0_155, %c1_156, %c0_157, %c2_158, %c0_159, %c0_160] : memref<1x2x2x5x5x128xbf16, #tpu.memory_space<vmem>>, vector<1x1x1x1x4x128xbf16>
    %85 = vector.shape_cast %84 : vector<1x1x1x1x4x128xbf16> to vector<4x128xbf16>
    %86 = arith.extf %85 : vector<4x128xbf16> to vector<4x128xf32>
    %c8_161 = arith.constant 8 : index
    %c384_162 = arith.constant 384 : index
    %87 = vector.load %arg5[%c8_161, %c384_162] : memref<16x1152xf32, #tpu.memory_space<vmem>>, vector<4x128xf32>
    tpu.vector_store %arg5[%c8_161, %c384_162], %86 {strides = array<i32>} : memref<16x1152xf32, #tpu.memory_space<vmem>>, vector<4x128xf32>,
    %c0_163 = arith.constant 0 : index
    %c1_164 = arith.constant 1 : index
    %c1_165 = arith.constant 1 : index
    %c2_166 = arith.constant 2 : index
    %c0_167 = arith.constant 0 : index
    %c0_168 = arith.constant 0 : index
    %88 = vector.load %arg1[%c0_163, %c1_164, %c1_165, %c2_166, %c0_167, %c0_168] : memref<1x2x2x5x5x128xbf16, #tpu.memory_space<vmem>>, vector<1x1x1x1x4x128xbf16>
    %89 = vector.shape_cast %88 : vector<1x1x1x1x4x128xbf16> to vector<4x128xbf16>
    %90 = arith.extf %89 : vector<4x128xbf16> to vector<4x128xf32>
    %c8_169 = arith.constant 8 : index
    %c512_170 = arith.constant 512 : index
    %91 = vector.load %arg5[%c8_169, %c512_170] : memref<16x1152xf32, #tpu.memory_space<vmem>>, vector<4x128xf32>
    tpu.vector_store %arg5[%c8_169, %c512_170], %90 {strides = array<i32>} : memref<16x1152xf32, #tpu.memory_space<vmem>>, vector<4x128xf32>,
    %c0_171 = arith.constant 0 : index
    %c1_172 = arith.constant 1 : index
    %c0_173 = arith.constant 0 : index
    %c2_174 = arith.constant 2 : index
    %c1_175 = arith.constant 1 : index
    %c0_176 = arith.constant 0 : index
    %92 = vector.load %arg1[%c0_171, %c1_172, %c0_173, %c2_174, %c1_175, %c0_176] : memref<1x2x2x5x5x128xbf16, #tpu.memory_space<vmem>>, vector<1x1x1x1x4x128xbf16>
    %93 = vector.shape_cast %92 : vector<1x1x1x1x4x128xbf16> to vector<4x128xbf16>
    %94 = arith.extf %93 : vector<4x128xbf16> to vector<4x128xf32>
    %c8_177 = arith.constant 8 : index
    %c640_178 = arith.constant 640 : index
    %95 = vector.load %arg5[%c8_177, %c640_178] : memref<16x1152xf32, #tpu.memory_space<vmem>>, vector<4x128xf32>
    tpu.vector_store %arg5[%c8_177, %c640_178], %94 {strides = array<i32>} : memref<16x1152xf32, #tpu.memory_space<vmem>>, vector<4x128xf32>,
    %c0_179 = arith.constant 0 : index
    %c0_180 = arith.constant 0 : index
    %c0_181 = arith.constant 0 : index
    %c3 = arith.constant 3 : index
    %c0_182 = arith.constant 0 : index
    %c0_183 = arith.constant 0 : index
    %96 = vector.load %arg1[%c0_179, %c0_180, %c0_181, %c3, %c0_182, %c0_183] : memref<1x2x2x5x5x128xbf16, #tpu.memory_space<vmem>>, vector<1x1x1x1x4x128xbf16>
    %97 = vector.shape_cast %96 : vector<1x1x1x1x4x128xbf16> to vector<4x128xbf16>
    %98 = arith.extf %97 : vector<4x128xbf16> to vector<4x128xf32>
    %c8_184 = arith.constant 8 : index
    %c768_185 = arith.constant 768 : index
    %99 = vector.load %arg5[%c8_184, %c768_185] : memref<16x1152xf32, #tpu.memory_space<vmem>>, vector<4x128xf32>
    tpu.vector_store %arg5[%c8_184, %c768_185], %98 {strides = array<i32>} : memref<16x1152xf32, #tpu.memory_space<vmem>>, vector<4x128xf32>,
    %c0_186 = arith.constant 0 : index
    %c0_187 = arith.constant 0 : index
    %c1_188 = arith.constant 1 : index
    %c3_189 = arith.constant 3 : index
    %c0_190 = arith.constant 0 : index
    %c0_191 = arith.constant 0 : index
    %100 = vector.load %arg1[%c0_186, %c0_187, %c1_188, %c3_189, %c0_190, %c0_191] : memref<1x2x2x5x5x128xbf16, #tpu.memory_space<vmem>>, vector<1x1x1x1x4x128xbf16>
    %101 = vector.shape_cast %100 : vector<1x1x1x1x4x128xbf16> to vector<4x128xbf16>
    %102 = arith.extf %101 : vector<4x128xbf16> to vector<4x128xf32>
    %c8_192 = arith.constant 8 : index
    %c896_193 = arith.constant 896 : index
    %103 = vector.load %arg5[%c8_192, %c896_193] : memref<16x1152xf32, #tpu.memory_space<vmem>>, vector<4x128xf32>
    tpu.vector_store %arg5[%c8_192, %c896_193], %102 {strides = array<i32>} : memref<16x1152xf32, #tpu.memory_space<vmem>>, vector<4x128xf32>,
    %c0_194 = arith.constant 0 : index
    %c0_195 = arith.constant 0 : index
    %c0_196 = arith.constant 0 : index
    %c3_197 = arith.constant 3 : index
    %c1_198 = arith.constant 1 : index
    %c0_199 = arith.constant 0 : index
    %104 = vector.load %arg1[%c0_194, %c0_195, %c0_196, %c3_197, %c1_198, %c0_199] : memref<1x2x2x5x5x128xbf16, #tpu.memory_space<vmem>>, vector<1x1x1x1x4x128xbf16>
    %105 = vector.shape_cast %104 : vector<1x1x1x1x4x128xbf16> to vector<4x128xbf16>
    %106 = arith.extf %105 : vector<4x128xbf16> to vector<4x128xf32>
    %c8_200 = arith.constant 8 : index
    %c1024_201 = arith.constant 1024 : index
    %107 = vector.load %arg5[%c8_200, %c1024_201] : memref<16x1152xf32, #tpu.memory_space<vmem>>, vector<4x128xf32>
    tpu.vector_store %arg5[%c8_200, %c1024_201], %106 {strides = array<i32>} : memref<16x1152xf32, #tpu.memory_space<vmem>>, vector<4x128xf32>,
    %c0_202 = arith.constant 0 : index
    %c0_203 = arith.constant 0 : index
    %c0_204 = arith.constant 0 : index
    %c3_205 = arith.constant 3 : index
    %c0_206 = arith.constant 0 : index
    %c0_207 = arith.constant 0 : index
    %108 = vector.load %arg1[%c0_202, %c0_203, %c0_204, %c3_205, %c0_206, %c0_207] : memref<1x2x2x5x5x128xbf16, #tpu.memory_space<vmem>>, vector<1x1x1x1x4x128xbf16>
    %109 = vector.shape_cast %108 : vector<1x1x1x1x4x128xbf16> to vector<4x128xbf16>
    %110 = arith.extf %109 : vector<4x128xbf16> to vector<4x128xf32>
    %c12 = arith.constant 12 : index
    %c0_208 = arith.constant 0 : index
    %111 = vector.load %arg5[%c12, %c0_208] : memref<16x1152xf32, #tpu.memory_space<vmem>>, vector<4x128xf32>
    tpu.vector_store %arg5[%c12, %c0_208], %110 {strides = array<i32>} : memref<16x1152xf32, #tpu.memory_space<vmem>>, vector<4x128xf32>,
    %c0_209 = arith.constant 0 : index
    %c0_210 = arith.constant 0 : index
    %c1_211 = arith.constant 1 : index
    %c3_212 = arith.constant 3 : index
    %c0_213 = arith.constant 0 : index
    %c0_214 = arith.constant 0 : index
    %112 = vector.load %arg1[%c0_209, %c0_210, %c1_211, %c3_212, %c0_213, %c0_214] : memref<1x2x2x5x5x128xbf16, #tpu.memory_space<vmem>>, vector<1x1x1x1x4x128xbf16>
    %113 = vector.shape_cast %112 : vector<1x1x1x1x4x128xbf16> to vector<4x128xbf16>
    %114 = arith.extf %113 : vector<4x128xbf16> to vector<4x128xf32>
    %c12_215 = arith.constant 12 : index
    %c128_216 = arith.constant 128 : index
    %115 = vector.load %arg5[%c12_215, %c128_216] : memref<16x1152xf32, #tpu.memory_space<vmem>>, vector<4x128xf32>
    tpu.vector_store %arg5[%c12_215, %c128_216], %114 {strides = array<i32>} : memref<16x1152xf32, #tpu.memory_space<vmem>>, vector<4x128xf32>,
    %c0_217 = arith.constant 0 : index
    %c0_218 = arith.constant 0 : index
    %c0_219 = arith.constant 0 : index
    %c3_220 = arith.constant 3 : index
    %c1_221 = arith.constant 1 : index
    %c0_222 = arith.constant 0 : index
    %116 = vector.load %arg1[%c0_217, %c0_218, %c0_219, %c3_220, %c1_221, %c0_222] : memref<1x2x2x5x5x128xbf16, #tpu.memory_space<vmem>>, vector<1x1x1x1x4x128xbf16>
    %117 = vector.shape_cast %116 : vector<1x1x1x1x4x128xbf16> to vector<4x128xbf16>
    %118 = arith.extf %117 : vector<4x128xbf16> to vector<4x128xf32>
    %c12_223 = arith.constant 12 : index
    %c256_224 = arith.constant 256 : index
    %119 = vector.load %arg5[%c12_223, %c256_224] : memref<16x1152xf32, #tpu.memory_space<vmem>>, vector<4x128xf32>
    tpu.vector_store %arg5[%c12_223, %c256_224], %118 {strides = array<i32>} : memref<16x1152xf32, #tpu.memory_space<vmem>>, vector<4x128xf32>,
    %c0_225 = arith.constant 0 : index
    %c1_226 = arith.constant 1 : index
    %c0_227 = arith.constant 0 : index
    %c3_228 = arith.constant 3 : index
    %c0_229 = arith.constant 0 : index
    %c0_230 = arith.constant 0 : index
    %120 = vector.load %arg1[%c0_225, %c1_226, %c0_227, %c3_228, %c0_229, %c0_230] : memref<1x2x2x5x5x128xbf16, #tpu.memory_space<vmem>>, vector<1x1x1x1x4x128xbf16>
    %121 = vector.shape_cast %120 : vector<1x1x1x1x4x128xbf16> to vector<4x128xbf16>
    %122 = arith.extf %121 : vector<4x128xbf16> to vector<4x128xf32>
    %c12_231 = arith.constant 12 : index
    %c384_232 = arith.constant 384 : index
    %123 = vector.load %arg5[%c12_231, %c384_232] : memref<16x1152xf32, #tpu.memory_space<vmem>>, vector<4x128xf32>
    tpu.vector_store %arg5[%c12_231, %c384_232], %122 {strides = array<i32>} : memref<16x1152xf32, #tpu.memory_space<vmem>>, vector<4x128xf32>,
    %c0_233 = arith.constant 0 : index
    %c1_234 = arith.constant 1 : index
    %c1_235 = arith.constant 1 : index
    %c3_236 = arith.constant 3 : index
    %c0_237 = arith.constant 0 : index
    %c0_238 = arith.constant 0 : index
    %124 = vector.load %arg1[%c0_233, %c1_234, %c1_235, %c3_236, %c0_237, %c0_238] : memref<1x2x2x5x5x128xbf16, #tpu.memory_space<vmem>>, vector<1x1x1x1x4x128xbf16>
    %125 = vector.shape_cast %124 : vector<1x1x1x1x4x128xbf16> to vector<4x128xbf16>
    %126 = arith.extf %125 : vector<4x128xbf16> to vector<4x128xf32>
    %c12_239 = arith.constant 12 : index
    %c512_240 = arith.constant 512 : index
    %127 = vector.load %arg5[%c12_239, %c512_240] : memref<16x1152xf32, #tpu.memory_space<vmem>>, vector<4x128xf32>
    tpu.vector_store %arg5[%c12_239, %c512_240], %126 {strides = array<i32>} : memref<16x1152xf32, #tpu.memory_space<vmem>>, vector<4x128xf32>,
    %c0_241 = arith.constant 0 : index
    %c1_242 = arith.constant 1 : index
    %c0_243 = arith.constant 0 : index
    %c3_244 = arith.constant 3 : index
    %c1_245 = arith.constant 1 : index
    %c0_246 = arith.constant 0 : index
    %128 = vector.load %arg1[%c0_241, %c1_242, %c0_243, %c3_244, %c1_245, %c0_246] : memref<1x2x2x5x5x128xbf16, #tpu.memory_space<vmem>>, vector<1x1x1x1x4x128xbf16>
    %129 = vector.shape_cast %128 : vector<1x1x1x1x4x128xbf16> to vector<4x128xbf16>
    %130 = arith.extf %129 : vector<4x128xbf16> to vector<4x128xf32>
    %c12_247 = arith.constant 12 : index
    %c640_248 = arith.constant 640 : index
    %131 = vector.load %arg5[%c12_247, %c640_248] : memref<16x1152xf32, #tpu.memory_space<vmem>>, vector<4x128xf32>
    tpu.vector_store %arg5[%c12_247, %c640_248], %130 {strides = array<i32>} : memref<16x1152xf32, #tpu.memory_space<vmem>>, vector<4x128xf32>,
    %c0_249 = arith.constant 0 : index
    %c0_250 = arith.constant 0 : index
    %c0_251 = arith.constant 0 : index
    %c4_252 = arith.constant 4 : index
    %c0_253 = arith.constant 0 : index
    %c0_254 = arith.constant 0 : index
    %132 = vector.load %arg1[%c0_249, %c0_250, %c0_251, %c4_252, %c0_253, %c0_254] : memref<1x2x2x5x5x128xbf16, #tpu.memory_space<vmem>>, vector<1x1x1x1x4x128xbf16>
    %133 = vector.shape_cast %132 : vector<1x1x1x1x4x128xbf16> to vector<4x128xbf16>
    %134 = arith.extf %133 : vector<4x128xbf16> to vector<4x128xf32>
    %c12_255 = arith.constant 12 : index
    %c768_256 = arith.constant 768 : index
    %135 = vector.load %arg5[%c12_255, %c768_256] : memref<16x1152xf32, #tpu.memory_space<vmem>>, vector<4x128xf32>
    tpu.vector_store %arg5[%c12_255, %c768_256], %134 {strides = array<i32>} : memref<16x1152xf32, #tpu.memory_space<vmem>>, vector<4x128xf32>,
    %c0_257 = arith.constant 0 : index
    %c0_258 = arith.constant 0 : index
    %c1_259 = arith.constant 1 : index
    %c4_260 = arith.constant 4 : index
    %c0_261 = arith.constant 0 : index
    %c0_262 = arith.constant 0 : index
    %136 = vector.load %arg1[%c0_257, %c0_258, %c1_259, %c4_260, %c0_261, %c0_262] : memref<1x2x2x5x5x128xbf16, #tpu.memory_space<vmem>>, vector<1x1x1x1x4x128xbf16>
    %137 = vector.shape_cast %136 : vector<1x1x1x1x4x128xbf16> to vector<4x128xbf16>
    %138 = arith.extf %137 : vector<4x128xbf16> to vector<4x128xf32>
    %c12_263 = arith.constant 12 : index
    %c896_264 = arith.constant 896 : index
    %139 = vector.load %arg5[%c12_263, %c896_264] : memref<16x1152xf32, #tpu.memory_space<vmem>>, vector<4x128xf32>
    tpu.vector_store %arg5[%c12_263, %c896_264], %138 {strides = array<i32>} : memref<16x1152xf32, #tpu.memory_space<vmem>>, vector<4x128xf32>,
    %c0_265 = arith.constant 0 : index
    %c0_266 = arith.constant 0 : index
    %c0_267 = arith.constant 0 : index
    %c4_268 = arith.constant 4 : index
    %c1_269 = arith.constant 1 : index
    %c0_270 = arith.constant 0 : index
    %140 = vector.load %arg1[%c0_265, %c0_266, %c0_267, %c4_268, %c1_269, %c0_270] : memref<1x2x2x5x5x128xbf16, #tpu.memory_space<vmem>>, vector<1x1x1x1x4x128xbf16>
    %141 = vector.shape_cast %140 : vector<1x1x1x1x4x128xbf16> to vector<4x128xbf16>
    %142 = arith.extf %141 : vector<4x128xbf16> to vector<4x128xf32>
    %c12_271 = arith.constant 12 : index
    %c1024_272 = arith.constant 1024 : index
    %143 = vector.load %arg5[%c12_271, %c1024_272] : memref<16x1152xf32, #tpu.memory_space<vmem>>, vector<4x128xf32>
    tpu.vector_store %arg5[%c12_271, %c1024_272], %142 {strides = array<i32>} : memref<16x1152xf32, #tpu.memory_space<vmem>>, vector<4x128xf32>,
    %c0_273 = arith.constant 0 : index
    %c0_274 = arith.constant 0 : index
    %144 = vector.load %arg5[%c0_273, %c0_274] : memref<16x1152xf32, #tpu.memory_space<vmem>>, vector<16x1152xf32>
    %145 = arith.truncf %144 : vector<16x1152xf32> to vector<16x1152xbf16>
    %c0_275 = arith.constant 0 : index
    %c0_276 = arith.constant 0 : index
    %146 = vector.load %arg2[%c0_275, %c0_276] : memref<1152x128xbf16, #tpu.memory_space<vmem>>, vector<1152x128xbf16>
    %cst = arith.constant dense<0.000000e+00> : vector<16x128xf32>
    %147 = tpu.matmul %145, %146, %cst {dimension_numbers = #tpu.dot_dimension_numbers<[1], [0], [0], [1], [0, 0, 1, 1], [], []>} : vector<16x1152xbf16>, vector<1152x128xbf16>, vector<16x128xf32> -> vector<16x128xf32>
    %148 = arith.truncf %147 : vector<16x128xf32> to vector<16x128xbf16>
    %c0_277 = arith.constant 0 : index
    %c0_278 = arith.constant 0 : index
    %c0_279 = arith.constant 0 : index
    %149 = vector.load %arg3[%c0_277, %c0_278, %c0_279] : memref<1x16x128xbf16, #tpu.memory_space<vmem>>, vector<1x16x128xbf16>
    %150 = vector.shape_cast %149 : vector<1x16x128xbf16> to vector<16x128xbf16>
    %151 = vector.shape_cast %148 : vector<16x128xbf16> to vector<1x16x128xbf16>
    tpu.vector_store %arg3[%c0_277, %c0_278, %c0_279], %151 {strides = array<i32>} : memref<1x16x128xbf16, #tpu.memory_space<vmem>>, vector<1x16x128xbf16>,
    %cst_280 = arith.constant dense<0.000000e+00> : vector<128xf32>
    %152 = vector.multi_reduction <add>, %147, %cst_280 [0] : vector<16x128xf32> to vector<128xf32>
    %153 = vector.shape_cast %152 : vector<128xf32> to vector<1x128xf32>
    %c0_281 = arith.constant 0 : index
    %c0_282 = arith.constant 0 : index
    %c0_283 = arith.constant 0 : index
    %154 = vector.load %arg4[%c0_281, %c0_282, %c0_283] : memref<1x2x128xf32, #tpu.memory_space<vmem>>, vector<1x1x128xf32>
    %155 = vector.shape_cast %154 : vector<1x1x128xf32> to vector<1x128xf32>
    %156 = vector.shape_cast %153 : vector<1x128xf32> to vector<1x1x128xf32>
    tpu.vector_store %arg4[%c0_281, %c0_282, %c0_283], %156 {strides = array<i32>} : memref<1x2x128xf32, #tpu.memory_space<vmem>>, vector<1x1x128xf32>,
    %157 = arith.mulf %147, %147 : vector<16x128xf32>
    %cst_284 = arith.constant dense<0.000000e+00> : vector<128xf32>
    %158 = vector.multi_reduction <add>, %157, %cst_284 [0] : vector<16x128xf32> to vector<128xf32>
    %159 = vector.shape_cast %158 : vector<128xf32> to vector<1x128xf32>
    %c0_285 = arith.constant 0 : index
    %c1_286 = arith.constant 1 : index
    %c0_287 = arith.constant 0 : index
    %160 = vector.load %arg4[%c0_285, %c1_286, %c0_287] : memref<1x2x128xf32, #tpu.memory_space<vmem>>, vector<1x1x128xf32>
    %161 = vector.shape_cast %160 : vector<1x1x128xf32> to vector<1x128xf32>
    %162 = vector.shape_cast %159 : vector<1x128xf32> to vector<1x1x128xf32>
    tpu.vector_store %arg4[%c0_285, %c1_286, %c0_287], %162 {strides = array<i32>} : memref<1x2x128xf32, #tpu.memory_space<vmem>>, vector<1x1x128xf32>,
    return
  }
  func.func @transform_0(%arg0: i32) -> (i32, i32, i32, i32, i32, i32) {
    %c0_i32 = arith.constant 0 : i32
    %c0_i32_0 = arith.constant 0 : i32
    %c0_i32_1 = arith.constant 0 : i32
    %c0_i32_2 = arith.constant 0 : i32
    %c0_i32_3 = arith.constant 0 : i32
    %c0_i32_4 = arith.constant 0 : i32
    return %arg0, %c0_i32, %c0_i32_0, %c0_i32_1, %c0_i32_2, %c0_i32_3 : i32, i32, i32, i32, i32, i32
  }
  func.func @transform_1(%arg0: i32) -> (i32, i32) {
    %c0_i32 = arith.constant 0 : i32
    %c0_i32_0 = arith.constant 0 : i32
    %c0_i32_1 = arith.constant 0 : i32
    return %c0_i32, %c0_i32_0 : i32, i32
  }
  func.func @transform_2(%arg0: i32) -> (i32, i32, i32) {
    %c0_i32 = arith.constant 0 : i32
    %c0_i32_0 = arith.constant 0 : i32
    %c0_i32_1 = arith.constant 0 : i32
    return %arg0, %c0_i32, %c0_i32_0 : i32, i32, i32
  }
  func.func @transform_3(%arg0: i32) -> (i32, i32, i32) {
    %c0_i32 = arith.constant 0 : i32
    %c0_i32_0 = arith.constant 0 : i32
    %c0_i32_1 = arith.constant 0 : i32
    return %arg0, %c0_i32, %c0_i32_0 : i32, i32, i32
  }
}

module attributes {stable_mosaic.version = 11 : i64} {
  func.func @kernel(%arg0: i32, %arg1: memref<32x128xbf16, #tpu.memory_space<vmem>>, %arg2: memref<128x384xbf16, #tpu.memory_space<vmem>>, %arg3: memref<32x384xbf16, #tpu.memory_space<vmem>>, %arg4: memref<1x2x384xf32, #tpu.memory_space<vmem>>) attributes {dimension_semantics = [#tpu.dimension_semantics<parallel>], iteration_bounds = array<i64: 1>, scalar_prefetch = 0 : i64, scratch_operands = 0 : i64, tpu.core_type = #tpu.core_type<tc>, window_params = [{transform_indices = @transform_0, window_bounds = array<i64: 32, 128>}, {pipeline_mode = #tpu.pipeline_mode<synchronous>, transform_indices = @transform_1, window_bounds = array<i64: 128, 384>}, {transform_indices = @transform_2, window_bounds = array<i64: 32, 384>}, {transform_indices = @transform_3, window_bounds = array<i64: 1, 2, 384>}]} {
    %c0 = arith.constant 0 : index
    %c0_0 = arith.constant 0 : index
    %0 = vector.load %arg1[%c0, %c0_0] : memref<32x128xbf16, #tpu.memory_space<vmem>>, vector<32x128xbf16>
    %c0_1 = arith.constant 0 : index
    %c0_2 = arith.constant 0 : index
    %1 = vector.load %arg2[%c0_1, %c0_2] : memref<128x384xbf16, #tpu.memory_space<vmem>>, vector<128x384xbf16>
    %cst = arith.constant dense<0.000000e+00> : vector<32x384xf32>
    %2 = tpu.matmul %0, %1, %cst {dimension_numbers = #tpu.dot_dimension_numbers<[1], [0], [0], [1], [0, 0, 1, 1], [], []>} : vector<32x128xbf16>, vector<128x384xbf16>, vector<32x384xf32> -> vector<32x384xf32>
    %3 = arith.truncf %2 : vector<32x384xf32> to vector<32x384xbf16>
    %c0_3 = arith.constant 0 : index
    %c0_4 = arith.constant 0 : index
    %4 = vector.load %arg3[%c0_3, %c0_4] : memref<32x384xbf16, #tpu.memory_space<vmem>>, vector<32x384xbf16>
    tpu.vector_store %arg3[%c0_3, %c0_4], %3 {strides = array<i32>} : memref<32x384xbf16, #tpu.memory_space<vmem>>, vector<32x384xbf16>,
    %cst_5 = arith.constant dense<0.000000e+00> : vector<384xf32>
    %5 = vector.multi_reduction <add>, %2, %cst_5 [0] : vector<32x384xf32> to vector<384xf32>
    %6 = vector.shape_cast %5 : vector<384xf32> to vector<1x384xf32>
    %c0_6 = arith.constant 0 : index
    %c0_7 = arith.constant 0 : index
    %c0_8 = arith.constant 0 : index
    %7 = vector.load %arg4[%c0_6, %c0_7, %c0_8] : memref<1x2x384xf32, #tpu.memory_space<vmem>>, vector<1x1x384xf32>
    %8 = vector.shape_cast %7 : vector<1x1x384xf32> to vector<1x384xf32>
    %9 = vector.shape_cast %6 : vector<1x384xf32> to vector<1x1x384xf32>
    tpu.vector_store %arg4[%c0_6, %c0_7, %c0_8], %9 {strides = array<i32>} : memref<1x2x384xf32, #tpu.memory_space<vmem>>, vector<1x1x384xf32>,
    %10 = arith.mulf %2, %2 : vector<32x384xf32>
    %cst_9 = arith.constant dense<0.000000e+00> : vector<384xf32>
    %11 = vector.multi_reduction <add>, %10, %cst_9 [0] : vector<32x384xf32> to vector<384xf32>
    %12 = vector.shape_cast %11 : vector<384xf32> to vector<1x384xf32>
    %c0_10 = arith.constant 0 : index
    %c1 = arith.constant 1 : index
    %c0_11 = arith.constant 0 : index
    %13 = vector.load %arg4[%c0_10, %c1, %c0_11] : memref<1x2x384xf32, #tpu.memory_space<vmem>>, vector<1x1x384xf32>
    %14 = vector.shape_cast %13 : vector<1x1x384xf32> to vector<1x384xf32>
    %15 = vector.shape_cast %12 : vector<1x384xf32> to vector<1x1x384xf32>
    tpu.vector_store %arg4[%c0_10, %c1, %c0_11], %15 {strides = array<i32>} : memref<1x2x384xf32, #tpu.memory_space<vmem>>, vector<1x1x384xf32>,
    return
  }
  func.func @transform_0(%arg0: i32) -> (i32, i32) {
    %c0_i32 = arith.constant 0 : i32
    %c0_i32_0 = arith.constant 0 : i32
    return %arg0, %c0_i32 : i32, i32
  }
  func.func @transform_1(%arg0: i32) -> (i32, i32) {
    %c0_i32 = arith.constant 0 : i32
    %c0_i32_0 = arith.constant 0 : i32
    %c0_i32_1 = arith.constant 0 : i32
    return %c0_i32, %c0_i32_0 : i32, i32
  }
  func.func @transform_2(%arg0: i32) -> (i32, i32) {
    %c0_i32 = arith.constant 0 : i32
    %c0_i32_0 = arith.constant 0 : i32
    return %arg0, %c0_i32 : i32, i32
  }
  func.func @transform_3(%arg0: i32) -> (i32, i32, i32) {
    %c0_i32 = arith.constant 0 : i32
    %c0_i32_0 = arith.constant 0 : i32
    %c0_i32_1 = arith.constant 0 : i32
    return %arg0, %c0_i32, %c0_i32_0 : i32, i32, i32
  }
}

module attributes {stable_mosaic.version = 11 : i64} {
  func.func @kernel(%arg0: i32, %arg1: memref<32x384xbf16, #tpu.memory_space<vmem>>, %arg2: memref<32x384xbf16, #tpu.memory_space<vmem>>, %arg3: memref<2x384xf32, #tpu.memory_space<vmem>>, %arg4: memref<2x384xf32, #tpu.memory_space<vmem>>, %arg5: memref<32x768xf32, #tpu.memory_space<vmem>>) attributes {dimension_semantics = [#tpu.dimension_semantics<parallel>], iteration_bounds = array<i64: 1>, scalar_prefetch = 0 : i64, scratch_operands = 0 : i64, tpu.core_type = #tpu.core_type<tc>, window_params = [{transform_indices = @transform_0, window_bounds = array<i64: 32, 384>}, {transform_indices = @transform_1, window_bounds = array<i64: 32, 384>}, {pipeline_mode = #tpu.pipeline_mode<synchronous>, transform_indices = @transform_2, window_bounds = array<i64: 2, 384>}, {pipeline_mode = #tpu.pipeline_mode<synchronous>, transform_indices = @transform_3, window_bounds = array<i64: 2, 384>}, {transform_indices = @transform_4, window_bounds = array<i64: 32, 768>}]} {
    %c0 = arith.constant 0 : index
    %c0_0 = arith.constant 0 : index
    %0 = vector.load %arg1[%c0, %c0_0] : memref<32x384xbf16, #tpu.memory_space<vmem>>, vector<32x384xbf16>
    %1 = arith.extf %0 : vector<32x384xbf16> to vector<32x384xf32>
    %c0_1 = arith.constant 0 : index
    %c0_2 = arith.constant 0 : index
    %2 = vector.load %arg3[%c0_1, %c0_2] : memref<2x384xf32, #tpu.memory_space<vmem>>, vector<1x384xf32>
    %3 = vector.broadcast %2 : vector<1x384xf32> to vector<32x384xf32>
    %4 = arith.mulf %1, %3 : vector<32x384xf32>
    %c1 = arith.constant 1 : index
    %c0_3 = arith.constant 0 : index
    %5 = vector.load %arg3[%c1, %c0_3] : memref<2x384xf32, #tpu.memory_space<vmem>>, vector<1x384xf32>
    %6 = vector.broadcast %5 : vector<1x384xf32> to vector<32x384xf32>
    %7 = arith.addf %4, %6 : vector<32x384xf32>
    %c0_4 = arith.constant 0 : index
    %c0_5 = arith.constant 0 : index
    %8 = vector.load %arg5[%c0_4, %c0_5] : memref<32x768xf32, #tpu.memory_space<vmem>>, vector<32x384xf32>
    tpu.vector_store %arg5[%c0_4, %c0_5], %7 {strides = array<i32>} : memref<32x768xf32, #tpu.memory_space<vmem>>, vector<32x384xf32>,
    %c0_6 = arith.constant 0 : index
    %c0_7 = arith.constant 0 : index
    %9 = vector.load %arg2[%c0_6, %c0_7] : memref<32x384xbf16, #tpu.memory_space<vmem>>, vector<32x384xbf16>
    %10 = arith.extf %9 : vector<32x384xbf16> to vector<32x384xf32>
    %c0_8 = arith.constant 0 : index
    %c0_9 = arith.constant 0 : index
    %11 = vector.load %arg4[%c0_8, %c0_9] : memref<2x384xf32, #tpu.memory_space<vmem>>, vector<1x384xf32>
    %12 = vector.broadcast %11 : vector<1x384xf32> to vector<32x384xf32>
    %13 = arith.mulf %10, %12 : vector<32x384xf32>
    %c1_10 = arith.constant 1 : index
    %c0_11 = arith.constant 0 : index
    %14 = vector.load %arg4[%c1_10, %c0_11] : memref<2x384xf32, #tpu.memory_space<vmem>>, vector<1x384xf32>
    %15 = vector.broadcast %14 : vector<1x384xf32> to vector<32x384xf32>
    %16 = arith.addf %13, %15 : vector<32x384xf32>
    %c0_12 = arith.constant 0 : index
    %c384 = arith.constant 384 : index
    %17 = vector.load %arg5[%c0_12, %c384] : memref<32x768xf32, #tpu.memory_space<vmem>>, vector<32x384xf32>
    tpu.vector_store %arg5[%c0_12, %c384], %16 {strides = array<i32>} : memref<32x768xf32, #tpu.memory_space<vmem>>, vector<32x384xf32>,
    return
  }
  func.func @transform_0(%arg0: i32) -> (i32, i32) {
    %c0_i32 = arith.constant 0 : i32
    %c0_i32_0 = arith.constant 0 : i32
    return %arg0, %c0_i32 : i32, i32
  }
  func.func @transform_1(%arg0: i32) -> (i32, i32) {
    %c0_i32 = arith.constant 0 : i32
    %c0_i32_0 = arith.constant 0 : i32
    return %arg0, %c0_i32 : i32, i32
  }
  func.func @transform_2(%arg0: i32) -> (i32, i32) {
    %c0_i32 = arith.constant 0 : i32
    %c0_i32_0 = arith.constant 0 : i32
    %c0_i32_1 = arith.constant 0 : i32
    return %c0_i32, %c0_i32_0 : i32, i32
  }
  func.func @transform_3(%arg0: i32) -> (i32, i32) {
    %c0_i32 = arith.constant 0 : i32
    %c0_i32_0 = arith.constant 0 : i32
    %c0_i32_1 = arith.constant 0 : i32
    return %c0_i32, %c0_i32_0 : i32, i32
  }
  func.func @transform_4(%arg0: i32) -> (i32, i32) {
    %c0_i32 = arith.constant 0 : i32
    %c0_i32_0 = arith.constant 0 : i32
    return %arg0, %c0_i32 : i32, i32
  }
}

module attributes {stable_mosaic.version = 11 : i64} {
  func.func @kernel(%arg0: i32, %arg1: memref<1x2x2x5x5x16xf32, #tpu.memory_space<vmem>>, %arg2: memref<144x384xbf16, #tpu.memory_space<vmem>>, %arg3: memref<1x16x384xbf16, #tpu.memory_space<vmem>>, %arg4: memref<1x2x384xf32, #tpu.memory_space<vmem>>, %arg5: memref<1x4x4x16xf32, #tpu.memory_space<vmem>>, %arg6: memref<16x144xf32, #tpu.memory_space<vmem>>) attributes {dimension_semantics = [#tpu.dimension_semantics<parallel>], iteration_bounds = array<i64: 2>, scalar_prefetch = 0 : i64, scratch_operands = 1 : i64, tpu.core_type = #tpu.core_type<tc>, window_params = [{transform_indices = @transform_0, window_bounds = array<i64: 1, 2, 2, 5, 5, 16>}, {pipeline_mode = #tpu.pipeline_mode<synchronous>, transform_indices = @transform_1, window_bounds = array<i64: 144, 384>}, {transform_indices = @transform_2, window_bounds = array<i64: 1, 16, 384>}, {transform_indices = @transform_3, window_bounds = array<i64: 1, 2, 384>}, {transform_indices = @transform_4, window_bounds = array<i64: 1, 4, 4, 16>}]} {
    %c0 = arith.constant 0 : index
    %c0_0 = arith.constant 0 : index
    %c0_1 = arith.constant 0 : index
    %c0_2 = arith.constant 0 : index
    %c0_3 = arith.constant 0 : index
    %c0_4 = arith.constant 0 : index
    %0 = vector.load %arg1[%c0, %c0_0, %c0_1, %c0_2, %c0_3, %c0_4] : memref<1x2x2x5x5x16xf32, #tpu.memory_space<vmem>>, vector<1x1x1x1x4x16xf32>
    %1 = vector.shape_cast %0 : vector<1x1x1x1x4x16xf32> to vector<4x16xf32>
    %c0_5 = arith.constant 0 : index
    %c0_6 = arith.constant 0 : index
    %2 = vector.load %arg6[%c0_5, %c0_6] : memref<16x144xf32, #tpu.memory_space<vmem>>, vector<4x16xf32>
    tpu.vector_store %arg6[%c0_5, %c0_6], %1 {strides = array<i32>} : memref<16x144xf32, #tpu.memory_space<vmem>>, vector<4x16xf32>,
    %c0_7 = arith.constant 0 : index
    %c0_8 = arith.constant 0 : index
    %c1 = arith.constant 1 : index
    %c0_9 = arith.constant 0 : index
    %c0_10 = arith.constant 0 : index
    %c0_11 = arith.constant 0 : index
    %3 = vector.load %arg1[%c0_7, %c0_8, %c1, %c0_9, %c0_10, %c0_11] : memref<1x2x2x5x5x16xf32, #tpu.memory_space<vmem>>, vector<1x1x1x1x4x16xf32>
    %4 = vector.shape_cast %3 : vector<1x1x1x1x4x16xf32> to vector<4x16xf32>
    %c0_12 = arith.constant 0 : index
    %c16 = arith.constant 16 : index
    %5 = vector.load %arg6[%c0_12, %c16] : memref<16x144xf32, #tpu.memory_space<vmem>>, vector<4x16xf32>
    tpu.vector_store %arg6[%c0_12, %c16], %4 {strides = array<i32>} : memref<16x144xf32, #tpu.memory_space<vmem>>, vector<4x16xf32>,
    %c0_13 = arith.constant 0 : index
    %c0_14 = arith.constant 0 : index
    %c0_15 = arith.constant 0 : index
    %c0_16 = arith.constant 0 : index
    %c1_17 = arith.constant 1 : index
    %c0_18 = arith.constant 0 : index
    %6 = vector.load %arg1[%c0_13, %c0_14, %c0_15, %c0_16, %c1_17, %c0_18] : memref<1x2x2x5x5x16xf32, #tpu.memory_space<vmem>>, vector<1x1x1x1x4x16xf32>
    %7 = vector.shape_cast %6 : vector<1x1x1x1x4x16xf32> to vector<4x16xf32>
    %c0_19 = arith.constant 0 : index
    %c32 = arith.constant 32 : index
    %8 = vector.load %arg6[%c0_19, %c32] : memref<16x144xf32, #tpu.memory_space<vmem>>, vector<4x16xf32>
    tpu.vector_store %arg6[%c0_19, %c32], %7 {strides = array<i32>} : memref<16x144xf32, #tpu.memory_space<vmem>>, vector<4x16xf32>,
    %c0_20 = arith.constant 0 : index
    %c1_21 = arith.constant 1 : index
    %c0_22 = arith.constant 0 : index
    %c0_23 = arith.constant 0 : index
    %c0_24 = arith.constant 0 : index
    %c0_25 = arith.constant 0 : index
    %9 = vector.load %arg1[%c0_20, %c1_21, %c0_22, %c0_23, %c0_24, %c0_25] : memref<1x2x2x5x5x16xf32, #tpu.memory_space<vmem>>, vector<1x1x1x1x4x16xf32>
    %10 = vector.shape_cast %9 : vector<1x1x1x1x4x16xf32> to vector<4x16xf32>
    %c0_26 = arith.constant 0 : index
    %c48 = arith.constant 48 : index
    %11 = vector.load %arg6[%c0_26, %c48] : memref<16x144xf32, #tpu.memory_space<vmem>>, vector<4x16xf32>
    tpu.vector_store %arg6[%c0_26, %c48], %10 {strides = array<i32>} : memref<16x144xf32, #tpu.memory_space<vmem>>, vector<4x16xf32>,
    %c0_27 = arith.constant 0 : index
    %c1_28 = arith.constant 1 : index
    %c1_29 = arith.constant 1 : index
    %c0_30 = arith.constant 0 : index
    %c0_31 = arith.constant 0 : index
    %c0_32 = arith.constant 0 : index
    %12 = vector.load %arg1[%c0_27, %c1_28, %c1_29, %c0_30, %c0_31, %c0_32] : memref<1x2x2x5x5x16xf32, #tpu.memory_space<vmem>>, vector<1x1x1x1x4x16xf32>
    %13 = vector.shape_cast %12 : vector<1x1x1x1x4x16xf32> to vector<4x16xf32>
    %c0_33 = arith.constant 0 : index
    %c64 = arith.constant 64 : index
    %14 = vector.load %arg6[%c0_33, %c64] : memref<16x144xf32, #tpu.memory_space<vmem>>, vector<4x16xf32>
    tpu.vector_store %arg6[%c0_33, %c64], %13 {strides = array<i32>} : memref<16x144xf32, #tpu.memory_space<vmem>>, vector<4x16xf32>,
    %c0_34 = arith.constant 0 : index
    %c1_35 = arith.constant 1 : index
    %c0_36 = arith.constant 0 : index
    %c0_37 = arith.constant 0 : index
    %c1_38 = arith.constant 1 : index
    %c0_39 = arith.constant 0 : index
    %15 = vector.load %arg1[%c0_34, %c1_35, %c0_36, %c0_37, %c1_38, %c0_39] : memref<1x2x2x5x5x16xf32, #tpu.memory_space<vmem>>, vector<1x1x1x1x4x16xf32>
    %16 = vector.shape_cast %15 : vector<1x1x1x1x4x16xf32> to vector<4x16xf32>
    %c0_40 = arith.constant 0 : index
    %c80 = arith.constant 80 : index
    %17 = vector.load %arg6[%c0_40, %c80] : memref<16x144xf32, #tpu.memory_space<vmem>>, vector<4x16xf32>
    tpu.vector_store %arg6[%c0_40, %c80], %16 {strides = array<i32>} : memref<16x144xf32, #tpu.memory_space<vmem>>, vector<4x16xf32>,
    %c0_41 = arith.constant 0 : index
    %c0_42 = arith.constant 0 : index
    %c0_43 = arith.constant 0 : index
    %c1_44 = arith.constant 1 : index
    %c0_45 = arith.constant 0 : index
    %c0_46 = arith.constant 0 : index
    %18 = vector.load %arg1[%c0_41, %c0_42, %c0_43, %c1_44, %c0_45, %c0_46] : memref<1x2x2x5x5x16xf32, #tpu.memory_space<vmem>>, vector<1x1x1x1x4x16xf32>
    %19 = vector.shape_cast %18 : vector<1x1x1x1x4x16xf32> to vector<4x16xf32>
    %c0_47 = arith.constant 0 : index
    %c96 = arith.constant 96 : index
    %20 = vector.load %arg6[%c0_47, %c96] : memref<16x144xf32, #tpu.memory_space<vmem>>, vector<4x16xf32>
    tpu.vector_store %arg6[%c0_47, %c96], %19 {strides = array<i32>} : memref<16x144xf32, #tpu.memory_space<vmem>>, vector<4x16xf32>,
    %c0_48 = arith.constant 0 : index
    %c0_49 = arith.constant 0 : index
    %c1_50 = arith.constant 1 : index
    %c1_51 = arith.constant 1 : index
    %c0_52 = arith.constant 0 : index
    %c0_53 = arith.constant 0 : index
    %21 = vector.load %arg1[%c0_48, %c0_49, %c1_50, %c1_51, %c0_52, %c0_53] : memref<1x2x2x5x5x16xf32, #tpu.memory_space<vmem>>, vector<1x1x1x1x4x16xf32>
    %22 = vector.shape_cast %21 : vector<1x1x1x1x4x16xf32> to vector<4x16xf32>
    %c0_54 = arith.constant 0 : index
    %c112 = arith.constant 112 : index
    %23 = vector.load %arg6[%c0_54, %c112] : memref<16x144xf32, #tpu.memory_space<vmem>>, vector<4x16xf32>
    tpu.vector_store %arg6[%c0_54, %c112], %22 {strides = array<i32>} : memref<16x144xf32, #tpu.memory_space<vmem>>, vector<4x16xf32>,
    %c0_55 = arith.constant 0 : index
    %c0_56 = arith.constant 0 : index
    %c0_57 = arith.constant 0 : index
    %c1_58 = arith.constant 1 : index
    %c1_59 = arith.constant 1 : index
    %c0_60 = arith.constant 0 : index
    %24 = vector.load %arg1[%c0_55, %c0_56, %c0_57, %c1_58, %c1_59, %c0_60] : memref<1x2x2x5x5x16xf32, #tpu.memory_space<vmem>>, vector<1x1x1x1x4x16xf32>
    %25 = vector.shape_cast %24 : vector<1x1x1x1x4x16xf32> to vector<4x16xf32>
    %c0_61 = arith.constant 0 : index
    %c128 = arith.constant 128 : index
    %26 = vector.load %arg6[%c0_61, %c128] : memref<16x144xf32, #tpu.memory_space<vmem>>, vector<4x16xf32>
    tpu.vector_store %arg6[%c0_61, %c128], %25 {strides = array<i32>} : memref<16x144xf32, #tpu.memory_space<vmem>>, vector<4x16xf32>,
    %c0_62 = arith.constant 0 : index
    %c0_63 = arith.constant 0 : index
    %c0_64 = arith.constant 0 : index
    %c1_65 = arith.constant 1 : index
    %c0_66 = arith.constant 0 : index
    %c0_67 = arith.constant 0 : index
    %27 = vector.load %arg1[%c0_62, %c0_63, %c0_64, %c1_65, %c0_66, %c0_67] : memref<1x2x2x5x5x16xf32, #tpu.memory_space<vmem>>, vector<1x1x1x1x4x16xf32>
    %28 = vector.shape_cast %27 : vector<1x1x1x1x4x16xf32> to vector<4x16xf32>
    %c4 = arith.constant 4 : index
    %c0_68 = arith.constant 0 : index
    %29 = vector.load %arg6[%c4, %c0_68] : memref<16x144xf32, #tpu.memory_space<vmem>>, vector<4x16xf32>
    tpu.vector_store %arg6[%c4, %c0_68], %28 {strides = array<i32>} : memref<16x144xf32, #tpu.memory_space<vmem>>, vector<4x16xf32>,
    %c0_69 = arith.constant 0 : index
    %c0_70 = arith.constant 0 : index
    %c1_71 = arith.constant 1 : index
    %c1_72 = arith.constant 1 : index
    %c0_73 = arith.constant 0 : index
    %c0_74 = arith.constant 0 : index
    %30 = vector.load %arg1[%c0_69, %c0_70, %c1_71, %c1_72, %c0_73, %c0_74] : memref<1x2x2x5x5x16xf32, #tpu.memory_space<vmem>>, vector<1x1x1x1x4x16xf32>
    %31 = vector.shape_cast %30 : vector<1x1x1x1x4x16xf32> to vector<4x16xf32>
    %c4_75 = arith.constant 4 : index
    %c16_76 = arith.constant 16 : index
    %32 = vector.load %arg6[%c4_75, %c16_76] : memref<16x144xf32, #tpu.memory_space<vmem>>, vector<4x16xf32>
    tpu.vector_store %arg6[%c4_75, %c16_76], %31 {strides = array<i32>} : memref<16x144xf32, #tpu.memory_space<vmem>>, vector<4x16xf32>,
    %c0_77 = arith.constant 0 : index
    %c0_78 = arith.constant 0 : index
    %c0_79 = arith.constant 0 : index
    %c1_80 = arith.constant 1 : index
    %c1_81 = arith.constant 1 : index
    %c0_82 = arith.constant 0 : index
    %33 = vector.load %arg1[%c0_77, %c0_78, %c0_79, %c1_80, %c1_81, %c0_82] : memref<1x2x2x5x5x16xf32, #tpu.memory_space<vmem>>, vector<1x1x1x1x4x16xf32>
    %34 = vector.shape_cast %33 : vector<1x1x1x1x4x16xf32> to vector<4x16xf32>
    %c4_83 = arith.constant 4 : index
    %c32_84 = arith.constant 32 : index
    %35 = vector.load %arg6[%c4_83, %c32_84] : memref<16x144xf32, #tpu.memory_space<vmem>>, vector<4x16xf32>
    tpu.vector_store %arg6[%c4_83, %c32_84], %34 {strides = array<i32>} : memref<16x144xf32, #tpu.memory_space<vmem>>, vector<4x16xf32>,
    %c0_85 = arith.constant 0 : index
    %c1_86 = arith.constant 1 : index
    %c0_87 = arith.constant 0 : index
    %c1_88 = arith.constant 1 : index
    %c0_89 = arith.constant 0 : index
    %c0_90 = arith.constant 0 : index
    %36 = vector.load %arg1[%c0_85, %c1_86, %c0_87, %c1_88, %c0_89, %c0_90] : memref<1x2x2x5x5x16xf32, #tpu.memory_space<vmem>>, vector<1x1x1x1x4x16xf32>
    %37 = vector.shape_cast %36 : vector<1x1x1x1x4x16xf32> to vector<4x16xf32>
    %c4_91 = arith.constant 4 : index
    %c48_92 = arith.constant 48 : index
    %38 = vector.load %arg6[%c4_91, %c48_92] : memref<16x144xf32, #tpu.memory_space<vmem>>, vector<4x16xf32>
    tpu.vector_store %arg6[%c4_91, %c48_92], %37 {strides = array<i32>} : memref<16x144xf32, #tpu.memory_space<vmem>>, vector<4x16xf32>,
    %c0_93 = arith.constant 0 : index
    %c1_94 = arith.constant 1 : index
    %c1_95 = arith.constant 1 : index
    %c1_96 = arith.constant 1 : index
    %c0_97 = arith.constant 0 : index
    %c0_98 = arith.constant 0 : index
    %39 = vector.load %arg1[%c0_93, %c1_94, %c1_95, %c1_96, %c0_97, %c0_98] : memref<1x2x2x5x5x16xf32, #tpu.memory_space<vmem>>, vector<1x1x1x1x4x16xf32>
    %40 = vector.shape_cast %39 : vector<1x1x1x1x4x16xf32> to vector<4x16xf32>
    %c4_99 = arith.constant 4 : index
    %c64_100 = arith.constant 64 : index
    %41 = vector.load %arg6[%c4_99, %c64_100] : memref<16x144xf32, #tpu.memory_space<vmem>>, vector<4x16xf32>
    tpu.vector_store %arg6[%c4_99, %c64_100], %40 {strides = array<i32>} : memref<16x144xf32, #tpu.memory_space<vmem>>, vector<4x16xf32>,
    %c0_101 = arith.constant 0 : index
    %c1_102 = arith.constant 1 : index
    %c0_103 = arith.constant 0 : index
    %c1_104 = arith.constant 1 : index
    %c1_105 = arith.constant 1 : index
    %c0_106 = arith.constant 0 : index
    %42 = vector.load %arg1[%c0_101, %c1_102, %c0_103, %c1_104, %c1_105, %c0_106] : memref<1x2x2x5x5x16xf32, #tpu.memory_space<vmem>>, vector<1x1x1x1x4x16xf32>
    %43 = vector.shape_cast %42 : vector<1x1x1x1x4x16xf32> to vector<4x16xf32>
    %c4_107 = arith.constant 4 : index
    %c80_108 = arith.constant 80 : index
    %44 = vector.load %arg6[%c4_107, %c80_108] : memref<16x144xf32, #tpu.memory_space<vmem>>, vector<4x16xf32>
    tpu.vector_store %arg6[%c4_107, %c80_108], %43 {strides = array<i32>} : memref<16x144xf32, #tpu.memory_space<vmem>>, vector<4x16xf32>,
    %c0_109 = arith.constant 0 : index
    %c0_110 = arith.constant 0 : index
    %c0_111 = arith.constant 0 : index
    %c2 = arith.constant 2 : index
    %c0_112 = arith.constant 0 : index
    %c0_113 = arith.constant 0 : index
    %45 = vector.load %arg1[%c0_109, %c0_110, %c0_111, %c2, %c0_112, %c0_113] : memref<1x2x2x5x5x16xf32, #tpu.memory_space<vmem>>, vector<1x1x1x1x4x16xf32>
    %46 = vector.shape_cast %45 : vector<1x1x1x1x4x16xf32> to vector<4x16xf32>
    %c4_114 = arith.constant 4 : index
    %c96_115 = arith.constant 96 : index
    %47 = vector.load %arg6[%c4_114, %c96_115] : memref<16x144xf32, #tpu.memory_space<vmem>>, vector<4x16xf32>
    tpu.vector_store %arg6[%c4_114, %c96_115], %46 {strides = array<i32>} : memref<16x144xf32, #tpu.memory_space<vmem>>, vector<4x16xf32>,
    %c0_116 = arith.constant 0 : index
    %c0_117 = arith.constant 0 : index
    %c1_118 = arith.constant 1 : index
    %c2_119 = arith.constant 2 : index
    %c0_120 = arith.constant 0 : index
    %c0_121 = arith.constant 0 : index
    %48 = vector.load %arg1[%c0_116, %c0_117, %c1_118, %c2_119, %c0_120, %c0_121] : memref<1x2x2x5x5x16xf32, #tpu.memory_space<vmem>>, vector<1x1x1x1x4x16xf32>
    %49 = vector.shape_cast %48 : vector<1x1x1x1x4x16xf32> to vector<4x16xf32>
    %c4_122 = arith.constant 4 : index
    %c112_123 = arith.constant 112 : index
    %50 = vector.load %arg6[%c4_122, %c112_123] : memref<16x144xf32, #tpu.memory_space<vmem>>, vector<4x16xf32>
    tpu.vector_store %arg6[%c4_122, %c112_123], %49 {strides = array<i32>} : memref<16x144xf32, #tpu.memory_space<vmem>>, vector<4x16xf32>,
    %c0_124 = arith.constant 0 : index
    %c0_125 = arith.constant 0 : index
    %c0_126 = arith.constant 0 : index
    %c2_127 = arith.constant 2 : index
    %c1_128 = arith.constant 1 : index
    %c0_129 = arith.constant 0 : index
    %51 = vector.load %arg1[%c0_124, %c0_125, %c0_126, %c2_127, %c1_128, %c0_129] : memref<1x2x2x5x5x16xf32, #tpu.memory_space<vmem>>, vector<1x1x1x1x4x16xf32>
    %52 = vector.shape_cast %51 : vector<1x1x1x1x4x16xf32> to vector<4x16xf32>
    %c4_130 = arith.constant 4 : index
    %c128_131 = arith.constant 128 : index
    %53 = vector.load %arg6[%c4_130, %c128_131] : memref<16x144xf32, #tpu.memory_space<vmem>>, vector<4x16xf32>
    tpu.vector_store %arg6[%c4_130, %c128_131], %52 {strides = array<i32>} : memref<16x144xf32, #tpu.memory_space<vmem>>, vector<4x16xf32>,
    %c0_132 = arith.constant 0 : index
    %c0_133 = arith.constant 0 : index
    %c0_134 = arith.constant 0 : index
    %c2_135 = arith.constant 2 : index
    %c0_136 = arith.constant 0 : index
    %c0_137 = arith.constant 0 : index
    %54 = vector.load %arg1[%c0_132, %c0_133, %c0_134, %c2_135, %c0_136, %c0_137] : memref<1x2x2x5x5x16xf32, #tpu.memory_space<vmem>>, vector<1x1x1x1x4x16xf32>
    %55 = vector.shape_cast %54 : vector<1x1x1x1x4x16xf32> to vector<4x16xf32>
    %c8 = arith.constant 8 : index
    %c0_138 = arith.constant 0 : index
    %56 = vector.load %arg6[%c8, %c0_138] : memref<16x144xf32, #tpu.memory_space<vmem>>, vector<4x16xf32>
    tpu.vector_store %arg6[%c8, %c0_138], %55 {strides = array<i32>} : memref<16x144xf32, #tpu.memory_space<vmem>>, vector<4x16xf32>,
    %c0_139 = arith.constant 0 : index
    %c0_140 = arith.constant 0 : index
    %c1_141 = arith.constant 1 : index
    %c2_142 = arith.constant 2 : index
    %c0_143 = arith.constant 0 : index
    %c0_144 = arith.constant 0 : index
    %57 = vector.load %arg1[%c0_139, %c0_140, %c1_141, %c2_142, %c0_143, %c0_144] : memref<1x2x2x5x5x16xf32, #tpu.memory_space<vmem>>, vector<1x1x1x1x4x16xf32>
    %58 = vector.shape_cast %57 : vector<1x1x1x1x4x16xf32> to vector<4x16xf32>
    %c8_145 = arith.constant 8 : index
    %c16_146 = arith.constant 16 : index
    %59 = vector.load %arg6[%c8_145, %c16_146] : memref<16x144xf32, #tpu.memory_space<vmem>>, vector<4x16xf32>
    tpu.vector_store %arg6[%c8_145, %c16_146], %58 {strides = array<i32>} : memref<16x144xf32, #tpu.memory_space<vmem>>, vector<4x16xf32>,
    %c0_147 = arith.constant 0 : index
    %c0_148 = arith.constant 0 : index
    %c0_149 = arith.constant 0 : index
    %c2_150 = arith.constant 2 : index
    %c1_151 = arith.constant 1 : index
    %c0_152 = arith.constant 0 : index
    %60 = vector.load %arg1[%c0_147, %c0_148, %c0_149, %c2_150, %c1_151, %c0_152] : memref<1x2x2x5x5x16xf32, #tpu.memory_space<vmem>>, vector<1x1x1x1x4x16xf32>
    %61 = vector.shape_cast %60 : vector<1x1x1x1x4x16xf32> to vector<4x16xf32>
    %c8_153 = arith.constant 8 : index
    %c32_154 = arith.constant 32 : index
    %62 = vector.load %arg6[%c8_153, %c32_154] : memref<16x144xf32, #tpu.memory_space<vmem>>, vector<4x16xf32>
    tpu.vector_store %arg6[%c8_153, %c32_154], %61 {strides = array<i32>} : memref<16x144xf32, #tpu.memory_space<vmem>>, vector<4x16xf32>,
    %c0_155 = arith.constant 0 : index
    %c1_156 = arith.constant 1 : index
    %c0_157 = arith.constant 0 : index
    %c2_158 = arith.constant 2 : index
    %c0_159 = arith.constant 0 : index
    %c0_160 = arith.constant 0 : index
    %63 = vector.load %arg1[%c0_155, %c1_156, %c0_157, %c2_158, %c0_159, %c0_160] : memref<1x2x2x5x5x16xf32, #tpu.memory_space<vmem>>, vector<1x1x1x1x4x16xf32>
    %64 = vector.shape_cast %63 : vector<1x1x1x1x4x16xf32> to vector<4x16xf32>
    %c8_161 = arith.constant 8 : index
    %c48_162 = arith.constant 48 : index
    %65 = vector.load %arg6[%c8_161, %c48_162] : memref<16x144xf32, #tpu.memory_space<vmem>>, vector<4x16xf32>
    tpu.vector_store %arg6[%c8_161, %c48_162], %64 {strides = array<i32>} : memref<16x144xf32, #tpu.memory_space<vmem>>, vector<4x16xf32>,
    %c0_163 = arith.constant 0 : index
    %c1_164 = arith.constant 1 : index
    %c1_165 = arith.constant 1 : index
    %c2_166 = arith.constant 2 : index
    %c0_167 = arith.constant 0 : index
    %c0_168 = arith.constant 0 : index
    %66 = vector.load %arg1[%c0_163, %c1_164, %c1_165, %c2_166, %c0_167, %c0_168] : memref<1x2x2x5x5x16xf32, #tpu.memory_space<vmem>>, vector<1x1x1x1x4x16xf32>
    %67 = vector.shape_cast %66 : vector<1x1x1x1x4x16xf32> to vector<4x16xf32>
    %c8_169 = arith.constant 8 : index
    %c64_170 = arith.constant 64 : index
    %68 = vector.load %arg6[%c8_169, %c64_170] : memref<16x144xf32, #tpu.memory_space<vmem>>, vector<4x16xf32>
    tpu.vector_store %arg6[%c8_169, %c64_170], %67 {strides = array<i32>} : memref<16x144xf32, #tpu.memory_space<vmem>>, vector<4x16xf32>,
    %c0_171 = arith.constant 0 : index
    %c1_172 = arith.constant 1 : index
    %c0_173 = arith.constant 0 : index
    %c2_174 = arith.constant 2 : index
    %c1_175 = arith.constant 1 : index
    %c0_176 = arith.constant 0 : index
    %69 = vector.load %arg1[%c0_171, %c1_172, %c0_173, %c2_174, %c1_175, %c0_176] : memref<1x2x2x5x5x16xf32, #tpu.memory_space<vmem>>, vector<1x1x1x1x4x16xf32>
    %70 = vector.shape_cast %69 : vector<1x1x1x1x4x16xf32> to vector<4x16xf32>
    %c8_177 = arith.constant 8 : index
    %c80_178 = arith.constant 80 : index
    %71 = vector.load %arg6[%c8_177, %c80_178] : memref<16x144xf32, #tpu.memory_space<vmem>>, vector<4x16xf32>
    tpu.vector_store %arg6[%c8_177, %c80_178], %70 {strides = array<i32>} : memref<16x144xf32, #tpu.memory_space<vmem>>, vector<4x16xf32>,
    %c0_179 = arith.constant 0 : index
    %c0_180 = arith.constant 0 : index
    %c0_181 = arith.constant 0 : index
    %c3 = arith.constant 3 : index
    %c0_182 = arith.constant 0 : index
    %c0_183 = arith.constant 0 : index
    %72 = vector.load %arg1[%c0_179, %c0_180, %c0_181, %c3, %c0_182, %c0_183] : memref<1x2x2x5x5x16xf32, #tpu.memory_space<vmem>>, vector<1x1x1x1x4x16xf32>
    %73 = vector.shape_cast %72 : vector<1x1x1x1x4x16xf32> to vector<4x16xf32>
    %c8_184 = arith.constant 8 : index
    %c96_185 = arith.constant 96 : index
    %74 = vector.load %arg6[%c8_184, %c96_185] : memref<16x144xf32, #tpu.memory_space<vmem>>, vector<4x16xf32>
    tpu.vector_store %arg6[%c8_184, %c96_185], %73 {strides = array<i32>} : memref<16x144xf32, #tpu.memory_space<vmem>>, vector<4x16xf32>,
    %c0_186 = arith.constant 0 : index
    %c0_187 = arith.constant 0 : index
    %c1_188 = arith.constant 1 : index
    %c3_189 = arith.constant 3 : index
    %c0_190 = arith.constant 0 : index
    %c0_191 = arith.constant 0 : index
    %75 = vector.load %arg1[%c0_186, %c0_187, %c1_188, %c3_189, %c0_190, %c0_191] : memref<1x2x2x5x5x16xf32, #tpu.memory_space<vmem>>, vector<1x1x1x1x4x16xf32>
    %76 = vector.shape_cast %75 : vector<1x1x1x1x4x16xf32> to vector<4x16xf32>
    %c8_192 = arith.constant 8 : index
    %c112_193 = arith.constant 112 : index
    %77 = vector.load %arg6[%c8_192, %c112_193] : memref<16x144xf32, #tpu.memory_space<vmem>>, vector<4x16xf32>
    tpu.vector_store %arg6[%c8_192, %c112_193], %76 {strides = array<i32>} : memref<16x144xf32, #tpu.memory_space<vmem>>, vector<4x16xf32>,
    %c0_194 = arith.constant 0 : index
    %c0_195 = arith.constant 0 : index
    %c0_196 = arith.constant 0 : index
    %c3_197 = arith.constant 3 : index
    %c1_198 = arith.constant 1 : index
    %c0_199 = arith.constant 0 : index
    %78 = vector.load %arg1[%c0_194, %c0_195, %c0_196, %c3_197, %c1_198, %c0_199] : memref<1x2x2x5x5x16xf32, #tpu.memory_space<vmem>>, vector<1x1x1x1x4x16xf32>
    %79 = vector.shape_cast %78 : vector<1x1x1x1x4x16xf32> to vector<4x16xf32>
    %c8_200 = arith.constant 8 : index
    %c128_201 = arith.constant 128 : index
    %80 = vector.load %arg6[%c8_200, %c128_201] : memref<16x144xf32, #tpu.memory_space<vmem>>, vector<4x16xf32>
    tpu.vector_store %arg6[%c8_200, %c128_201], %79 {strides = array<i32>} : memref<16x144xf32, #tpu.memory_space<vmem>>, vector<4x16xf32>,
    %c0_202 = arith.constant 0 : index
    %c0_203 = arith.constant 0 : index
    %c0_204 = arith.constant 0 : index
    %c3_205 = arith.constant 3 : index
    %c0_206 = arith.constant 0 : index
    %c0_207 = arith.constant 0 : index
    %81 = vector.load %arg1[%c0_202, %c0_203, %c0_204, %c3_205, %c0_206, %c0_207] : memref<1x2x2x5x5x16xf32, #tpu.memory_space<vmem>>, vector<1x1x1x1x4x16xf32>
    %82 = vector.shape_cast %81 : vector<1x1x1x1x4x16xf32> to vector<4x16xf32>
    %c12 = arith.constant 12 : index
    %c0_208 = arith.constant 0 : index
    %83 = vector.load %arg6[%c12, %c0_208] : memref<16x144xf32, #tpu.memory_space<vmem>>, vector<4x16xf32>
    tpu.vector_store %arg6[%c12, %c0_208], %82 {strides = array<i32>} : memref<16x144xf32, #tpu.memory_space<vmem>>, vector<4x16xf32>,
    %c0_209 = arith.constant 0 : index
    %c0_210 = arith.constant 0 : index
    %c1_211 = arith.constant 1 : index
    %c3_212 = arith.constant 3 : index
    %c0_213 = arith.constant 0 : index
    %c0_214 = arith.constant 0 : index
    %84 = vector.load %arg1[%c0_209, %c0_210, %c1_211, %c3_212, %c0_213, %c0_214] : memref<1x2x2x5x5x16xf32, #tpu.memory_space<vmem>>, vector<1x1x1x1x4x16xf32>
    %85 = vector.shape_cast %84 : vector<1x1x1x1x4x16xf32> to vector<4x16xf32>
    %c12_215 = arith.constant 12 : index
    %c16_216 = arith.constant 16 : index
    %86 = vector.load %arg6[%c12_215, %c16_216] : memref<16x144xf32, #tpu.memory_space<vmem>>, vector<4x16xf32>
    tpu.vector_store %arg6[%c12_215, %c16_216], %85 {strides = array<i32>} : memref<16x144xf32, #tpu.memory_space<vmem>>, vector<4x16xf32>,
    %c0_217 = arith.constant 0 : index
    %c0_218 = arith.constant 0 : index
    %c0_219 = arith.constant 0 : index
    %c3_220 = arith.constant 3 : index
    %c1_221 = arith.constant 1 : index
    %c0_222 = arith.constant 0 : index
    %87 = vector.load %arg1[%c0_217, %c0_218, %c0_219, %c3_220, %c1_221, %c0_222] : memref<1x2x2x5x5x16xf32, #tpu.memory_space<vmem>>, vector<1x1x1x1x4x16xf32>
    %88 = vector.shape_cast %87 : vector<1x1x1x1x4x16xf32> to vector<4x16xf32>
    %c12_223 = arith.constant 12 : index
    %c32_224 = arith.constant 32 : index
    %89 = vector.load %arg6[%c12_223, %c32_224] : memref<16x144xf32, #tpu.memory_space<vmem>>, vector<4x16xf32>
    tpu.vector_store %arg6[%c12_223, %c32_224], %88 {strides = array<i32>} : memref<16x144xf32, #tpu.memory_space<vmem>>, vector<4x16xf32>,
    %c0_225 = arith.constant 0 : index
    %c1_226 = arith.constant 1 : index
    %c0_227 = arith.constant 0 : index
    %c3_228 = arith.constant 3 : index
    %c0_229 = arith.constant 0 : index
    %c0_230 = arith.constant 0 : index
    %90 = vector.load %arg1[%c0_225, %c1_226, %c0_227, %c3_228, %c0_229, %c0_230] : memref<1x2x2x5x5x16xf32, #tpu.memory_space<vmem>>, vector<1x1x1x1x4x16xf32>
    %91 = vector.shape_cast %90 : vector<1x1x1x1x4x16xf32> to vector<4x16xf32>
    %c12_231 = arith.constant 12 : index
    %c48_232 = arith.constant 48 : index
    %92 = vector.load %arg6[%c12_231, %c48_232] : memref<16x144xf32, #tpu.memory_space<vmem>>, vector<4x16xf32>
    tpu.vector_store %arg6[%c12_231, %c48_232], %91 {strides = array<i32>} : memref<16x144xf32, #tpu.memory_space<vmem>>, vector<4x16xf32>,
    %c0_233 = arith.constant 0 : index
    %c1_234 = arith.constant 1 : index
    %c1_235 = arith.constant 1 : index
    %c3_236 = arith.constant 3 : index
    %c0_237 = arith.constant 0 : index
    %c0_238 = arith.constant 0 : index
    %93 = vector.load %arg1[%c0_233, %c1_234, %c1_235, %c3_236, %c0_237, %c0_238] : memref<1x2x2x5x5x16xf32, #tpu.memory_space<vmem>>, vector<1x1x1x1x4x16xf32>
    %94 = vector.shape_cast %93 : vector<1x1x1x1x4x16xf32> to vector<4x16xf32>
    %c12_239 = arith.constant 12 : index
    %c64_240 = arith.constant 64 : index
    %95 = vector.load %arg6[%c12_239, %c64_240] : memref<16x144xf32, #tpu.memory_space<vmem>>, vector<4x16xf32>
    tpu.vector_store %arg6[%c12_239, %c64_240], %94 {strides = array<i32>} : memref<16x144xf32, #tpu.memory_space<vmem>>, vector<4x16xf32>,
    %c0_241 = arith.constant 0 : index
    %c1_242 = arith.constant 1 : index
    %c0_243 = arith.constant 0 : index
    %c3_244 = arith.constant 3 : index
    %c1_245 = arith.constant 1 : index
    %c0_246 = arith.constant 0 : index
    %96 = vector.load %arg1[%c0_241, %c1_242, %c0_243, %c3_244, %c1_245, %c0_246] : memref<1x2x2x5x5x16xf32, #tpu.memory_space<vmem>>, vector<1x1x1x1x4x16xf32>
    %97 = vector.shape_cast %96 : vector<1x1x1x1x4x16xf32> to vector<4x16xf32>
    %c12_247 = arith.constant 12 : index
    %c80_248 = arith.constant 80 : index
    %98 = vector.load %arg6[%c12_247, %c80_248] : memref<16x144xf32, #tpu.memory_space<vmem>>, vector<4x16xf32>
    tpu.vector_store %arg6[%c12_247, %c80_248], %97 {strides = array<i32>} : memref<16x144xf32, #tpu.memory_space<vmem>>, vector<4x16xf32>,
    %c0_249 = arith.constant 0 : index
    %c0_250 = arith.constant 0 : index
    %c0_251 = arith.constant 0 : index
    %c4_252 = arith.constant 4 : index
    %c0_253 = arith.constant 0 : index
    %c0_254 = arith.constant 0 : index
    %99 = vector.load %arg1[%c0_249, %c0_250, %c0_251, %c4_252, %c0_253, %c0_254] : memref<1x2x2x5x5x16xf32, #tpu.memory_space<vmem>>, vector<1x1x1x1x4x16xf32>
    %100 = vector.shape_cast %99 : vector<1x1x1x1x4x16xf32> to vector<4x16xf32>
    %c12_255 = arith.constant 12 : index
    %c96_256 = arith.constant 96 : index
    %101 = vector.load %arg6[%c12_255, %c96_256] : memref<16x144xf32, #tpu.memory_space<vmem>>, vector<4x16xf32>
    tpu.vector_store %arg6[%c12_255, %c96_256], %100 {strides = array<i32>} : memref<16x144xf32, #tpu.memory_space<vmem>>, vector<4x16xf32>,
    %c0_257 = arith.constant 0 : index
    %c0_258 = arith.constant 0 : index
    %c1_259 = arith.constant 1 : index
    %c4_260 = arith.constant 4 : index
    %c0_261 = arith.constant 0 : index
    %c0_262 = arith.constant 0 : index
    %102 = vector.load %arg1[%c0_257, %c0_258, %c1_259, %c4_260, %c0_261, %c0_262] : memref<1x2x2x5x5x16xf32, #tpu.memory_space<vmem>>, vector<1x1x1x1x4x16xf32>
    %103 = vector.shape_cast %102 : vector<1x1x1x1x4x16xf32> to vector<4x16xf32>
    %c12_263 = arith.constant 12 : index
    %c112_264 = arith.constant 112 : index
    %104 = vector.load %arg6[%c12_263, %c112_264] : memref<16x144xf32, #tpu.memory_space<vmem>>, vector<4x16xf32>
    tpu.vector_store %arg6[%c12_263, %c112_264], %103 {strides = array<i32>} : memref<16x144xf32, #tpu.memory_space<vmem>>, vector<4x16xf32>,
    %c0_265 = arith.constant 0 : index
    %c0_266 = arith.constant 0 : index
    %c0_267 = arith.constant 0 : index
    %c4_268 = arith.constant 4 : index
    %c1_269 = arith.constant 1 : index
    %c0_270 = arith.constant 0 : index
    %105 = vector.load %arg1[%c0_265, %c0_266, %c0_267, %c4_268, %c1_269, %c0_270] : memref<1x2x2x5x5x16xf32, #tpu.memory_space<vmem>>, vector<1x1x1x1x4x16xf32>
    %106 = vector.shape_cast %105 : vector<1x1x1x1x4x16xf32> to vector<4x16xf32>
    %c12_271 = arith.constant 12 : index
    %c128_272 = arith.constant 128 : index
    %107 = vector.load %arg6[%c12_271, %c128_272] : memref<16x144xf32, #tpu.memory_space<vmem>>, vector<4x16xf32>
    tpu.vector_store %arg6[%c12_271, %c128_272], %106 {strides = array<i32>} : memref<16x144xf32, #tpu.memory_space<vmem>>, vector<4x16xf32>,
    %c0_273 = arith.constant 0 : index
    %c0_274 = arith.constant 0 : index
    %108 = vector.load %arg6[%c0_273, %c0_274] : memref<16x144xf32, #tpu.memory_space<vmem>>, vector<16x144xf32>
    %109 = arith.truncf %108 : vector<16x144xf32> to vector<16x144xbf16>
    %c0_275 = arith.constant 0 : index
    %c0_276 = arith.constant 0 : index
    %110 = vector.load %arg2[%c0_275, %c0_276] : memref<144x384xbf16, #tpu.memory_space<vmem>>, vector<144x384xbf16>
    %cst = arith.constant dense<0.000000e+00> : vector<16x384xf32>
    %111 = tpu.matmul %109, %110, %cst {dimension_numbers = #tpu.dot_dimension_numbers<[1], [0], [0], [1], [0, 0, 1, 1], [], []>} : vector<16x144xbf16>, vector<144x384xbf16>, vector<16x384xf32> -> vector<16x384xf32>
    %112 = arith.truncf %111 : vector<16x384xf32> to vector<16x384xbf16>
    %c0_277 = arith.constant 0 : index
    %c0_278 = arith.constant 0 : index
    %c0_279 = arith.constant 0 : index
    %113 = vector.load %arg3[%c0_277, %c0_278, %c0_279] : memref<1x16x384xbf16, #tpu.memory_space<vmem>>, vector<1x16x384xbf16>
    %114 = vector.shape_cast %113 : vector<1x16x384xbf16> to vector<16x384xbf16>
    %115 = vector.shape_cast %112 : vector<16x384xbf16> to vector<1x16x384xbf16>
    tpu.vector_store %arg3[%c0_277, %c0_278, %c0_279], %115 {strides = array<i32>} : memref<1x16x384xbf16, #tpu.memory_space<vmem>>, vector<1x16x384xbf16>,
    %cst_280 = arith.constant dense<0.000000e+00> : vector<384xf32>
    %116 = vector.multi_reduction <add>, %111, %cst_280 [0] : vector<16x384xf32> to vector<384xf32>
    %117 = vector.shape_cast %116 : vector<384xf32> to vector<1x384xf32>
    %c0_281 = arith.constant 0 : index
    %c0_282 = arith.constant 0 : index
    %c0_283 = arith.constant 0 : index
    %118 = vector.load %arg4[%c0_281, %c0_282, %c0_283] : memref<1x2x384xf32, #tpu.memory_space<vmem>>, vector<1x1x384xf32>
    %119 = vector.shape_cast %118 : vector<1x1x384xf32> to vector<1x384xf32>
    %120 = vector.shape_cast %117 : vector<1x384xf32> to vector<1x1x384xf32>
    tpu.vector_store %arg4[%c0_281, %c0_282, %c0_283], %120 {strides = array<i32>} : memref<1x2x384xf32, #tpu.memory_space<vmem>>, vector<1x1x384xf32>,
    %121 = arith.mulf %111, %111 : vector<16x384xf32>
    %cst_284 = arith.constant dense<0.000000e+00> : vector<384xf32>
    %122 = vector.multi_reduction <add>, %121, %cst_284 [0] : vector<16x384xf32> to vector<384xf32>
    %123 = vector.shape_cast %122 : vector<384xf32> to vector<1x384xf32>
    %c0_285 = arith.constant 0 : index
    %c1_286 = arith.constant 1 : index
    %c0_287 = arith.constant 0 : index
    %124 = vector.load %arg4[%c0_285, %c1_286, %c0_287] : memref<1x2x384xf32, #tpu.memory_space<vmem>>, vector<1x1x384xf32>
    %125 = vector.shape_cast %124 : vector<1x1x384xf32> to vector<1x384xf32>
    %126 = vector.shape_cast %123 : vector<1x384xf32> to vector<1x1x384xf32>
    tpu.vector_store %arg4[%c0_285, %c1_286, %c0_287], %126 {strides = array<i32>} : memref<1x2x384xf32, #tpu.memory_space<vmem>>, vector<1x1x384xf32>,
    %c0_288 = arith.constant 0 : index
    %c0_289 = arith.constant 0 : index
    %c0_290 = arith.constant 0 : index
    %c0_291 = arith.constant 0 : index
    %c0_292 = arith.constant 0 : index
    %c0_293 = arith.constant 0 : index
    %127 = vector.load %arg1[%c0_288, %c0_289, %c0_290, %c0_291, %c0_292, %c0_293] : memref<1x2x2x5x5x16xf32, #tpu.memory_space<vmem>>, vector<1x1x1x4x4x16xf32>
    %128 = vector.shape_cast %127 : vector<1x1x1x4x4x16xf32> to vector<4x4x16xf32>
    %c0_294 = arith.constant 0 : index
    %c0_295 = arith.constant 0 : index
    %c1_296 = arith.constant 1 : index
    %c0_297 = arith.constant 0 : index
    %c0_298 = arith.constant 0 : index
    %c0_299 = arith.constant 0 : index
    %129 = vector.load %arg1[%c0_294, %c0_295, %c1_296, %c0_297, %c0_298, %c0_299] : memref<1x2x2x5x5x16xf32, #tpu.memory_space<vmem>>, vector<1x1x1x4x4x16xf32>
    %130 = vector.shape_cast %129 : vector<1x1x1x4x4x16xf32> to vector<4x4x16xf32>
    %131 = arith.maximumf %128, %130 : vector<4x4x16xf32>
    %c0_300 = arith.constant 0 : index
    %c0_301 = arith.constant 0 : index
    %c0_302 = arith.constant 0 : index
    %c0_303 = arith.constant 0 : index
    %c1_304 = arith.constant 1 : index
    %c0_305 = arith.constant 0 : index
    %132 = vector.load %arg1[%c0_300, %c0_301, %c0_302, %c0_303, %c1_304, %c0_305] : memref<1x2x2x5x5x16xf32, #tpu.memory_space<vmem>>, vector<1x1x1x4x4x16xf32>
    %133 = vector.shape_cast %132 : vector<1x1x1x4x4x16xf32> to vector<4x4x16xf32>
    %134 = arith.maximumf %131, %133 : vector<4x4x16xf32>
    %c0_306 = arith.constant 0 : index
    %c1_307 = arith.constant 1 : index
    %c0_308 = arith.constant 0 : index
    %c0_309 = arith.constant 0 : index
    %c0_310 = arith.constant 0 : index
    %c0_311 = arith.constant 0 : index
    %135 = vector.load %arg1[%c0_306, %c1_307, %c0_308, %c0_309, %c0_310, %c0_311] : memref<1x2x2x5x5x16xf32, #tpu.memory_space<vmem>>, vector<1x1x1x4x4x16xf32>
    %136 = vector.shape_cast %135 : vector<1x1x1x4x4x16xf32> to vector<4x4x16xf32>
    %137 = arith.maximumf %134, %136 : vector<4x4x16xf32>
    %c0_312 = arith.constant 0 : index
    %c1_313 = arith.constant 1 : index
    %c1_314 = arith.constant 1 : index
    %c0_315 = arith.constant 0 : index
    %c0_316 = arith.constant 0 : index
    %c0_317 = arith.constant 0 : index
    %138 = vector.load %arg1[%c0_312, %c1_313, %c1_314, %c0_315, %c0_316, %c0_317] : memref<1x2x2x5x5x16xf32, #tpu.memory_space<vmem>>, vector<1x1x1x4x4x16xf32>
    %139 = vector.shape_cast %138 : vector<1x1x1x4x4x16xf32> to vector<4x4x16xf32>
    %140 = arith.maximumf %137, %139 : vector<4x4x16xf32>
    %c0_318 = arith.constant 0 : index
    %c1_319 = arith.constant 1 : index
    %c0_320 = arith.constant 0 : index
    %c0_321 = arith.constant 0 : index
    %c1_322 = arith.constant 1 : index
    %c0_323 = arith.constant 0 : index
    %141 = vector.load %arg1[%c0_318, %c1_319, %c0_320, %c0_321, %c1_322, %c0_323] : memref<1x2x2x5x5x16xf32, #tpu.memory_space<vmem>>, vector<1x1x1x4x4x16xf32>
    %142 = vector.shape_cast %141 : vector<1x1x1x4x4x16xf32> to vector<4x4x16xf32>
    %143 = arith.maximumf %140, %142 : vector<4x4x16xf32>
    %c0_324 = arith.constant 0 : index
    %c0_325 = arith.constant 0 : index
    %c0_326 = arith.constant 0 : index
    %c1_327 = arith.constant 1 : index
    %c0_328 = arith.constant 0 : index
    %c0_329 = arith.constant 0 : index
    %144 = vector.load %arg1[%c0_324, %c0_325, %c0_326, %c1_327, %c0_328, %c0_329] : memref<1x2x2x5x5x16xf32, #tpu.memory_space<vmem>>, vector<1x1x1x4x4x16xf32>
    %145 = vector.shape_cast %144 : vector<1x1x1x4x4x16xf32> to vector<4x4x16xf32>
    %146 = arith.maximumf %143, %145 : vector<4x4x16xf32>
    %c0_330 = arith.constant 0 : index
    %c0_331 = arith.constant 0 : index
    %c1_332 = arith.constant 1 : index
    %c1_333 = arith.constant 1 : index
    %c0_334 = arith.constant 0 : index
    %c0_335 = arith.constant 0 : index
    %147 = vector.load %arg1[%c0_330, %c0_331, %c1_332, %c1_333, %c0_334, %c0_335] : memref<1x2x2x5x5x16xf32, #tpu.memory_space<vmem>>, vector<1x1x1x4x4x16xf32>
    %148 = vector.shape_cast %147 : vector<1x1x1x4x4x16xf32> to vector<4x4x16xf32>
    %149 = arith.maximumf %146, %148 : vector<4x4x16xf32>
    %c0_336 = arith.constant 0 : index
    %c0_337 = arith.constant 0 : index
    %c0_338 = arith.constant 0 : index
    %c1_339 = arith.constant 1 : index
    %c1_340 = arith.constant 1 : index
    %c0_341 = arith.constant 0 : index
    %150 = vector.load %arg1[%c0_336, %c0_337, %c0_338, %c1_339, %c1_340, %c0_341] : memref<1x2x2x5x5x16xf32, #tpu.memory_space<vmem>>, vector<1x1x1x4x4x16xf32>
    %151 = vector.shape_cast %150 : vector<1x1x1x4x4x16xf32> to vector<4x4x16xf32>
    %152 = arith.maximumf %149, %151 : vector<4x4x16xf32>
    %c0_342 = arith.constant 0 : index
    %c0_343 = arith.constant 0 : index
    %c0_344 = arith.constant 0 : index
    %c0_345 = arith.constant 0 : index
    %153 = vector.load %arg5[%c0_342, %c0_343, %c0_344, %c0_345] : memref<1x4x4x16xf32, #tpu.memory_space<vmem>>, vector<1x4x4x16xf32>
    %154 = vector.shape_cast %153 : vector<1x4x4x16xf32> to vector<4x4x16xf32>
    %155 = vector.shape_cast %152 : vector<4x4x16xf32> to vector<1x4x4x16xf32>
    tpu.vector_store %arg5[%c0_342, %c0_343, %c0_344, %c0_345], %155 {strides = array<i32>} : memref<1x4x4x16xf32, #tpu.memory_space<vmem>>, vector<1x4x4x16xf32>,
    return
  }
  func.func @transform_0(%arg0: i32) -> (i32, i32, i32, i32, i32, i32) {
    %c0_i32 = arith.constant 0 : i32
    %c0_i32_0 = arith.constant 0 : i32
    %c0_i32_1 = arith.constant 0 : i32
    %c0_i32_2 = arith.constant 0 : i32
    %c0_i32_3 = arith.constant 0 : i32
    %c0_i32_4 = arith.constant 0 : i32
    return %arg0, %c0_i32, %c0_i32_0, %c0_i32_1, %c0_i32_2, %c0_i32_3 : i32, i32, i32, i32, i32, i32
  }
  func.func @transform_1(%arg0: i32) -> (i32, i32) {
    %c0_i32 = arith.constant 0 : i32
    %c0_i32_0 = arith.constant 0 : i32
    %c0_i32_1 = arith.constant 0 : i32
    return %c0_i32, %c0_i32_0 : i32, i32
  }
  func.func @transform_2(%arg0: i32) -> (i32, i32, i32) {
    %c0_i32 = arith.constant 0 : i32
    %c0_i32_0 = arith.constant 0 : i32
    %c0_i32_1 = arith.constant 0 : i32
    return %arg0, %c0_i32, %c0_i32_0 : i32, i32, i32
  }
  func.func @transform_3(%arg0: i32) -> (i32, i32, i32) {
    %c0_i32 = arith.constant 0 : i32
    %c0_i32_0 = arith.constant 0 : i32
    %c0_i32_1 = arith.constant 0 : i32
    return %arg0, %c0_i32, %c0_i32_0 : i32, i32, i32
  }
  func.func @transform_4(%arg0: i32) -> (i32, i32, i32, i32) {
    %c0_i32 = arith.constant 0 : i32
    %c0_i32_0 = arith.constant 0 : i32
    %c0_i32_1 = arith.constant 0 : i32
    %c0_i32_2 = arith.constant 0 : i32
    return %arg0, %c0_i32, %c0_i32_0, %c0_i32_1 : i32, i32, i32, i32
  }
}

</mosaic_0001>

<llo_original>
// kernel: incept_b_forward.6
$region0: #{incept_b_forward.6}
  #allocation0 [shape = 'u32[]', space=smem, size = 0x4, offset = 0x4, fixed_abs, tag = 'smem constant byte address 0x4 - core index']
  #allocation1 [shape = 'u32[144,128]{1,0:T(1,128)}', space=vmem, size = 0x12000, scoped, tag = 'internal scratch']
  %s0 = inlined_call_operand.vmem [shape: bf16[168,16], index: 0, kind: input, shape index: {}]
  %s1 = inlined_call_operand.vmem [shape: bf16[16,128], index: 1, kind: input, shape index: {}]
  %s2 = inlined_call_operand.vmem [shape: bf16[168,128], index: 2, kind: output, shape index: {0}]
  %s3 = inlined_call_operand.vmem [shape: f32[1,2,128], index: 3, kind: output, shape index: {1}]
  %4 = xla_tuple %s2, %s3
  %s5 = sld [smem:[#allocation0]]
  $region26: #{incept_b_forward.6} parent=0
    _
  %s7 = ssub.s32 1, %s5
  %s8 = scalar_select 0, %s7, %s5
  // Predicated region
  $region2: #{incept_b_forward.6} parent=0 // pred_check
    _
  $region3: #{incept_b_forward.6} parent=0 // pred_check_branch
    %10 = sbr.rel (0) target = $region5
  $region4: #{incept_b_forward.6} parent=0 // pred_region
    _
  $region5: #{incept_b_forward.6} parent=0 // pred_fallthru
    _
  // Predicated region
  $region6: #{incept_b_forward.6} parent=0 // pred_check
    _
  $region7: #{incept_b_forward.6} parent=0 // pred_check_branch
    %12 = sbr.rel (0) target = $region9
  $region8: #{incept_b_forward.6} parent=0 // pred_region
    _
  $region9: #{incept_b_forward.6} parent=0 // pred_fallthru
    _
  %v14 = vld [vmem:[%s0] sm:$0xf]
  %v15 = vld [vmem:[%s0 + $0x4] sm:$0xf]
  %v16 = vld [vmem:[%s0 + $0x8] sm:$0xf]
  %v17 = vld [vmem:[%s0 + $0xc] sm:$0xf]
  %v18 = vld [vmem:[%s0 + $0x10] sm:$0xf]
  %v19 = vld [vmem:[%s0 + $0x14] sm:$0xf]
  %v20 = vld [vmem:[%s0 + $0x18] sm:$0xf]
  %v21 = vld [vmem:[%s0 + $0x1c] sm:$0xf]
  %v22 = vld [vmem:[%s0 + $0x20] sm:$0xf]
  %v23 = vld [vmem:[%s0 + $0x24] sm:$0xf]
  %v24 = vld [vmem:[%s0 + $0x28] sm:$0xf]
  %v25 = vld [vmem:[%s0 + $0x2c] sm:$0xf]
  %v26 = vld [vmem:[%s0 + $0x30] sm:$0xf]
  %v27 = vld [vmem:[%s0 + $0x34] sm:$0xf]
  %v28 = vld [vmem:[%s0 + $0x38] sm:$0xf]
  %v29 = vld [vmem:[%s0 + $0x3c] sm:$0xf]
  %v30 = vld [vmem:[%s0 + $0x40] sm:$0xf]
  %v31 = vld [vmem:[%s0 + $0x44] sm:$0xf]
  %v32 = vld [vmem:[%s0 + $0x48] sm:$0xf]
  %v33 = vld [vmem:[%s0 + $0x4c] sm:$0xf]
  %v34 = vld [vmem:[%s0 + $0x50] sm:$0xf]
  %v35 = vld [vmem:[%s1] sm:$0xf]
  %v36 = vld [vmem:[%s1 + $0x4] sm:$0xf]
  %v58 = vunpack.c.l.b16 %v14
  %v59 = vunpack.c.l.b16 %v15
  %v60 = vunpack.c.l.b16 %v16
  %v61 = vunpack.c.l.b16 %v17
  %v62 = vunpack.c.l.b16 %v18
  %v63 = vunpack.c.l.b16 %v19
  %v64 = vunpack.c.l.b16 %v20
  %v65 = vunpack.c.l.b16 %v21
  %v66 = vunpack.c.l.b16 %v22
  %v67 = vunpack.c.l.b16 %v23
  %v68 = vunpack.c.l.b16 %v24
  %v69 = vunpack.c.l.b16 %v25
  %v70 = vunpack.c.l.b16 %v26
  %v71 = vunpack.c.l.b16 %v27
  %v72 = vunpack.c.l.b16 %v28
  %v73 = vunpack.c.l.b16 %v29
  %v74 = vunpack.c.l.b16 %v30
  %v75 = vunpack.c.l.b16 %v31
  %v76 = vunpack.c.l.b16 %v32
  %v77 = vunpack.c.l.b16 %v33
  %v78 = vunpack.c.l.b16 %v34
  %v79 = vpack.c.b16 %v59, %v58
  %v80 = vpack.c.b16 %v61, %v60
  %v81 = vpack.c.b16 %v63, %v62
  %v82 = vpack.c.b16 %v65, %v64
  %v83 = vpack.c.b16 %v67, %v66
  %v84 = vpack.c.b16 %v69, %v68
  %v85 = vpack.c.b16 %v71, %v70
  %v86 = vpack.c.b16 %v73, %v72
  %v87 = vpack.c.b16 %v75, %v74
  %v88 = vpack.c.b16 %v77, %v76
  %v89 = vpack.c.b16 %v78, %v78
  %v92 = vunpack.c.l.b16 %v35
  %v93 = vunpack.c.l.b16 %v36
  %v94 = vpack.c.b16 %v93, %v92
  %vm96 = vcmask 130048
  %v98 = vsel %vm96, %v79, 0
  %v101 = vsel %vm96, %v80, 0
  %v104 = vsel %vm96, %v81, 0
  %v107 = vsel %vm96, %v82, 0
  %v110 = vsel %vm96, %v83, 0
  %v113 = vsel %vm96, %v84, 0
  %v116 = vsel %vm96, %v85, 0
  %v119 = vsel %vm96, %v86, 0
  %v122 = vsel %vm96, %v87, 0
  %v125 = vsel %vm96, %v88, 0
  %v128 = vsel %vm96, %v89, 0
  %130 = vmatprep.subr.bf16.mxu0 0
  %131 = vmatpush1.bf16.msra.mxu0 0
  %132 = vmatprep.subr.bf16.mxu0 0
  %133 = vmatpush1.bf16.msra.mxu0 0
  %134 = vmatprep.subr.bf16.mxu0 0
  %135 = vmatpush1.bf16.msra.mxu0 0
  %136 = vmatprep.subr.bf16.mxu0 0
  %137 = vmatpush1.bf16.msra.mxu0 0
  %138 = vmatprep.subr.bf16.mxu0 0
  %139 = vmatpush1.bf16.msra.mxu0 0
  %140 = vmatprep.subr.bf16.mxu0 0
  %141 = vmatpush1.bf16.msra.mxu0 0
  %142 = vmatprep.subr.bf16.mxu0 0
  %143 = vmatpush1.bf16.msra.mxu0 0
  %144 = vmatprep.subr.bf16.mxu0 0
  %145 = vmatpush1.bf16.msra.mxu0 %v94
  %146 = vmatprep.subr.bf16.mxu0 0
  %147 = vmatpush2.bf16.msra.mxu0 0
  %148 = vmatprep.subr.bf16.mxu0 0
  %149 = vmatpush2.bf16.msra.mxu0 0
  %150 = vmatprep.subr.bf16.mxu0 0
  %151 = vmatpush2.bf16.msra.mxu0 0
  %152 = vmatprep.subr.bf16.mxu0 0
  %153 = vmatpush2.bf16.msra.mxu0 0
  %154 = vmatprep.subr.bf16.mxu0 0
  %155 = vmatpush2.bf16.msra.mxu0 0
  %156 = vmatprep.subr.bf16.mxu0 0
  %157 = vmatpush2.bf16.msra.mxu0 0
  %158 = vmatprep.subr.bf16.mxu0 0
  %159 = vmatpush2.bf16.msra.mxu0 0
  %160 = vmatprep.subr.bf16.mxu0 0
  %161 = vmatpush2.bf16.msra.mxu0 0
  %162 = vmatprep.mubr.bf16.mxu0 0
  %163 = vmatmul.mubr.bf16.gmra.mxu0 %v98
  %v164 = vpop.f32.mrf.mxu0
  %v165 = vadd.f32 0.0, %v164
  %v166 = vpop.f32.mrf.mxu0
  %v167 = vpop.f32.mrf.mxu0
  %v168 = vadd.f32 0.0, %v167
  %v169 = vpop.f32.mrf.mxu0
  %170 = vmatprep.mubr.bf16.mxu0 0
  %171 = vmatmul.mubr.bf16.gmra.mxu0 %v101
  %v172 = vpop.f32.mrf.mxu0
  %v173 = vadd.f32 0.0, %v172
  %v174 = vpop.f32.mrf.mxu0
  %v175 = vpop.f32.mrf.mxu0
  %v176 = vadd.f32 0.0, %v175
  %v177 = vpop.f32.mrf.mxu0
  %178 = vmatprep.mubr.bf16.mxu0 0
  %179 = vmatmul.mubr.bf16.gmra.mxu0 %v104
  %v180 = vpop.f32.mrf.mxu0
  %v181 = vadd.f32 0.0, %v180
  %v182 = vpop.f32.mrf.mxu0
  %v183 = vpop.f32.mrf.mxu0
  %v184 = vadd.f32 0.0, %v183
  %v185 = vpop.f32.mrf.mxu0
  %186 = vmatprep.mubr.bf16.mxu0 0
  %187 = vmatmul.mubr.bf16.gmra.mxu0 %v107
  %v188 = vpop.f32.mrf.mxu0
  %v189 = vadd.f32 0.0, %v188
  %v190 = vpop.f32.mrf.mxu0
  %v191 = vpop.f32.mrf.mxu0
  %v192 = vadd.f32 0.0, %v191
  %v193 = vpop.f32.mrf.mxu0
  %194 = vmatprep.mubr.bf16.mxu0 0
  %195 = vmatmul.mubr.bf16.gmra.mxu0 %v110
  %v196 = vpop.f32.mrf.mxu0
  %v197 = vadd.f32 0.0, %v196
  %v198 = vpop.f32.mrf.mxu0
  %v199 = vpop.f32.mrf.mxu0
  %v200 = vadd.f32 0.0, %v199
  %v201 = vpop.f32.mrf.mxu0
  %202 = vmatprep.mubr.bf16.mxu0 0
  %203 = vmatmul.mubr.bf16.gmra.mxu0 %v113
  %v204 = vpop.f32.mrf.mxu0
  %v205 = vadd.f32 0.0, %v204
  %v206 = vpop.f32.mrf.mxu0
  %v207 = vpop.f32.mrf.mxu0
  %v208 = vadd.f32 0.0, %v207
  %v209 = vpop.f32.mrf.mxu0
  %210 = vmatprep.mubr.bf16.mxu0 0
  %211 = vmatmul.mubr.bf16.gmra.mxu0 %v116
  %v212 = vpop.f32.mrf.mxu0
  %v213 = vadd.f32 0.0, %v212
  %v214 = vpop.f32.mrf.mxu0
  %v215 = vpop.f32.mrf.mxu0
  %v216 = vadd.f32 0.0, %v215
  %v217 = vpop.f32.mrf.mxu0
  %218 = vmatprep.mubr.bf16.mxu0 0
  %219 = vmatmul.mubr.bf16.gmra.mxu0 %v119
  %v220 = vpop.f32.mrf.mxu0
  %v221 = vadd.f32 0.0, %v220
  %v222 = vpop.f32.mrf.mxu0
  %v223 = vpop.f32.mrf.mxu0
  %v224 = vadd.f32 0.0, %v223
  %v225 = vpop.f32.mrf.mxu0
  %226 = vmatprep.mubr.bf16.mxu0 0
  %227 = vmatmul.mubr.bf16.gmra.mxu0 %v122
  %v228 = vpop.f32.mrf.mxu0
  %v229 = vadd.f32 0.0, %v228
  %v230 = vpop.f32.mrf.mxu0
  %v231 = vpop.f32.mrf.mxu0
  %v232 = vadd.f32 0.0, %v231
  %v233 = vpop.f32.mrf.mxu0
  %234 = vmatprep.mubr.bf16.mxu0 0
  %235 = vmatmul.mubr.bf16.gmra.mxu0 %v125
  %v236 = vpop.f32.mrf.mxu0
  %v237 = vadd.f32 0.0, %v236
  %v238 = vpop.f32.mrf.mxu0
  %v239 = vpop.f32.mrf.mxu0
  %v240 = vadd.f32 0.0, %v239
  %v241 = vpop.f32.mrf.mxu0
  %242 = vmatprep.mubr.bf16.mxu0 0
  %243 = vmatmul.mubr.bf16.gmra.mxu0 %v128
  %v244 = vpop.f32.mrf.mxu0
  %v245 = vadd.f32 0.0, %v244
  %v246 = vpop.f32.mrf.mxu0
  %v247 = vpop.f32.mrf.mxu0
  %v248 = vpop.f32.mrf.mxu0
  %249 = vdwg.mxu0
  %v250 = vpack.c.bf16 %v168, %v165
  %v251 = vpack.c.bf16 %v176, %v173
  %v252 = vpack.c.bf16 %v184, %v181
  %v253 = vpack.c.bf16 %v192, %v189
  %v254 = vpack.c.bf16 %v200, %v197
  %v255 = vpack.c.bf16 %v208, %v205
  %v256 = vpack.c.bf16 %v216, %v213
  %v257 = vpack.c.bf16 %v224, %v221
  %v258 = vpack.c.bf16 %v232, %v229
  %v259 = vpack.c.bf16 %v240, %v237
  %v260 = vpack.c.bf16 %v245, %v245
  %v272 = vunpack.c.l.b16 %v250
  %v273 = vunpack.c.h.b16 %v250
  %v274 = vunpack.c.l.b16 %v251
  %v275 = vunpack.c.h.b16 %v251
  %v276 = vunpack.c.l.b16 %v252
  %v277 = vunpack.c.h.b16 %v252
  %v278 = vunpack.c.l.b16 %v253
  %v279 = vunpack.c.h.b16 %v253
  %v280 = vunpack.c.l.b16 %v254
  %v281 = vunpack.c.h.b16 %v254
  %v282 = vunpack.c.l.b16 %v255
  %v283 = vunpack.c.h.b16 %v255
  %v284 = vunpack.c.l.b16 %v256
  %v285 = vunpack.c.h.b16 %v256
  %v286 = vunpack.c.l.b16 %v257
  %v287 = vunpack.c.h.b16 %v257
  %v288 = vunpack.c.l.b16 %v258
  %v289 = vunpack.c.h.b16 %v258
  %v290 = vunpack.c.l.b16 %v259
  %v291 = vunpack.c.h.b16 %v259
  %v292 = vunpack.c.l.b16 %v260
  %v293 = vpack.c.b16 %v272, %v272
  %v294 = vpack.c.b16 %v273, %v273
  %v295 = vpack.c.b16 %v274, %v274
  %v296 = vpack.c.b16 %v275, %v275
  %v297 = vpack.c.b16 %v276, %v276
  %v298 = vpack.c.b16 %v277, %v277
  %v299 = vpack.c.b16 %v278, %v278
  %v300 = vpack.c.b16 %v279, %v279
  %v301 = vpack.c.b16 %v280, %v280
  %v302 = vpack.c.b16 %v281, %v281
  %v303 = vpack.c.b16 %v282, %v282
  %v304 = vpack.c.b16 %v283, %v283
  %v305 = vpack.c.b16 %v284, %v284
  %v306 = vpack.c.b16 %v285, %v285
  %v307 = vpack.c.b16 %v286, %v286
  %v308 = vpack.c.b16 %v287, %v287
  %v309 = vpack.c.b16 %v288, %v288
  %v310 = vpack.c.b16 %v289, %v289
  %v311 = vpack.c.b16 %v290, %v290
  %v312 = vpack.c.b16 %v291, %v291
  %v313 = vpack.c.b16 %v292, %v292
  %335 = vst [vmem:[%s2] sm:$0xf] %v293
  %336 = vst [vmem:[%s2 + $0x4] sm:$0xf] %v294
  %337 = vst [vmem:[%s2 + $0x8] sm:$0xf] %v295
  %338 = vst [vmem:[%s2 + $0xc] sm:$0xf] %v296
  %339 = vst [vmem:[%s2 + $0x10] sm:$0xf] %v297
  %340 = vst [vmem:[%s2 + $0x14] sm:$0xf] %v298
  %341 = vst [vmem:[%s2 + $0x18] sm:$0xf] %v299
  %342 = vst [vmem:[%s2 + $0x1c] sm:$0xf] %v300
  %343 = vst [vmem:[%s2 + $0x20] sm:$0xf] %v301
  %344 = vst [vmem:[%s2 + $0x24] sm:$0xf] %v302
  %345 = vst [vmem:[%s2 + $0x28] sm:$0xf] %v303
  %346 = vst [vmem:[%s2 + $0x2c] sm:$0xf] %v304
  %347 = vst [vmem:[%s2 + $0x30] sm:$0xf] %v305
  %348 = vst [vmem:[%s2 + $0x34] sm:$0xf] %v306
  %349 = vst [vmem:[%s2 + $0x38] sm:$0xf] %v307
  %350 = vst [vmem:[%s2 + $0x3c] sm:$0xf] %v308
  %351 = vst [vmem:[%s2 + $0x40] sm:$0xf] %v309
  %352 = vst [vmem:[%s2 + $0x44] sm:$0xf] %v310
  %353 = vst [vmem:[%s2 + $0x48] sm:$0xf] %v311
  %354 = vst [vmem:[%s2 + $0x4c] sm:$0xf] %v312
  %355 = vst [vmem:[%s2 + $0x50] sm:$0xf] %v313
  %v356 = vadd.f32 %v165, %v168
  %v357 = vadd.f32 %v356, %v173
  %v358 = vadd.f32 %v357, %v176
  %v359 = vadd.f32 %v358, %v181
  %v360 = vadd.f32 %v359, %v184
  %v361 = vadd.f32 %v360, %v189
  %v362 = vadd.f32 %v361, %v192
  %v363 = vadd.f32 %v362, %v197
  %v364 = vadd.f32 %v363, %v200
  %v365 = vadd.f32 %v364, %v205
  %v366 = vadd.f32 %v365, %v208
  %v367 = vadd.f32 %v366, %v213
  %v368 = vadd.f32 %v367, %v216
  %v369 = vadd.f32 %v368, %v221
  %v370 = vadd.f32 %v369, %v224
  %v371 = vadd.f32 %v370, %v229
  %v372 = vadd.f32 %v371, %v232
  %v373 = vadd.f32 %v372, %v237
  %v374 = vadd.f32 %v373, %v240
  %v375 = vadd.f32 %v374, %v245
  %v376 = vrot.slane %v375, 4
  %v377 = vadd.f32 %v375, %v376
  %v378 = vrot.slane %v377, 2
  %v379 = vadd.f32 %v377, %v378
  %v380 = vrot.slane %v379, 1
  %v381 = vadd.f32 %v379, %v380
  %382 = vst [vmem:[%s3] sm:$0x1] %v381
  %v383 = vmul.f32 %v165, %v165
  %v384 = vmul.f32 %v168, %v168
  %v385 = vmul.f32 %v173, %v173
  %v386 = vmul.f32 %v176, %v176
  %v387 = vmul.f32 %v181, %v181
  %v388 = vmul.f32 %v184, %v184
  %v389 = vmul.f32 %v189, %v189
  %v390 = vmul.f32 %v192, %v192
  %v391 = vmul.f32 %v197, %v197
  %v392 = vmul.f32 %v200, %v200
  %v393 = vmul.f32 %v205, %v205
  %v394 = vmul.f32 %v208, %v208
  %v395 = vmul.f32 %v213, %v213
  %v396 = vmul.f32 %v216, %v216
  %v397 = vmul.f32 %v221, %v221
  %v398 = vmul.f32 %v224, %v224
  %v399 = vmul.f32 %v229, %v229
  %v400 = vmul.f32 %v232, %v232
  %v401 = vmul.f32 %v237, %v237
  %v402 = vmul.f32 %v240, %v240
  %v403 = vmul.f32 %v245, %v245
  %v404 = vadd.f32 %v383, %v384
  %v405 = vadd.f32 %v404, %v385
  %v406 = vadd.f32 %v405, %v386
  %v407 = vadd.f32 %v406, %v387
  %v408 = vadd.f32 %v407, %v388
  %v409 = vadd.f32 %v408, %v389
  %v410 = vadd.f32 %v409, %v390
  %v411 = vadd.f32 %v410, %v391
  %v412 = vadd.f32 %v411, %v392
  %v413 = vadd.f32 %v412, %v393
  %v414 = vadd.f32 %v413, %v394
  %v415 = vadd.f32 %v414, %v395
  %v416 = vadd.f32 %v415, %v396
  %v417 = vadd.f32 %v416, %v397
  %v418 = vadd.f32 %v417, %v398
  %v419 = vadd.f32 %v418, %v399
  %v420 = vadd.f32 %v419, %v400
  %v421 = vadd.f32 %v420, %v401
  %v422 = vadd.f32 %v421, %v402
  %v423 = vadd.f32 %v422, %v403
  %v424 = vrot.slane %v423, 4
  %v425 = vadd.f32 %v423, %v424
  %v426 = vrot.slane %v425, 2
  %v427 = vadd.f32 %v425, %v426
  %v428 = vrot.slane %v427, 1
  %v429 = vadd.f32 %v427, %v428
  %430 = vst [vmem:[%s3 + $0x1] sm:$0x1] %v429
  // Predicated region
  $region10: #{incept_b_forward.6} parent=0 // pred_check
    _
  $region11: #{incept_b_forward.6} parent=0 // pred_check_branch
    %432 = sbr.rel (0) target = $region13
  $region12: #{incept_b_forward.6} parent=0 // pred_region
    _
  $region13: #{incept_b_forward.6} parent=0 // pred_fallthru
    _
  // Predicated region
  $region14: #{incept_b_forward.6} parent=0 // pred_check
    _
  $region15: #{incept_b_forward.6} parent=0 // pred_check_branch
    %434 = sbr.rel (0) target = $region17
  $region16: #{incept_b_forward.6} parent=0 // pred_region
    _
  $region17: #{incept_b_forward.6} parent=0 // pred_fallthru
    _
  // Predicated region
  $region18: #{incept_b_forward.6} parent=0 // pred_check
    _
  $region19: #{incept_b_forward.6} parent=0 // pred_check_branch
    %436 = sbr.rel (0) target = $region21
  $region20: #{incept_b_forward.6} parent=0 // pred_region
    _
  $region21: #{incept_b_forward.6} parent=0 // pred_fallthru
    _
  // Predicated region
  $region22: #{incept_b_forward.6} parent=0 // pred_check
    _
  $region23: #{incept_b_forward.6} parent=0 // pred_check_branch
    %438 = sbr.rel (0) target = $region25
  $region24: #{incept_b_forward.6} parent=0 // pred_region
    _
  $region25: #{incept_b_forward.6} parent=0 // pred_fallthru
    _

// kernel: incept_b_forward.8
$region0: #{incept_b_forward.8}
  #allocation0 [shape = 'u32[]', space=smem, size = 0x4, offset = 0x4, fixed_abs, tag = 'smem constant byte address 0x4 - core index']
  #allocation1 [shape = 'u32[144,128]{1,0:T(1,128)}', space=vmem, size = 0x12000, scoped, tag = 'internal scratch']
  %s0 = inlined_call_operand.vmem [shape: bf16[32,128], index: 0, kind: input, shape index: {}]
  %s1 = inlined_call_operand.vmem [shape: bf16[128,384], index: 1, kind: input, shape index: {}]
  %s2 = inlined_call_operand.vmem [shape: bf16[32,384], index: 2, kind: output, shape index: {0}]
  %s3 = inlined_call_operand.vmem [shape: f32[1,2,384], index: 3, kind: output, shape index: {1}]
  %4 = xla_tuple %s2, %s3
  %s5 = sld [smem:[#allocation0]]
  $region26: #{incept_b_forward.8} parent=0
    _
  %s7 = ssub.s32 1, %s5
  %s8 = scalar_select 0, %s7, %s5
  // Predicated region
  $region2: #{incept_b_forward.8} parent=0 // pred_check
    _
  $region3: #{incept_b_forward.8} parent=0 // pred_check_branch
    %10 = sbr.rel (0) target = $region5
  $region4: #{incept_b_forward.8} parent=0 // pred_region
    _
  $region5: #{incept_b_forward.8} parent=0 // pred_fallthru
    _
  // Predicated region
  $region6: #{incept_b_forward.8} parent=0 // pred_check
    _
  $region7: #{incept_b_forward.8} parent=0 // pred_check_branch
    %12 = sbr.rel (0) target = $region9
  $region8: #{incept_b_forward.8} parent=0 // pred_region
    _
  $region9: #{incept_b_forward.8} parent=0 // pred_fallthru
    _
  %v14 = vld [vmem:[%s0] sm:$0xf]
  %v15 = vld [vmem:[%s0 + $0x4] sm:$0xf]
  %v16 = vld [vmem:[%s0 + $0x8] sm:$0xf]
  %v17 = vld [vmem:[%s0 + $0xc] sm:$0xf]
  %v18 = vld [vmem:[%s1] sm:$0xff]
  %v19 = vld [vmem:[%s1 + $0x8] sm:$0xf]
  %v20 = vld [vmem:[%s1 + $0xc] sm:$0xff]
  %v21 = vld [vmem:[%s1 + $0x14] sm:$0xf]
  %v22 = vld [vmem:[%s1 + $0x18] sm:$0xff]
  %v23 = vld [vmem:[%s1 + $0x20] sm:$0xf]
  %v24 = vld [vmem:[%s1 + $0x24] sm:$0xff]
  %v25 = vld [vmem:[%s1 + $0x2c] sm:$0xf]
  %v26 = vld [vmem:[%s1 + $0x30] sm:$0xff]
  %v27 = vld [vmem:[%s1 + $0x38] sm:$0xf]
  %v28 = vld [vmem:[%s1 + $0x3c] sm:$0xff]
  %v29 = vld [vmem:[%s1 + $0x44] sm:$0xf]
  %v30 = vld [vmem:[%s1 + $0x48] sm:$0xff]
  %v31 = vld [vmem:[%s1 + $0x50] sm:$0xf]
  %v32 = vld [vmem:[%s1 + $0x54] sm:$0xff]
  %v33 = vld [vmem:[%s1 + $0x5c] sm:$0xf]
  %v34 = vld [vmem:[%s1 + $0x60] sm:$0xff]
  %v35 = vld [vmem:[%s1 + $0x68] sm:$0xf]
  %v36 = vld [vmem:[%s1 + $0x6c] sm:$0xff]
  %v37 = vld [vmem:[%s1 + $0x74] sm:$0xf]
  %v38 = vld [vmem:[%s1 + $0x78] sm:$0xff]
  %v39 = vld [vmem:[%s1 + $0x80] sm:$0xf]
  %v40 = vld [vmem:[%s1 + $0x84] sm:$0xff]
  %v41 = vld [vmem:[%s1 + $0x8c] sm:$0xf]
  %v42 = vld [vmem:[%s1 + $0x90] sm:$0xff]
  %v43 = vld [vmem:[%s1 + $0x98] sm:$0xf]
  %v44 = vld [vmem:[%s1 + $0x9c] sm:$0xff]
  %v45 = vld [vmem:[%s1 + $0xa4] sm:$0xf]
  %v46 = vld [vmem:[%s1 + $0xa8] sm:$0xff]
  %v47 = vld [vmem:[%s1 + $0xb0] sm:$0xf]
  %v48 = vld [vmem:[%s1 + $0xb4] sm:$0xff]
  %v49 = vld [vmem:[%s1 + $0xbc] sm:$0xf]
  %v54 = vunpack.c.l.b16 %v14
  %v55 = vunpack.c.l.b16 %v15
  %v56 = vunpack.c.l.b16 %v16
  %v57 = vunpack.c.l.b16 %v17
  %v58 = vpack.c.b16 %v55, %v54
  %v59 = vpack.c.b16 %v57, %v56
  %v94 = vunpack.c.l.b16 %v18
  %v95 = vunpack.c.h.b16 %v18
  %v96 = vunpack.c.l.b16 %v19
  %v97 = vunpack.c.l.b16 %v20
  %v98 = vunpack.c.h.b16 %v20
  %v99 = vunpack.c.l.b16 %v21
  %v100 = vunpack.c.l.b16 %v22
  %v101 = vunpack.c.h.b16 %v22
  %v102 = vunpack.c.l.b16 %v23
  %v103 = vunpack.c.l.b16 %v24
  %v104 = vunpack.c.h.b16 %v24
  %v105 = vunpack.c.l.b16 %v25
  %v106 = vunpack.c.l.b16 %v26
  %v107 = vunpack.c.h.b16 %v26
  %v108 = vunpack.c.l.b16 %v27
  %v109 = vunpack.c.l.b16 %v28
  %v110 = vunpack.c.h.b16 %v28
  %v111 = vunpack.c.l.b16 %v29
  %v112 = vunpack.c.l.b16 %v30
  %v113 = vunpack.c.h.b16 %v30
  %v114 = vunpack.c.l.b16 %v31
  %v115 = vunpack.c.l.b16 %v32
  %v116 = vunpack.c.h.b16 %v32
  %v117 = vunpack.c.l.b16 %v33
  %v118 = vunpack.c.l.b16 %v34
  %v119 = vunpack.c.h.b16 %v34
  %v120 = vunpack.c.l.b16 %v35
  %v121 = vunpack.c.l.b16 %v36
  %v122 = vunpack.c.h.b16 %v36
  %v123 = vunpack.c.l.b16 %v37
  %v124 = vunpack.c.l.b16 %v38
  %v125 = vunpack.c.h.b16 %v38
  %v126 = vunpack.c.l.b16 %v39
  %v127 = vunpack.c.l.b16 %v40
  %v128 = vunpack.c.h.b16 %v40
  %v129 = vunpack.c.l.b16 %v41
  %v130 = vunpack.c.l.b16 %v42
  %v131 = vunpack.c.h.b16 %v42
  %v132 = vunpack.c.l.b16 %v43
  %v133 = vunpack.c.l.b16 %v44
  %v134 = vunpack.c.h.b16 %v44
  %v135 = vunpack.c.l.b16 %v45
  %v136 = vunpack.c.l.b16 %v46
  %v137 = vunpack.c.h.b16 %v46
  %v138 = vunpack.c.l.b16 %v47
  %v139 = vunpack.c.l.b16 %v48
  %v140 = vunpack.c.h.b16 %v48
  %v141 = vunpack.c.l.b16 %v49
  %v142 = vpack.c.b16 %v97, %v94
  %v143 = vpack.c.b16 %v98, %v95
  %v144 = vpack.c.b16 %v99, %v96
  %v145 = vpack.c.b16 %v103, %v100
  %v146 = vpack.c.b16 %v104, %v101
  %v147 = vpack.c.b16 %v105, %v102
  %v148 = vpack.c.b16 %v109, %v106
  %v149 = vpack.c.b16 %v110, %v107
  %v150 = vpack.c.b16 %v111, %v108
  %v151 = vpack.c.b16 %v115, %v112
  %v152 = vpack.c.b16 %v116, %v113
  %v153 = vpack.c.b16 %v117, %v114
  %v154 = vpack.c.b16 %v121, %v118
  %v155 = vpack.c.b16 %v122, %v119
  %v156 = vpack.c.b16 %v123, %v120
  %v157 = vpack.c.b16 %v127, %v124
  %v158 = vpack.c.b16 %v128, %v125
  %v159 = vpack.c.b16 %v129, %v126
  %v160 = vpack.c.b16 %v133, %v130
  %v161 = vpack.c.b16 %v134, %v131
  %v162 = vpack.c.b16 %v135, %v132
  %v163 = vpack.c.b16 %v139, %v136
  %v164 = vpack.c.b16 %v140, %v137
  %v165 = vpack.c.b16 %v141, %v138
  %190 = vmatprep.subr.bf16.mxu0 %v164
  %191 = vmatpush1.bf16.msra.mxu0 %v163
  %192 = vmatprep.subr.bf16.mxu0 %v161
  %193 = vmatpush1.bf16.msra.mxu0 %v160
  %194 = vmatprep.subr.bf16.mxu0 %v158
  %195 = vmatpush1.bf16.msra.mxu0 %v157
  %196 = vmatprep.subr.bf16.mxu0 %v155
  %197 = vmatpush1.bf16.msra.mxu0 %v154
  %198 = vmatprep.subr.bf16.mxu0 %v152
  %199 = vmatpush1.bf16.msra.mxu0 %v151
  %200 = vmatprep.subr.bf16.mxu0 %v149
  %201 = vmatpush1.bf16.msra.mxu0 %v148
  %202 = vmatprep.subr.bf16.mxu0 %v146
  %203 = vmatpush1.bf16.msra.mxu0 %v145
  %204 = vmatprep.subr.bf16.mxu0 %v143
  %205 = vmatpush1.bf16.msra.mxu0 %v142
  %206 = vmatprep.subr.bf16.mxu0 0
  %207 = vmatpush2.bf16.msra.mxu0 0
  %208 = vmatprep.subr.bf16.mxu0 0
  %209 = vmatpush2.bf16.msra.mxu0 0
  %210 = vmatprep.subr.bf16.mxu0 0
  %211 = vmatpush2.bf16.msra.mxu0 0
  %212 = vmatprep.subr.bf16.mxu0 0
  %213 = vmatpush2.bf16.msra.mxu0 0
  %214 = vmatprep.subr.bf16.mxu0 0
  %215 = vmatpush2.bf16.msra.mxu0 0
  %216 = vmatprep.subr.bf16.mxu0 0
  %217 = vmatpush2.bf16.msra.mxu0 0
  %218 = vmatprep.subr.bf16.mxu0 0
  %219 = vmatpush2.bf16.msra.mxu0 0
  %220 = vmatprep.subr.bf16.mxu0 0
  %221 = vmatpush2.bf16.msra.mxu0 0
  %222 = vmatprep.mubr.bf16.mxu0 0
  %223 = vmatmul.mubr.bf16.gmra.mxu0 %v58
  %v224 = vpop.f32.mrf.mxu0
  %v225 = vadd.f32 0.0, %v224
  %v226 = vpop.f32.mrf.mxu0
  %v227 = vadd.f32 0.0, %v226
  %v228 = vpop.f32.mrf.mxu0
  %v229 = vadd.f32 0.0, %v228
  %v230 = vpop.f32.mrf.mxu0
  %v231 = vadd.f32 0.0, %v230
  %232 = vmatprep.mubr.bf16.mxu0 0
  %233 = vmatmul.mubr.bf16.gmra.mxu0 %v59
  %v234 = vpop.f32.mrf.mxu0
  %v235 = vadd.f32 0.0, %v234
  %v236 = vpop.f32.mrf.mxu0
  %v237 = vadd.f32 0.0, %v236
  %v238 = vpop.f32.mrf.mxu0
  %v239 = vadd.f32 0.0, %v238
  %v240 = vpop.f32.mrf.mxu0
  %v241 = vadd.f32 0.0, %v240
  %242 = vdwg.mxu0
  %243 = vmatprep.subr.bf16.mxu0 0
  %244 = vmatpush1.bf16.msra.mxu0 %v165
  %245 = vmatprep.subr.bf16.mxu0 0
  %246 = vmatpush1.bf16.msra.mxu0 %v162
  %247 = vmatprep.subr.bf16.mxu0 0
  %248 = vmatpush1.bf16.msra.mxu0 %v159
  %249 = vmatprep.subr.bf16.mxu0 0
  %250 = vmatpush1.bf16.msra.mxu0 %v156
  %251 = vmatprep.subr.bf16.mxu0 0
  %252 = vmatpush1.bf16.msra.mxu0 %v153
  %253 = vmatprep.subr.bf16.mxu0 0
  %254 = vmatpush1.bf16.msra.mxu0 %v150
  %255 = vmatprep.subr.bf16.mxu0 0
  %256 = vmatpush1.bf16.msra.mxu0 %v147
  %257 = vmatprep.subr.bf16.mxu0 0
  %258 = vmatpush1.bf16.msra.mxu0 %v144
  %259 = vmatprep.subr.bf16.mxu0 0
  %260 = vmatpush2.bf16.msra.mxu0 0
  %261 = vmatprep.subr.bf16.mxu0 0
  %262 = vmatpush2.bf16.msra.mxu0 0
  %263 = vmatprep.subr.bf16.mxu0 0
  %264 = vmatpush2.bf16.msra.mxu0 0
  %265 = vmatprep.subr.bf16.mxu0 0
  %266 = vmatpush2.bf16.msra.mxu0 0
  %267 = vmatprep.subr.bf16.mxu0 0
  %268 = vmatpush2.bf16.msra.mxu0 0
  %269 = vmatprep.subr.bf16.mxu0 0
  %270 = vmatpush2.bf16.msra.mxu0 0
  %271 = vmatprep.subr.bf16.mxu0 0
  %272 = vmatpush2.bf16.msra.mxu0 0
  %273 = vmatprep.subr.bf16.mxu0 0
  %274 = vmatpush2.bf16.msra.mxu0 0
  %275 = vmatprep.mubr.bf16.mxu0 0
  %276 = vmatmul.mubr.bf16.gmra.mxu0 %v58
  %v277 = vpop.f32.mrf.mxu0
  %v278 = vadd.f32 0.0, %v277
  %v279 = vpop.f32.mrf.mxu0
  %v280 = vpop.f32.mrf.mxu0
  %v281 = vadd.f32 0.0, %v280
  %v282 = vpop.f32.mrf.mxu0
  %283 = vmatprep.mubr.bf16.mxu0 0
  %284 = vmatmul.mubr.bf16.gmra.mxu0 %v59
  %v285 = vpop.f32.mrf.mxu0
  %v286 = vadd.f32 0.0, %v285
  %v287 = vpop.f32.mrf.mxu0
  %v288 = vpop.f32.mrf.mxu0
  %v289 = vadd.f32 0.0, %v288
  %v290 = vpop.f32.mrf.mxu0
  %291 = vdwg.mxu0
  %v292 = vpack.c.bf16 %v229, %v225
  %v293 = vpack.c.bf16 %v231, %v227
  %v294 = vpack.c.bf16 %v281, %v278
  %v295 = vpack.c.bf16 %v239, %v235
  %v296 = vpack.c.bf16 %v241, %v237
  %v297 = vpack.c.bf16 %v289, %v286
  %v304 = vunpack.c.l.b16 %v292
  %v305 = vunpack.c.l.b16 %v293
  %v306 = vunpack.c.l.b16 %v294
  %v307 = vunpack.c.h.b16 %v292
  %v308 = vunpack.c.h.b16 %v293
  %v309 = vunpack.c.h.b16 %v294
  %v310 = vunpack.c.l.b16 %v295
  %v311 = vunpack.c.l.b16 %v296
  %v312 = vunpack.c.l.b16 %v297
  %v313 = vunpack.c.h.b16 %v295
  %v314 = vunpack.c.h.b16 %v296
  %v315 = vunpack.c.h.b16 %v297
  %v316 = vpack.c.b16 %v305, %v304
  %v317 = vpack.c.b16 %v306, %v306
  %v318 = vpack.c.b16 %v308, %v307
  %v319 = vpack.c.b16 %v309, %v309
  %v320 = vpack.c.b16 %v311, %v310
  %v321 = vpack.c.b16 %v312, %v312
  %v322 = vpack.c.b16 %v314, %v313
  %v323 = vpack.c.b16 %v315, %v315
  %332 = vst [vmem:[%s2] sm:$0xff] %v316
  %333 = vst [vmem:[%s2 + $0x8] sm:$0xf] %v317
  %334 = vst [vmem:[%s2 + $0xc] sm:$0xff] %v318
  %335 = vst [vmem:[%s2 + $0x14] sm:$0xf] %v319
  %336 = vst [vmem:[%s2 + $0x18] sm:$0xff] %v320
  %337 = vst [vmem:[%s2 + $0x20] sm:$0xf] %v321
  %338 = vst [vmem:[%s2 + $0x24] sm:$0xff] %v322
  %339 = vst [vmem:[%s2 + $0x2c] sm:$0xf] %v323
  %v340 = vadd.f32 %v225, %v229
  %v341 = vadd.f32 %v340, %v235
  %v342 = vadd.f32 %v341, %v239
  %v343 = vrot.slane %v342, 4
  %v344 = vadd.f32 %v342, %v343
  %v345 = vrot.slane %v344, 2
  %v346 = vadd.f32 %v344, %v345
  %v347 = vrot.slane %v346, 1
  %v348 = vadd.f32 %v346, %v347
  %v349 = vadd.f32 %v227, %v231
  %v350 = vadd.f32 %v349, %v237
  %v351 = vadd.f32 %v350, %v241
  %v352 = vrot.slane %v351, 4
  %v353 = vadd.f32 %v351, %v352
  %v354 = vrot.slane %v353, 2
  %v355 = vadd.f32 %v353, %v354
  %v356 = vrot.slane %v355, 1
  %v357 = vadd.f32 %v355, %v356
  %v358 = vadd.f32 %v278, %v281
  %v359 = vadd.f32 %v358, %v286
  %v360 = vadd.f32 %v359, %v289
  %v361 = vrot.slane %v360, 4
  %v362 = vadd.f32 %v360, %v361
  %v363 = vrot.slane %v362, 2
  %v364 = vadd.f32 %v362, %v363
  %v365 = vrot.slane %v364, 1
  %v366 = vadd.f32 %v364, %v365
  %v370 = vcombine.low %v348, %v357
  %v372 = vunpack.c.l.s4 1966171168
  %v373 = vunpack.c.0.s8 %v372
  %v374 = vlaneseq
  %v375 = vshrl.u32 %v374, 7
  %v376 = vsub.s32 %v373, %v375
  %v377 = vrot.slane %v370, %v376
  %v379 = vunpack.c.l.s4 1966171168
  %v380 = vunpack.c.0.s8 %v379
  %v381 = vlaneseq
  %v382 = vshrl.u32 %v381, 7
  %v383 = vsub.s32 %v380, %v382
  %v384 = vrot.slane %v366, %v383
  %v385 = vcombine.low %v377, %v384
  %v387 = vunpack.c.l.s4 1966171168
  %v388 = vunpack.c.0.s8 %v387
  %v389 = vlaneseq
  %v390 = vshrl.u32 %v389, 7
  %v391 = vsub.s32 %v388, %v390
  %v392 = vrot.slane %v385, %v391
  %v394 = vlaneseq
  %vm395 = vcmp.ge.s32.totalorder %v394, 0
  %vm396 = vcmp.lt.s32.totalorder %v394, 384
  %vm397 = vmand %vm395, %vm396
  %398 = vst.msk [vmem:[%s3] ss:$2 sm:$0x7] %vm397, %v392
  %v399 = vmul.f32 %v225, %v225
  %v400 = vmul.f32 %v227, %v227
  %v401 = vmul.f32 %v278, %v278
  %v402 = vmul.f32 %v229, %v229
  %v403 = vmul.f32 %v231, %v231
  %v404 = vmul.f32 %v281, %v281
  %v405 = vmul.f32 %v235, %v235
  %v406 = vmul.f32 %v237, %v237
  %v407 = vmul.f32 %v286, %v286
  %v408 = vmul.f32 %v239, %v239
  %v409 = vmul.f32 %v241, %v241
  %v410 = vmul.f32 %v289, %v289
  %v411 = vadd.f32 %v399, %v402
  %v412 = vadd.f32 %v411, %v405
  %v413 = vadd.f32 %v412, %v408
  %v414 = vrot.slane %v413, 4
  %v415 = vadd.f32 %v413, %v414
  %v416 = vrot.slane %v415, 2
  %v417 = vadd.f32 %v415, %v416
  %v418 = vrot.slane %v417, 1
  %v419 = vadd.f32 %v417, %v418
  %v420 = vadd.f32 %v400, %v403
  %v421 = vadd.f32 %v420, %v406
  %v422 = vadd.f32 %v421, %v409
  %v423 = vrot.slane %v422, 4
  %v424 = vadd.f32 %v422, %v423
  %v425 = vrot.slane %v424, 2
  %v426 = vadd.f32 %v424, %v425
  %v427 = vrot.slane %v426, 1
  %v428 = vadd.f32 %v426, %v427
  %v429 = vadd.f32 %v401, %v404
  %v430 = vadd.f32 %v429, %v407
  %v431 = vadd.f32 %v430, %v410
  %v432 = vrot.slane %v431, 4
  %v433 = vadd.f32 %v431, %v432
  %v434 = vrot.slane %v433, 2
  %v435 = vadd.f32 %v433, %v434
  %v436 = vrot.slane %v435, 1
  %v437 = vadd.f32 %v435, %v436
  %v441 = vcombine.low %v419, %v428
  %v443 = vunpack.c.l.s4 1966171168
  %v444 = vunpack.c.0.s8 %v443
  %v445 = vlaneseq
  %v446 = vshrl.u32 %v445, 7
  %v447 = vsub.s32 %v444, %v446
  %v448 = vrot.slane %v441, %v447
  %v450 = vunpack.c.l.s4 1966171168
  %v451 = vunpack.c.0.s8 %v450
  %v452 = vlaneseq
  %v453 = vshrl.u32 %v452, 7
  %v454 = vsub.s32 %v451, %v453
  %v455 = vrot.slane %v437, %v454
  %v456 = vcombine.low %v448, %v455
  %v458 = vunpack.c.l.s4 1966171168
  %v459 = vunpack.c.0.s8 %v458
  %v460 = vlaneseq
  %v461 = vshrl.u32 %v460, 7
  %v462 = vsub.s32 %v459, %v461
  %v463 = vrot.slane %v456, %v462
  %s465 = scalar_lea.vmem %s3, 1
  %466 = vst.msk [vmem:[%s465] ss:$2 sm:$0x7] %vm397, %v463
  // Predicated region
  $region10: #{incept_b_forward.8} parent=0 // pred_check
    _
  $region11: #{incept_b_forward.8} parent=0 // pred_check_branch
    %468 = sbr.rel (0) target = $region13
  $region12: #{incept_b_forward.8} parent=0 // pred_region
    _
  $region13: #{incept_b_forward.8} parent=0 // pred_fallthru
    _
  // Predicated region
  $region14: #{incept_b_forward.8} parent=0 // pred_check
    _
  $region15: #{incept_b_forward.8} parent=0 // pred_check_branch
    %470 = sbr.rel (0) target = $region17
  $region16: #{incept_b_forward.8} parent=0 // pred_region
    _
  $region17: #{incept_b_forward.8} parent=0 // pred_fallthru
    _
  // Predicated region
  $region18: #{incept_b_forward.8} parent=0 // pred_check
    _
  $region19: #{incept_b_forward.8} parent=0 // pred_check_branch
    %472 = sbr.rel (0) target = $region21
  $region20: #{incept_b_forward.8} parent=0 // pred_region
    _
  $region21: #{incept_b_forward.8} parent=0 // pred_fallthru
    _
  // Predicated region
  $region22: #{incept_b_forward.8} parent=0 // pred_check
    _
  $region23: #{incept_b_forward.8} parent=0 // pred_check_branch
    %474 = sbr.rel (0) target = $region25
  $region24: #{incept_b_forward.8} parent=0 // pred_region
    _
  $region25: #{incept_b_forward.8} parent=0 // pred_fallthru
    _

// kernel: incept_b_forward.7
$region0: #{incept_b_forward.7}
  #allocation0 [shape = 'u32[]', space=smem, size = 0x4, offset = 0x4, fixed_abs, tag = 'smem constant byte address 0x4 - core index']
  #allocation1 [shape = 'u32[144,128]{1,0:T(1,128)}', space=vmem, size = 0x12000, scoped, tag = 'internal scratch']
  #allocation2 [shape = 'f32[16,1152]{1,0:T(8,128)}', space=vmem, size = 0x12000, scoped, tag = 'scratch operand']
  %s0 = inlined_call_operand.vmem [shape: bf16[2,2,2,5,5,128], index: 0, kind: input, shape index: {}]
  %s1 = inlined_call_operand.vmem [shape: bf16[1152,128], index: 1, kind: input, shape index: {}]
  %s2 = inlined_call_operand.vmem [shape: bf16[2,16,128], index: 2, kind: output, shape index: {0}]
  %s3 = inlined_call_operand.vmem [shape: f32[2,2,128], index: 3, kind: output, shape index: {1}]
  %4 = xla_tuple %s2, %s3
  %s5 = sld [smem:[#allocation0]]
  $region49: #{incept_b_forward.7} parent=0
    _
  %s7 = ssub.s32 1, %s5
  %s8 = scalar_select 0, %s7, %s5
  loop: start=0, step=1, limit=4
  $region2: #{incept_b_forward.7} parent=0 // loop_pre_header
    _
  $region3: #{incept_b_forward.7} parent=0 // loop_header
    %s10 = sphi 0, %s14
    %p11 = scmp.ge.s32.totalorder %s10, 4
    %s20 = sphi 0, %s22
    %s23 = sphi 0, %s20
    %s24 = sphi 0, %s23
    %s40 = sphi 0, %s24
    %s44 = sphi 0, %s44
    %s46 = sphi 0, %s44
    %s47 = sphi 0, %s46
    %s61 = sphi 0, %s47
    %s67 = sphi 0, %s69
    %s70 = sphi 0, %s67
    %s71 = sphi 0, %s70
    %s87 = sphi 0, %s71
    %s93 = sphi 0, %s95
    %s96 = sphi 0, %s93
    %s97 = sphi 0, %s96
    %s113 = sphi 0, %s97
  $region4: #{incept_b_forward.7} parent=0 // loop_header_branch
    %13 = sbr.rel (%p11) target = $region8
  $region5: #{incept_b_forward.7} parent=0 // loop_body
    %s15 = ssub.s32 %s10, 1
    %s16 = ssub.s32 %s10, 2
    %s17 = sadd.s32 %s10, 1
    %s18 = ssub.s32 %s10, %s17
    %p19 = scmp.eq.s32.totalorder %s18, 0
    %s21 = sadd.s32 %s20, 1
    %s22 = scalar_select %p19, %s20, %s21
    %p25 = pneg %p19
    %p26 = scmp.eq.s32.totalorder %s10, 1
    %p27 = por %p25, %p26
    %p28 = scmp.ne.s32.totalorder %s20, %s23
    %p29 = scmp.eq.s32.totalorder %s10, 0
    %p30 = por %p28, %p29
    %p31 = scmp.ne.s32.totalorder %s20, %s23
    %p32 = scmp.eq.s32.totalorder %s15, 1
    %p33 = por %p31, %p32
    %p34 = scmp.ne.s32.totalorder %s23, %s24
    %p35 = scmp.eq.s32.totalorder %s15, 0
    %p36 = por %p34, %p35
    %p37 = scmp.ne.s32.totalorder %s23, %s24
    %p38 = scmp.eq.s32.totalorder %s16, 1
    %p39 = por %p37, %p38
    %p41 = scmp.ne.s32.totalorder %s24, %s40
    %p42 = scmp.eq.s32.totalorder %s16, 0
    %p43 = por %p41, %p42
    %s45 = sadd.s32 %s44, 1
    %p48 = scmp.eq.s32.totalorder %s10, 1
    %p49 = scmp.ne.s32.totalorder %s44, %s46
    %p50 = scmp.eq.s32.totalorder %s10, 0
    %p51 = por %p49, %p50
    %p52 = scmp.ne.s32.totalorder %s44, %s46
    %p53 = scmp.eq.s32.totalorder %s15, 1
    %p54 = por %p52, %p53
    %p55 = scmp.ne.s32.totalorder %s46, %s47
    %p56 = scmp.eq.s32.totalorder %s15, 0
    %p57 = por %p55, %p56
    %p58 = scmp.ne.s32.totalorder %s46, %s47
    %p59 = scmp.eq.s32.totalorder %s16, 1
    %p60 = por %p58, %p59
    %p62 = scmp.ne.s32.totalorder %s47, %s61
    %p63 = scmp.eq.s32.totalorder %s16, 0
    %p64 = por %p62, %p63
    %s65 = ssub.s32 %s10, %s17
    %p66 = scmp.eq.s32.totalorder %s65, 0
    %s68 = sadd.s32 %s67, 1
    %s69 = scalar_select %p66, %s67, %s68
    %p72 = pneg %p66
    %p73 = scmp.eq.s32.totalorder %s10, 1
    %p74 = por %p72, %p73
    %p75 = scmp.ne.s32.totalorder %s67, %s70
    %p76 = scmp.eq.s32.totalorder %s10, 0
    %p77 = por %p75, %p76
    %p78 = scmp.ne.s32.totalorder %s67, %s70
    %p79 = scmp.eq.s32.totalorder %s15, 1
    %p80 = por %p78, %p79
    %p81 = scmp.ne.s32.totalorder %s70, %s71
    %p82 = scmp.eq.s32.totalorder %s15, 0
    %p83 = por %p81, %p82
    %p84 = scmp.ne.s32.totalorder %s70, %s71
    %p85 = scmp.eq.s32.totalorder %s16, 1
    %p86 = por %p84, %p85
    %p88 = scmp.ne.s32.totalorder %s71, %s87
    %p89 = scmp.eq.s32.totalorder %s16, 0
    %p90 = por %p88, %p89
    %s91 = ssub.s32 %s10, %s17
    %p92 = scmp.eq.s32.totalorder %s91, 0
    %s94 = sadd.s32 %s93, 1
    %s95 = scalar_select %p92, %s93, %s94
    %p98 = pneg %p92
    %p99 = scmp.eq.s32.totalorder %s10, 1
    %p100 = por %p98, %p99
    %p101 = scmp.ne.s32.totalorder %s93, %s96
    %p102 = scmp.eq.s32.totalorder %s10, 0
    %p103 = por %p101, %p102
    %p104 = scmp.ne.s32.totalorder %s93, %s96
    %p105 = scmp.eq.s32.totalorder %s15, 1
    %p106 = por %p104, %p105
    %p107 = scmp.ne.s32.totalorder %s96, %s97
    %p108 = scmp.eq.s32.totalorder %s15, 0
    %p109 = por %p107, %p108
    %p110 = scmp.ne.s32.totalorder %s96, %s97
    %p111 = scmp.eq.s32.totalorder %s16, 1
    %p112 = por %p110, %p111
    %p114 = scmp.ne.s32.totalorder %s97, %s113
    %p115 = scmp.eq.s32.totalorder %s16, 0
    %p116 = por %p114, %p115
    %p117 = scmp.le.s32.totalorder 1, %s10
    %p118 = scmp.lt.s32.totalorder %s10, 3
    %p119 = pnand %p117, %p118
    %p120 = pneg %p119
    // Predicated region
    $region9: #{incept_b_forward.7} parent=5 // pred_check
      _
    $region10: #{incept_b_forward.7} parent=5 // pred_check_branch
      %122 = sbr.rel (%p119) target = $region12
    $region11: #{incept_b_forward.7} parent=5 // pred_region
      %s123 = ssub.s32 %s10, 1
      // Predicated region
      $region13: #{incept_b_forward.7} parent=11 // pred_check
        %p124 = pneg %p57
      $region14: #{incept_b_forward.7} parent=11 // pred_check_branch
        %126 = sbr.rel (%p124) target = $region16
      $region15: #{incept_b_forward.7} parent=11 // pred_region
        _
      $region16: #{incept_b_forward.7} parent=11 // pred_fallthru
        _
    $region12: #{incept_b_forward.7} parent=5 // pred_fallthru
      _
    %p127 = scmp.lt.s32.totalorder %s10, 2
    // Predicated region
    $region17: #{incept_b_forward.7} parent=5 // pred_check
      %p128 = pneg %p127
    $region18: #{incept_b_forward.7} parent=5 // pred_check_branch
      %130 = sbr.rel (%p128) target = $region20
    $region19: #{incept_b_forward.7} parent=5 // pred_region
      // Predicated region
      $region21: #{incept_b_forward.7} parent=19 // pred_check
        %p131 = pneg %p30
      $region22: #{incept_b_forward.7} parent=19 // pred_check_branch
        %133 = sbr.rel (%p131) target = $region24
      $region23: #{incept_b_forward.7} parent=19 // pred_region
        %p134 = scmp.lt.s32.totalorder %s10, 1
        %s135 = scalar_select %p134, %s10, 1
        %s136 = smul.addr %s135, 20
        %s137 = smul.addr %s136, 4
        %s138 = scalar_lea.vmem %s0, %s137
      $region24: #{incept_b_forward.7} parent=19 // pred_fallthru
        _
    $region20: #{incept_b_forward.7} parent=5 // pred_fallthru
      _
    %p139 = scmp.le.s32.totalorder 1, %s10
    %p140 = scmp.lt.s32.totalorder %s10, 3
    %p141 = pnand %p139, %p140
    %p142 = pneg %p141
    // Predicated region
    $region25: #{incept_b_forward.7} parent=5 // pred_check
      _
    $region26: #{incept_b_forward.7} parent=5 // pred_check_branch
      %144 = sbr.rel (%p141) target = $region28
    $region27: #{incept_b_forward.7} parent=5 // pred_region
      %s145 = ssub.s32 %s10, 1
      %p146 = scmp.lt.s32.totalorder %s15, 1
      %s147 = scalar_select %p146, %s15, 1
      %s148 = smul.addr %s147, 20
      %s149 = smul.addr %s148, 4
      %s150 = scalar_lea.vmem %s0, %s149
      %p151 = pneg %p36
      %p152 = pneg %p33
      %p153 = pneg %p57
      %p154 = pneg %p54
      %p155 = pneg %p83
      %p156 = pneg %p80
      %p157 = scmp.lt.s32.totalorder %s15, 1
      %s158 = scalar_select %p157, %s15, 1
      %s159 = smul.addr %s158, 2
      %s160 = smul.addr %s159, 4
      %s161 = scalar_lea.vmem %s2, %s160
      %p162 = pneg %p109
      %p163 = pneg %p106
      %p164 = scmp.lt.s32.totalorder %s15, 1
      %s165 = scalar_select %p164, %s15, 1
      %s166 = smul.addr %s165, 2
      %s167 = scalar_lea.vmem %s3, %s166
      %p168 = scmp.lt.s32.totalorder %s15, 1
      %s169 = scalar_select %p168, %s15, 1
      %s170 = smul.addr %s169, 20
      %s171 = smul.addr %s170, 4
      %s172 = scalar_lea.vmem %s0, %s171
      %p173 = scmp.lt.s32.totalorder %s15, 1
      %s174 = scalar_select %p173, %s15, 1
      %s175 = smul.addr %s174, 2
      %s176 = smul.addr %s175, 4
      %s177 = scalar_lea.vmem %s2, %s176
      %p178 = scmp.lt.s32.totalorder %s15, 1
      %s179 = scalar_select %p178, %s15, 1
      %s180 = smul.addr %s179, 2
      %s181 = scalar_lea.vmem %s3, %s180
      %v183 = vld [vmem:[%s172] sm:$0x3]
      %v184 = vunpack.c.l.bf16 %v183
      %185 = vst [vmem:[#allocation2] sm:$0xf] %v184
      %s186 = scalar_lea.vmem %s172, 20
      %v187 = vld [vmem:[%s186] sm:$0x3]
      %v188 = vunpack.c.l.bf16 %v187
      %189 = vst [vmem:[#allocation2 + $0x8] sm:$0xf] %v188
      %v190 = vld [vmem:[%s172] sm:$0x7]
      %v191 = vunpack.c.l.bf16 %v190
      %v193 = vrot.slane %v191, 1
      %195 = vst [vmem:[#allocation2 + $0x10] sm:$0xf] %v193
      %s196 = scalar_lea.vmem %s172, 40
      %v197 = vld [vmem:[%s196] sm:$0x3]
      %v198 = vunpack.c.l.bf16 %v197
      %199 = vst [vmem:[#allocation2 + $0x18] sm:$0xf] %v198
      %s200 = scalar_lea.vmem %s172, 60
      %v201 = vld [vmem:[%s200] sm:$0x3]
      %v202 = vunpack.c.l.bf16 %v201
      %203 = vst [vmem:[#allocation2 + $0x20] sm:$0xf] %v202
      %v204 = vld [vmem:[%s196] sm:$0x7]
      %v205 = vunpack.c.l.bf16 %v204
      %v207 = vrot.slane %v205, 1
      %209 = vst [vmem:[#allocation2 + $0x28] sm:$0xf] %v207
      %s210 = scalar_lea.vmem %s172, 4
      %v211 = vld [vmem:[%s210] sm:$0x3]
      %v212 = vunpack.c.l.bf16 %v211
      %213 = vst [vmem:[#allocation2 + $0x30] sm:$0xf] %v212
      %s214 = scalar_lea.vmem %s172, 24
      %v215 = vld [vmem:[%s214] sm:$0x3]
      %v216 = vunpack.c.l.bf16 %v215
      %217 = vst [vmem:[#allocation2 + $0x38] sm:$0xf] %v216
      %v218 = vld [vmem:[%s210] sm:$0x7]
      %v219 = vunpack.c.l.bf16 %v218
      %v221 = vrot.slane %v219, 1
      %223 = vst [vmem:[#allocation2 + $0x40] sm:$0xf] %v221
      %v224 = vld [vmem:[%s210] sm:$0x3]
      %v225 = vunpack.c.l.bf16 %v224
      %v227 = vrot.slane %v225, 4
      %229 = vst [vmem:[#allocation2] sm:$0xf0] %v227
      %v230 = vld [vmem:[%s214] sm:$0x3]
      %v231 = vunpack.c.l.bf16 %v230
      %v233 = vrot.slane %v231, 4
      %235 = vst [vmem:[#allocation2 + $0x8] sm:$0xf0] %v233
      %v236 = vld [vmem:[%s210] sm:$0x7]
      %v237 = vunpack.c.l.bf16 %v236
      %v239 = vrot.slane %v237, 5
      %241 = vst [vmem:[#allocation2 + $0x10] sm:$0xf0] %v239
      %s242 = scalar_lea.vmem %s172, 44
      %v243 = vld [vmem:[%s242] sm:$0x3]
      %v244 = vunpack.c.l.bf16 %v243
      %v246 = vrot.slane %v244, 4
      %248 = vst [vmem:[#allocation2 + $0x18] sm:$0xf0] %v246
      %s249 = scalar_lea.vmem %s172, 64
      %v250 = vld [vmem:[%s249] sm:$0x3]
      %v251 = vunpack.c.l.bf16 %v250
      %v253 = vrot.slane %v251, 4
      %255 = vst [vmem:[#allocation2 + $0x20] sm:$0xf0] %v253
      %v256 = vld [vmem:[%s242] sm:$0x7]
      %v257 = vunpack.c.l.bf16 %v256
      %v259 = vrot.slane %v257, 5
      %261 = vst [vmem:[#allocation2 + $0x28] sm:$0xf0] %v259
      %s262 = scalar_lea.vmem %s172, 8
      %v263 = vld [vmem:[%s262] sm:$0x3]
      %v264 = vunpack.c.l.bf16 %v263
      %v266 = vrot.slane %v264, 4
      %268 = vst [vmem:[#allocation2 + $0x30] sm:$0xf0] %v266
      %s269 = scalar_lea.vmem %s172, 28
      %v270 = vld [vmem:[%s269] sm:$0x3]
      %v271 = vunpack.c.l.bf16 %v270
      %v273 = vrot.slane %v271, 4
      %275 = vst [vmem:[#allocation2 + $0x38] sm:$0xf0] %v273
      %v276 = vld [vmem:[%s262] sm:$0x7]
      %v277 = vunpack.c.l.bf16 %v276
      %v279 = vrot.slane %v277, 5
      %281 = vst [vmem:[#allocation2 + $0x40] sm:$0xf0] %v279
      %v282 = vld [vmem:[%s262] sm:$0x3]
      %v283 = vunpack.c.l.bf16 %v282
      %284 = vst [vmem:[#allocation2 + $0x48] sm:$0xf] %v283
      %v285 = vld [vmem:[%s269] sm:$0x3]
      %v286 = vunpack.c.l.bf16 %v285
      %287 = vst [vmem:[#allocation2 + $0x50] sm:$0xf] %v286
      %v288 = vld [vmem:[%s262] sm:$0x7]
      %v289 = vunpack.c.l.bf16 %v288
      %v291 = vrot.slane %v289, 1
      %293 = vst [vmem:[#allocation2 + $0x58] sm:$0xf] %v291
      %s294 = scalar_lea.vmem %s172, 48
      %v295 = vld [vmem:[%s294] sm:$0x3]
      %v296 = vunpack.c.l.bf16 %v295
      %297 = vst [vmem:[#allocation2 + $0x60] sm:$0xf] %v296
      %s298 = scalar_lea.vmem %s172, 68
      %v299 = vld [vmem:[%s298] sm:$0x3]
      %v300 = vunpack.c.l.bf16 %v299
      %301 = vst [vmem:[#allocation2 + $0x68] sm:$0xf] %v300
      %v302 = vld [vmem:[%s294] sm:$0x7]
      %v303 = vunpack.c.l.bf16 %v302
      %v305 = vrot.slane %v303, 1
      %307 = vst [vmem:[#allocation2 + $0x70] sm:$0xf] %v305
      %s308 = scalar_lea.vmem %s172, 12
      %v309 = vld [vmem:[%s308] sm:$0x3]
      %v310 = vunpack.c.l.bf16 %v309
      %311 = vst [vmem:[#allocation2 + $0x78] sm:$0xf] %v310
      %s312 = scalar_lea.vmem %s172, 32
      %v313 = vld [vmem:[%s312] sm:$0x3]
      %v314 = vunpack.c.l.bf16 %v313
      %315 = vst [vmem:[#allocation2 + $0x80] sm:$0xf] %v314
      %v316 = vld [vmem:[%s308] sm:$0x7]
      %v317 = vunpack.c.l.bf16 %v316
      %v319 = vrot.slane %v317, 1
      %321 = vst [vmem:[#allocation2 + $0x88] sm:$0xf] %v319
      %v322 = vld [vmem:[%s308] sm:$0x3]
      %v323 = vunpack.c.l.bf16 %v322
      %v325 = vrot.slane %v323, 4
      %327 = vst [vmem:[#allocation2 + $0x48] sm:$0xf0] %v325
      %v328 = vld [vmem:[%s312] sm:$0x3]
      %v329 = vunpack.c.l.bf16 %v328
      %v331 = vrot.slane %v329, 4
      %333 = vst [vmem:[#allocation2 + $0x50] sm:$0xf0] %v331
      %v334 = vld [vmem:[%s308] sm:$0x7]
      %v335 = vunpack.c.l.bf16 %v334
      %v337 = vrot.slane %v335, 5
      %339 = vst [vmem:[#allocation2 + $0x58] sm:$0xf0] %v337
      %s340 = scalar_lea.vmem %s172, 52
      %v341 = vld [vmem:[%s340] sm:$0x3]
      %v342 = vunpack.c.l.bf16 %v341
      %v344 = vrot.slane %v342, 4
      %346 = vst [vmem:[#allocation2 + $0x60] sm:$0xf0] %v344
      %s347 = scalar_lea.vmem %s172, 72
      %v348 = vld [vmem:[%s347] sm:$0x3]
      %v349 = vunpack.c.l.bf16 %v348
      %v351 = vrot.slane %v349, 4
      %353 = vst [vmem:[#allocation2 + $0x68] sm:$0xf0] %v351
      %v354 = vld [vmem:[%s340] sm:$0x7]
      %v355 = vunpack.c.l.bf16 %v354
      %v357 = vrot.slane %v355, 5
      %359 = vst [vmem:[#allocation2 + $0x70] sm:$0xf0] %v357
      %s360 = scalar_lea.vmem %s172, 16
      %v361 = vld [vmem:[%s360] sm:$0x3]
      %v362 = vunpack.c.l.bf16 %v361
      %v364 = vrot.slane %v362, 4
      %366 = vst [vmem:[#allocation2 + $0x78] sm:$0xf0] %v364
      %s367 = scalar_lea.vmem %s172, 36
      %v368 = vld [vmem:[%s367] sm:$0x3]
      %v369 = vunpack.c.l.bf16 %v368
      %v371 = vrot.slane %v369, 4
      %373 = vst [vmem:[#allocation2 + $0x80] sm:$0xf0] %v371
      %v374 = vld [vmem:[%s360] sm:$0x7]
      %v375 = vunpack.c.l.bf16 %v374
      %v377 = vrot.slane %v375, 5
      %379 = vst [vmem:[#allocation2 + $0x88] sm:$0xf0] %v377
      %v380 = vld [vmem:[#allocation2] sm:$0xff]
      %v381 = vld [vmem:[#allocation2 + $0x8] sm:$0xff]
      %v382 = vld [vmem:[#allocation2 + $0x10] sm:$0xff]
      %v383 = vld [vmem:[#allocation2 + $0x18] sm:$0xff]
      %v384 = vld [vmem:[#allocation2 + $0x20] sm:$0xff]
      %v385 = vld [vmem:[#allocation2 + $0x28] sm:$0xff]
      %v386 = vld [vmem:[#allocation2 + $0x30] sm:$0xff]
      %v387 = vld [vmem:[#allocation2 + $0x38] sm:$0xff]
      %v388 = vld [vmem:[#allocation2 + $0x40] sm:$0xff]
      %v389 = vld [vmem:[#allocation2 + $0x48] sm:$0xff]
      %v390 = vld [vmem:[#allocation2 + $0x50] sm:$0xff]
      %v391 = vld [vmem:[#allocation2 + $0x58] sm:$0xff]
      %v392 = vld [vmem:[#allocation2 + $0x60] sm:$0xff]
      %v393 = vld [vmem:[#allocation2 + $0x68] sm:$0xff]
      %v394 = vld [vmem:[#allocation2 + $0x70] sm:$0xff]
      %v395 = vld [vmem:[#allocation2 + $0x78] sm:$0xff]
      %v396 = vld [vmem:[#allocation2 + $0x80] sm:$0xff]
      %v397 = vld [vmem:[#allocation2 + $0x88] sm:$0xff]
      %v398 = vpack.c.bf16 %v389, %v380
      %v399 = vpack.c.bf16 %v390, %v381
      %v400 = vpack.c.bf16 %v391, %v382
      %v401 = vpack.c.bf16 %v392, %v383
      %v402 = vpack.c.bf16 %v393, %v384
      %v403 = vpack.c.bf16 %v394, %v385
      %v404 = vpack.c.bf16 %v395, %v386
      %v405 = vpack.c.bf16 %v396, %v387
      %v406 = vpack.c.bf16 %v397, %v388
      %v407 = vld [vmem:[%s1] sm:$0xf]
      %v408 = vld [vmem:[%s1 + $0x4] sm:$0xf]
      %v409 = vld [vmem:[%s1 + $0x8] sm:$0xf]
      %v410 = vld [vmem:[%s1 + $0xc] sm:$0xf]
      %v411 = vld [vmem:[%s1 + $0x10] sm:$0xf]
      %v412 = vld [vmem:[%s1 + $0x14] sm:$0xf]
      %v413 = vld [vmem:[%s1 + $0x18] sm:$0xf]
      %v414 = vld [vmem:[%s1 + $0x1c] sm:$0xf]
      %v415 = vld [vmem:[%s1 + $0x20] sm:$0xf]
      %v416 = vld [vmem:[%s1 + $0x24] sm:$0xf]
      %v417 = vld [vmem:[%s1 + $0x28] sm:$0xf]
      %v418 = vld [vmem:[%s1 + $0x2c] sm:$0xf]
      %v419 = vld [vmem:[%s1 + $0x30] sm:$0xf]
      %v420 = vld [vmem:[%s1 + $0x34] sm:$0xf]
      %v421 = vld [vmem:[%s1 + $0x38] sm:$0xf]
      %v422 = vld [vmem:[%s1 + $0x3c] sm:$0xf]
      %v423 = vld [vmem:[%s1 + $0x40] sm:$0xf]
      %v424 = vld [vmem:[%s1 + $0x44] sm:$0xf]
      %v425 = vld [vmem:[%s1 + $0x48] sm:$0xf]
      %v426 = vld [vmem:[%s1 + $0x4c] sm:$0xf]
      %v427 = vld [vmem:[%s1 + $0x50] sm:$0xf]
      %v428 = vld [vmem:[%s1 + $0x54] sm:$0xf]
      %v429 = vld [vmem:[%s1 + $0x58] sm:$0xf]
      %v430 = vld [vmem:[%s1 + $0x5c] sm:$0xf]
      %v431 = vld [vmem:[%s1 + $0x60] sm:$0xf]
      %v432 = vld [vmem:[%s1 + $0x64] sm:$0xf]
      %v433 = vld [vmem:[%s1 + $0x68] sm:$0xf]
      %v434 = vld [vmem:[%s1 + $0x6c] sm:$0xf]
      %v435 = vld [vmem:[%s1 + $0x70] sm:$0xf]
      %v436 = vld [vmem:[%s1 + $0x74] sm:$0xf]
      %v437 = vld [vmem:[%s1 + $0x78] sm:$0xf]
      %v438 = vld [vmem:[%s1 + $0x7c] sm:$0xf]
      %v439 = vld [vmem:[%s1 + $0x80] sm:$0xf]
      %v440 = vld [vmem:[%s1 + $0x84] sm:$0xf]
      %v441 = vld [vmem:[%s1 + $0x88] sm:$0xf]
      %v442 = vld [vmem:[%s1 + $0x8c] sm:$0xf]
      %v443 = vld [vmem:[%s1 + $0x90] sm:$0xf]
      %v444 = vld [vmem:[%s1 + $0x94] sm:$0xf]
      %v445 = vld [vmem:[%s1 + $0x98] sm:$0xf]
      %v446 = vld [vmem:[%s1 + $0x9c] sm:$0xf]
      %v447 = vld [vmem:[%s1 + $0xa0] sm:$0xf]
      %v448 = vld [vmem:[%s1 + $0xa4] sm:$0xf]
      %v449 = vld [vmem:[%s1 + $0xa8] sm:$0xf]
      %v450 = vld [vmem:[%s1 + $0xac] sm:$0xf]
      %v451 = vld [vmem:[%s1 + $0xb0] sm:$0xf]
      %v452 = vld [vmem:[%s1 + $0xb4] sm:$0xf]
      %v453 = vld [vmem:[%s1 + $0xb8] sm:$0xf]
      %v454 = vld [vmem:[%s1 + $0xbc] sm:$0xf]
      %v455 = vld [vmem:[%s1 + $0xc0] sm:$0xf]
      %v456 = vld [vmem:[%s1 + $0xc4] sm:$0xf]
      %v457 = vld [vmem:[%s1 + $0xc8] sm:$0xf]
      %v458 = vld [vmem:[%s1 + $0xcc] sm:$0xf]
      %v459 = vld [vmem:[%s1 + $0xd0] sm:$0xf]
      %v460 = vld [vmem:[%s1 + $0xd4] sm:$0xf]
      %v461 = vld [vmem:[%s1 + $0xd8] sm:$0xf]
      %v462 = vld [vmem:[%s1 + $0xdc] sm:$0xf]
      %v463 = vld [vmem:[%s1 + $0xe0] sm:$0xf]
      %v464 = vld [vmem:[%s1 + $0xe4] sm:$0xf]
      %v465 = vld [vmem:[%s1 + $0xe8] sm:$0xf]
      %v466 = vld [vmem:[%s1 + $0xec] sm:$0xf]
      %v467 = vld [vmem:[%s1 + $0xf0] sm:$0xf]
      %v468 = vld [vmem:[%s1 + $0xf4] sm:$0xf]
      %v469 = vld [vmem:[%s1 + $0xf8] sm:$0xf]
      %v470 = vld [vmem:[%s1 + $0xfc] sm:$0xf]
      %v471 = vld [vmem:[%s1 + $0x100] sm:$0xf]
      %v472 = vld [vmem:[%s1 + $0x104] sm:$0xf]
      %v473 = vld [vmem:[%s1 + $0x108] sm:$0xf]
      %v474 = vld [vmem:[%s1 + $0x10c] sm:$0xf]
      %v475 = vld [vmem:[%s1 + $0x110] sm:$0xf]
      %v476 = vld [vmem:[%s1 + $0x114] sm:$0xf]
      %v477 = vld [vmem:[%s1 + $0x118] sm:$0xf]
      %v478 = vld [vmem:[%s1 + $0x11c] sm:$0xf]
      %v479 = vld [vmem:[%s1 + $0x120] sm:$0xf]
      %v480 = vld [vmem:[%s1 + $0x124] sm:$0xf]
      %v481 = vld [vmem:[%s1 + $0x128] sm:$0xf]
      %v482 = vld [vmem:[%s1 + $0x12c] sm:$0xf]
      %v483 = vld [vmem:[%s1 + $0x130] sm:$0xf]
      %v484 = vld [vmem:[%s1 + $0x134] sm:$0xf]
      %v485 = vld [vmem:[%s1 + $0x138] sm:$0xf]
      %v486 = vld [vmem:[%s1 + $0x13c] sm:$0xf]
      %v487 = vld [vmem:[%s1 + $0x140] sm:$0xf]
      %v488 = vld [vmem:[%s1 + $0x144] sm:$0xf]
      %v489 = vld [vmem:[%s1 + $0x148] sm:$0xf]
      %v490 = vld [vmem:[%s1 + $0x14c] sm:$0xf]
      %v491 = vld [vmem:[%s1 + $0x150] sm:$0xf]
      %v492 = vld [vmem:[%s1 + $0x154] sm:$0xf]
      %v493 = vld [vmem:[%s1 + $0x158] sm:$0xf]
      %v494 = vld [vmem:[%s1 + $0x15c] sm:$0xf]
      %v495 = vld [vmem:[%s1 + $0x160] sm:$0xf]
      %v496 = vld [vmem:[%s1 + $0x164] sm:$0xf]
      %v497 = vld [vmem:[%s1 + $0x168] sm:$0xf]
      %v498 = vld [vmem:[%s1 + $0x16c] sm:$0xf]
      %v499 = vld [vmem:[%s1 + $0x170] sm:$0xf]
      %v500 = vld [vmem:[%s1 + $0x174] sm:$0xf]
      %v501 = vld [vmem:[%s1 + $0x178] sm:$0xf]
      %v502 = vld [vmem:[%s1 + $0x17c] sm:$0xf]
      %v503 = vld [vmem:[%s1 + $0x180] sm:$0xf]
      %v504 = vld [vmem:[%s1 + $0x184] sm:$0xf]
      %v505 = vld [vmem:[%s1 + $0x188] sm:$0xf]
      %v506 = vld [vmem:[%s1 + $0x18c] sm:$0xf]
      %v507 = vld [vmem:[%s1 + $0x190] sm:$0xf]
      %v508 = vld [vmem:[%s1 + $0x194] sm:$0xf]
      %v509 = vld [vmem:[%s1 + $0x198] sm:$0xf]
      %v510 = vld [vmem:[%s1 + $0x19c] sm:$0xf]
      %v511 = vld [vmem:[%s1 + $0x1a0] sm:$0xf]
      %v512 = vld [vmem:[%s1 + $0x1a4] sm:$0xf]
      %v513 = vld [vmem:[%s1 + $0x1a8] sm:$0xf]
      %v514 = vld [vmem:[%s1 + $0x1ac] sm:$0xf]
      %v515 = vld [vmem:[%s1 + $0x1b0] sm:$0xf]
      %v516 = vld [vmem:[%s1 + $0x1b4] sm:$0xf]
      %v517 = vld [vmem:[%s1 + $0x1b8] sm:$0xf]
      %v518 = vld [vmem:[%s1 + $0x1bc] sm:$0xf]
      %v519 = vld [vmem:[%s1 + $0x1c0] sm:$0xf]
      %v520 = vld [vmem:[%s1 + $0x1c4] sm:$0xf]
      %v521 = vld [vmem:[%s1 + $0x1c8] sm:$0xf]
      %v522 = vld [vmem:[%s1 + $0x1cc] sm:$0xf]
      %v523 = vld [vmem:[%s1 + $0x1d0] sm:$0xf]
      %v524 = vld [vmem:[%s1 + $0x1d4] sm:$0xf]
      %v525 = vld [vmem:[%s1 + $0x1d8] sm:$0xf]
      %v526 = vld [vmem:[%s1 + $0x1dc] sm:$0xf]
      %v527 = vld [vmem:[%s1 + $0x1e0] sm:$0xf]
      %v528 = vld [vmem:[%s1 + $0x1e4] sm:$0xf]
      %v529 = vld [vmem:[%s1 + $0x1e8] sm:$0xf]
      %v530 = vld [vmem:[%s1 + $0x1ec] sm:$0xf]
      %v531 = vld [vmem:[%s1 + $0x1f0] sm:$0xf]
      %v532 = vld [vmem:[%s1 + $0x1f4] sm:$0xf]
      %v533 = vld [vmem:[%s1 + $0x1f8] sm:$0xf]
      %v534 = vld [vmem:[%s1 + $0x1fc] sm:$0xf]
      %v535 = vld [vmem:[%s1 + $0x200] sm:$0xf]
      %v536 = vld [vmem:[%s1 + $0x204] sm:$0xf]
      %v537 = vld [vmem:[%s1 + $0x208] sm:$0xf]
      %v538 = vld [vmem:[%s1 + $0x20c] sm:$0xf]
      %v539 = vld [vmem:[%s1 + $0x210] sm:$0xf]
      %v540 = vld [vmem:[%s1 + $0x214] sm:$0xf]
      %v541 = vld [vmem:[%s1 + $0x218] sm:$0xf]
      %v542 = vld [vmem:[%s1 + $0x21c] sm:$0xf]
      %v543 = vld [vmem:[%s1 + $0x220] sm:$0xf]
      %v544 = vld [vmem:[%s1 + $0x224] sm:$0xf]
      %v545 = vld [vmem:[%s1 + $0x228] sm:$0xf]
      %v546 = vld [vmem:[%s1 + $0x22c] sm:$0xf]
      %v547 = vld [vmem:[%s1 + $0x230] sm:$0xf]
      %v548 = vld [vmem:[%s1 + $0x234] sm:$0xf]
      %v549 = vld [vmem:[%s1 + $0x238] sm:$0xf]
      %v550 = vld [vmem:[%s1 + $0x23c] sm:$0xf]
      %v695 = vunpack.c.l.b16 %v407
      %v696 = vunpack.c.l.b16 %v408
      %v697 = vunpack.c.l.b16 %v409
      %v698 = vunpack.c.l.b16 %v410
      %v699 = vunpack.c.l.b16 %v411
      %v700 = vunpack.c.l.b16 %v412
      %v701 = vunpack.c.l.b16 %v413
      %v702 = vunpack.c.l.b16 %v414
      %v703 = vunpack.c.l.b16 %v415
      %v704 = vunpack.c.l.b16 %v416
      %v705 = vunpack.c.l.b16 %v417
      %v706 = vunpack.c.l.b16 %v418
      %v707 = vunpack.c.l.b16 %v419
      %v708 = vunpack.c.l.b16 %v420
      %v709 = vunpack.c.l.b16 %v421
      %v710 = vunpack.c.l.b16 %v422
      %v711 = vunpack.c.l.b16 %v423
      %v712 = vunpack.c.l.b16 %v424
      %v713 = vunpack.c.l.b16 %v425
      %v714 = vunpack.c.l.b16 %v426
      %v715 = vunpack.c.l.b16 %v427
      %v716 = vunpack.c.l.b16 %v428
      %v717 = vunpack.c.l.b16 %v429
      %v718 = vunpack.c.l.b16 %v430
      %v719 = vunpack.c.l.b16 %v431
      %v720 = vunpack.c.l.b16 %v432
      %v721 = vunpack.c.l.b16 %v433
      %v722 = vunpack.c.l.b16 %v434
      %v723 = vunpack.c.l.b16 %v435
      %v724 = vunpack.c.l.b16 %v436
      %v725 = vunpack.c.l.b16 %v437
      %v726 = vunpack.c.l.b16 %v438
      %v727 = vunpack.c.l.b16 %v439
      %v728 = vunpack.c.l.b16 %v440
      %v729 = vunpack.c.l.b16 %v441
      %v730 = vunpack.c.l.b16 %v442
      %v731 = vunpack.c.l.b16 %v443
      %v732 = vunpack.c.l.b16 %v444
      %v733 = vunpack.c.l.b16 %v445
      %v734 = vunpack.c.l.b16 %v446
      %v735 = vunpack.c.l.b16 %v447
      %v736 = vunpack.c.l.b16 %v448
      %v737 = vunpack.c.l.b16 %v449
      %v738 = vunpack.c.l.b16 %v450
      %v739 = vunpack.c.l.b16 %v451
      %v740 = vunpack.c.l.b16 %v452
      %v741 = vunpack.c.l.b16 %v453
      %v742 = vunpack.c.l.b16 %v454
      %v743 = vunpack.c.l.b16 %v455
      %v744 = vunpack.c.l.b16 %v456
      %v745 = vunpack.c.l.b16 %v457
      %v746 = vunpack.c.l.b16 %v458
      %v747 = vunpack.c.l.b16 %v459
      %v748 = vunpack.c.l.b16 %v460
      %v749 = vunpack.c.l.b16 %v461
      %v750 = vunpack.c.l.b16 %v462
      %v751 = vunpack.c.l.b16 %v463
      %v752 = vunpack.c.l.b16 %v464
      %v753 = vunpack.c.l.b16 %v465
      %v754 = vunpack.c.l.b16 %v466
      %v755 = vunpack.c.l.b16 %v467
      %v756 = vunpack.c.l.b16 %v468
      %v757 = vunpack.c.l.b16 %v469
      %v758 = vunpack.c.l.b16 %v470
      %v759 = vunpack.c.l.b16 %v471
      %v760 = vunpack.c.l.b16 %v472
      %v761 = vunpack.c.l.b16 %v473
      %v762 = vunpack.c.l.b16 %v474
      %v763 = vunpack.c.l.b16 %v475
      %v764 = vunpack.c.l.b16 %v476
      %v765 = vunpack.c.l.b16 %v477
      %v766 = vunpack.c.l.b16 %v478
      %v767 = vunpack.c.l.b16 %v479
      %v768 = vunpack.c.l.b16 %v480
      %v769 = vunpack.c.l.b16 %v481
      %v770 = vunpack.c.l.b16 %v482
      %v771 = vunpack.c.l.b16 %v483
      %v772 = vunpack.c.l.b16 %v484
      %v773 = vunpack.c.l.b16 %v485
      %v774 = vunpack.c.l.b16 %v486
      %v775 = vunpack.c.l.b16 %v487
      %v776 = vunpack.c.l.b16 %v488
      %v777 = vunpack.c.l.b16 %v489
      %v778 = vunpack.c.l.b16 %v490
      %v779 = vunpack.c.l.b16 %v491
      %v780 = vunpack.c.l.b16 %v492
      %v781 = vunpack.c.l.b16 %v493
      %v782 = vunpack.c.l.b16 %v494
      %v783 = vunpack.c.l.b16 %v495
      %v784 = vunpack.c.l.b16 %v496
      %v785 = vunpack.c.l.b16 %v497
      %v786 = vunpack.c.l.b16 %v498
      %v787 = vunpack.c.l.b16 %v499
      %v788 = vunpack.c.l.b16 %v500
      %v789 = vunpack.c.l.b16 %v501
      %v790 = vunpack.c.l.b16 %v502
      %v791 = vunpack.c.l.b16 %v503
      %v792 = vunpack.c.l.b16 %v504
      %v793 = vunpack.c.l.b16 %v505
      %v794 = vunpack.c.l.b16 %v506
      %v795 = vunpack.c.l.b16 %v507
      %v796 = vunpack.c.l.b16 %v508
      %v797 = vunpack.c.l.b16 %v509
      %v798 = vunpack.c.l.b16 %v510
      %v799 = vunpack.c.l.b16 %v511
      %v800 = vunpack.c.l.b16 %v512
      %v801 = vunpack.c.l.b16 %v513
      %v802 = vunpack.c.l.b16 %v514
      %v803 = vunpack.c.l.b16 %v515
      %v804 = vunpack.c.l.b16 %v516
      %v805 = vunpack.c.l.b16 %v517
      %v806 = vunpack.c.l.b16 %v518
      %v807 = vunpack.c.l.b16 %v519
      %v808 = vunpack.c.l.b16 %v520
      %v809 = vunpack.c.l.b16 %v521
      %v810 = vunpack.c.l.b16 %v522
      %v811 = vunpack.c.l.b16 %v523
      %v812 = vunpack.c.l.b16 %v524
      %v813 = vunpack.c.l.b16 %v525
      %v814 = vunpack.c.l.b16 %v526
      %v815 = vunpack.c.l.b16 %v527
      %v816 = vunpack.c.l.b16 %v528
      %v817 = vunpack.c.l.b16 %v529
      %v818 = vunpack.c.l.b16 %v530
      %v819 = vunpack.c.l.b16 %v531
      %v820 = vunpack.c.l.b16 %v532
      %v821 = vunpack.c.l.b16 %v533
      %v822 = vunpack.c.l.b16 %v534
      %v823 = vunpack.c.l.b16 %v535
      %v824 = vunpack.c.l.b16 %v536
      %v825 = vunpack.c.l.b16 %v537
      %v826 = vunpack.c.l.b16 %v538
      %v827 = vunpack.c.l.b16 %v539
      %v828 = vunpack.c.l.b16 %v540
      %v829 = vunpack.c.l.b16 %v541
      %v830 = vunpack.c.l.b16 %v542
      %v831 = vunpack.c.l.b16 %v543
      %v832 = vunpack.c.l.b16 %v544
      %v833 = vunpack.c.l.b16 %v545
      %v834 = vunpack.c.l.b16 %v546
      %v835 = vunpack.c.l.b16 %v547
      %v836 = vunpack.c.l.b16 %v548
      %v837 = vunpack.c.l.b16 %v549
      %v838 = vunpack.c.l.b16 %v550
      %v839 = vpack.c.b16 %v696, %v695
      %v840 = vpack.c.b16 %v698, %v697
      %v841 = vpack.c.b16 %v700, %v699
      %v842 = vpack.c.b16 %v702, %v701
      %v843 = vpack.c.b16 %v704, %v703
      %v844 = vpack.c.b16 %v706, %v705
      %v845 = vpack.c.b16 %v708, %v707
      %v846 = vpack.c.b16 %v710, %v709
      %v847 = vpack.c.b16 %v712, %v711
      %v848 = vpack.c.b16 %v714, %v713
      %v849 = vpack.c.b16 %v716, %v715
      %v850 = vpack.c.b16 %v718, %v717
      %v851 = vpack.c.b16 %v720, %v719
      %v852 = vpack.c.b16 %v722, %v721
      %v853 = vpack.c.b16 %v724, %v723
      %v854 = vpack.c.b16 %v726, %v725
      %v855 = vpack.c.b16 %v728, %v727
      %v856 = vpack.c.b16 %v730, %v729
      %v857 = vpack.c.b16 %v732, %v731
      %v858 = vpack.c.b16 %v734, %v733
      %v859 = vpack.c.b16 %v736, %v735
      %v860 = vpack.c.b16 %v738, %v737
      %v861 = vpack.c.b16 %v740, %v739
      %v862 = vpack.c.b16 %v742, %v741
      %v863 = vpack.c.b16 %v744, %v743
      %v864 = vpack.c.b16 %v746, %v745
      %v865 = vpack.c.b16 %v748, %v747
      %v866 = vpack.c.b16 %v750, %v749
      %v867 = vpack.c.b16 %v752, %v751
      %v868 = vpack.c.b16 %v754, %v753
      %v869 = vpack.c.b16 %v756, %v755
      %v870 = vpack.c.b16 %v758, %v757
      %v871 = vpack.c.b16 %v760, %v759
      %v872 = vpack.c.b16 %v762, %v761
      %v873 = vpack.c.b16 %v764, %v763
      %v874 = vpack.c.b16 %v766, %v765
      %v875 = vpack.c.b16 %v768, %v767
      %v876 = vpack.c.b16 %v770, %v769
      %v877 = vpack.c.b16 %v772, %v771
      %v878 = vpack.c.b16 %v774, %v773
      %v879 = vpack.c.b16 %v776, %v775
      %v880 = vpack.c.b16 %v778, %v777
      %v881 = vpack.c.b16 %v780, %v779
      %v882 = vpack.c.b16 %v782, %v781
      %v883 = vpack.c.b16 %v784, %v783
      %v884 = vpack.c.b16 %v786, %v785
      %v885 = vpack.c.b16 %v788, %v787
      %v886 = vpack.c.b16 %v790, %v789
      %v887 = vpack.c.b16 %v792, %v791
      %v888 = vpack.c.b16 %v794, %v793
      %v889 = vpack.c.b16 %v796, %v795
      %v890 = vpack.c.b16 %v798, %v797
      %v891 = vpack.c.b16 %v800, %v799
      %v892 = vpack.c.b16 %v802, %v801
      %v893 = vpack.c.b16 %v804, %v803
      %v894 = vpack.c.b16 %v806, %v805
      %v895 = vpack.c.b16 %v808, %v807
      %v896 = vpack.c.b16 %v810, %v809
      %v897 = vpack.c.b16 %v812, %v811
      %v898 = vpack.c.b16 %v814, %v813
      %v899 = vpack.c.b16 %v816, %v815
      %v900 = vpack.c.b16 %v818, %v817
      %v901 = vpack.c.b16 %v820, %v819
      %v902 = vpack.c.b16 %v822, %v821
      %v903 = vpack.c.b16 %v824, %v823
      %v904 = vpack.c.b16 %v826, %v825
      %v905 = vpack.c.b16 %v828, %v827
      %v906 = vpack.c.b16 %v830, %v829
      %v907 = vpack.c.b16 %v832, %v831
      %v908 = vpack.c.b16 %v834, %v833
      %v909 = vpack.c.b16 %v836, %v835
      %v910 = vpack.c.b16 %v838, %v837
      %983 = vmatprep.subr.bf16.mxu0 0
      %984 = vmatpush1.bf16.msra.mxu0 %v846
      %985 = vmatprep.subr.bf16.mxu0 0
      %986 = vmatpush1.bf16.msra.mxu0 %v845
      %987 = vmatprep.subr.bf16.mxu0 0
      %988 = vmatpush1.bf16.msra.mxu0 %v844
      %989 = vmatprep.subr.bf16.mxu0 0
      %990 = vmatpush1.bf16.msra.mxu0 %v843
      %991 = vmatprep.subr.bf16.mxu0 0
      %992 = vmatpush1.bf16.msra.mxu0 %v842
      %993 = vmatprep.subr.bf16.mxu0 0
      %994 = vmatpush1.bf16.msra.mxu0 %v841
      %995 = vmatprep.subr.bf16.mxu0 0
      %996 = vmatpush1.bf16.msra.mxu0 %v840
      %997 = vmatprep.subr.bf16.mxu0 0
      %998 = vmatpush1.bf16.msra.mxu0 %v839
      %999 = vmatprep.subr.bf16.mxu0 0
      %1000 = vmatpush2.bf16.msra.mxu0 %v854
      %1001 = vmatprep.subr.bf16.mxu0 0
      %1002 = vmatpush2.bf16.msra.mxu0 %v853
      %1003 = vmatprep.subr.bf16.mxu0 0
      %1004 = vmatpush2.bf16.msra.mxu0 %v852
      %1005 = vmatprep.subr.bf16.mxu0 0
      %1006 = vmatpush2.bf16.msra.mxu0 %v851
      %1007 = vmatprep.subr.bf16.mxu0 0
      %1008 = vmatpush2.bf16.msra.mxu0 %v850
      %1009 = vmatprep.subr.bf16.mxu0 0
      %1010 = vmatpush2.bf16.msra.mxu0 %v849
      %1011 = vmatprep.subr.bf16.mxu0 0
      %1012 = vmatpush2.bf16.msra.mxu0 %v848
      %1013 = vmatprep.subr.bf16.mxu0 0
      %1014 = vmatpush2.bf16.msra.mxu0 %v847
      %1015 = vmatprep.mubr.bf16.mxu0 %v399
      %1016 = vmatmul.mubr.bf16.gmra.mxu0 %v398
      %v1017 = vpop.f32.mrf.mxu0
      %v1018 = vadd.f32 0.0, %v1017
      %v1019 = vpop.f32.mrf.mxu0
      %v1020 = vpop.f32.mrf.mxu0
      %v1021 = vadd.f32 0.0, %v1020
      %v1022 = vpop.f32.mrf.mxu0
      %1023 = vdwg.mxu0
      %1024 = vmatprep.subr.bf16.mxu0 0
      %1025 = vmatpush1.bf16.msra.mxu0 %v862
      %1026 = vmatprep.subr.bf16.mxu0 0
      %1027 = vmatpush1.bf16.msra.mxu0 %v861
      %1028 = vmatprep.subr.bf16.mxu0 0
      %1029 = vmatpush1.bf16.msra.mxu0 %v860
      %1030 = vmatprep.subr.bf16.mxu0 0
      %1031 = vmatpush1.bf16.msra.mxu0 %v859
      %1032 = vmatprep.subr.bf16.mxu0 0
      %1033 = vmatpush1.bf16.msra.mxu0 %v858
      %1034 = vmatprep.subr.bf16.mxu0 0
      %1035 = vmatpush1.bf16.msra.mxu0 %v857
      %1036 = vmatprep.subr.bf16.mxu0 0
      %1037 = vmatpush1.bf16.msra.mxu0 %v856
      %1038 = vmatprep.subr.bf16.mxu0 0
      %1039 = vmatpush1.bf16.msra.mxu0 %v855
      %1040 = vmatprep.subr.bf16.mxu0 0
      %1041 = vmatpush2.bf16.msra.mxu0 %v870
      %1042 = vmatprep.subr.bf16.mxu0 0
      %1043 = vmatpush2.bf16.msra.mxu0 %v869
      %1044 = vmatprep.subr.bf16.mxu0 0
      %1045 = vmatpush2.bf16.msra.mxu0 %v868
      %1046 = vmatprep.subr.bf16.mxu0 0
      %1047 = vmatpush2.bf16.msra.mxu0 %v867
      %1048 = vmatprep.subr.bf16.mxu0 0
      %1049 = vmatpush2.bf16.msra.mxu0 %v866
      %1050 = vmatprep.subr.bf16.mxu0 0
      %1051 = vmatpush2.bf16.msra.mxu0 %v865
      %1052 = vmatprep.subr.bf16.mxu0 0
      %1053 = vmatpush2.bf16.msra.mxu0 %v864
      %1054 = vmatprep.subr.bf16.mxu0 0
      %1055 = vmatpush2.bf16.msra.mxu0 %v863
      %1056 = vmatprep.mubr.bf16.mxu0 %v401
      %1057 = vmatmul.mubr.bf16.gmra.mxu0 %v400
      %v1058 = vpop.f32.mrf.mxu0
      %v1059 = vadd.f32 %v1018, %v1058
      %v1060 = vpop.f32.mrf.mxu0
      %v1061 = vpop.f32.mrf.mxu0
      %v1062 = vadd.f32 %v1021, %v1061
      %v1063 = vpop.f32.mrf.mxu0
      %1064 = vdwg.mxu0
      %1065 = vmatprep.subr.bf16.mxu0 0
      %1066 = vmatpush1.bf16.msra.mxu0 %v878
      %1067 = vmatprep.subr.bf16.mxu0 0
      %1068 = vmatpush1.bf16.msra.mxu0 %v877
      %1069 = vmatprep.subr.bf16.mxu0 0
      %1070 = vmatpush1.bf16.msra.mxu0 %v876
      %1071 = vmatprep.subr.bf16.mxu0 0
      %1072 = vmatpush1.bf16.msra.mxu0 %v875
      %1073 = vmatprep.subr.bf16.mxu0 0
      %1074 = vmatpush1.bf16.msra.mxu0 %v874
      %1075 = vmatprep.subr.bf16.mxu0 0
      %1076 = vmatpush1.bf16.msra.mxu0 %v873
      %1077 = vmatprep.subr.bf16.mxu0 0
      %1078 = vmatpush1.bf16.msra.mxu0 %v872
      %1079 = vmatprep.subr.bf16.mxu0 0
      %1080 = vmatpush1.bf16.msra.mxu0 %v871
      %1081 = vmatprep.subr.bf16.mxu0 0
      %1082 = vmatpush2.bf16.msra.mxu0 %v886
      %1083 = vmatprep.subr.bf16.mxu0 0
      %1084 = vmatpush2.bf16.msra.mxu0 %v885
      %1085 = vmatprep.subr.bf16.mxu0 0
      %1086 = vmatpush2.bf16.msra.mxu0 %v884
      %1087 = vmatprep.subr.bf16.mxu0 0
      %1088 = vmatpush2.bf16.msra.mxu0 %v883
      %1089 = vmatprep.subr.bf16.mxu0 0
      %1090 = vmatpush2.bf16.msra.mxu0 %v882
      %1091 = vmatprep.subr.bf16.mxu0 0
      %1092 = vmatpush2.bf16.msra.mxu0 %v881
      %1093 = vmatprep.subr.bf16.mxu0 0
      %1094 = vmatpush2.bf16.msra.mxu0 %v880
      %1095 = vmatprep.subr.bf16.mxu0 0
      %1096 = vmatpush2.bf16.msra.mxu0 %v879
      %1097 = vmatprep.mubr.bf16.mxu0 %v403
      %1098 = vmatmul.mubr.bf16.gmra.mxu0 %v402
      %v1099 = vpop.f32.mrf.mxu0
      %v1100 = vadd.f32 %v1059, %v1099
      %v1101 = vpop.f32.mrf.mxu0
      %v1102 = vpop.f32.mrf.mxu0
      %v1103 = vadd.f32 %v1062, %v1102
      %v1104 = vpop.f32.mrf.mxu0
      %1105 = vdwg.mxu0
      %1106 = vmatprep.subr.bf16.mxu0 0
      %1107 = vmatpush1.bf16.msra.mxu0 %v894
      %1108 = vmatprep.subr.bf16.mxu0 0
      %1109 = vmatpush1.bf16.msra.mxu0 %v893
      %1110 = vmatprep.subr.bf16.mxu0 0
      %1111 = vmatpush1.bf16.msra.mxu0 %v892
      %1112 = vmatprep.subr.bf16.mxu0 0
      %1113 = vmatpush1.bf16.msra.mxu0 %v891
      %1114 = vmatprep.subr.bf16.mxu0 0
      %1115 = vmatpush1.bf16.msra.mxu0 %v890
      %1116 = vmatprep.subr.bf16.mxu0 0
      %1117 = vmatpush1.bf16.msra.mxu0 %v889
      %1118 = vmatprep.subr.bf16.mxu0 0
      %1119 = vmatpush1.bf16.msra.mxu0 %v888
      %1120 = vmatprep.subr.bf16.mxu0 0
      %1121 = vmatpush1.bf16.msra.mxu0 %v887
      %1122 = vmatprep.subr.bf16.mxu0 0
      %1123 = vmatpush2.bf16.msra.mxu0 %v902
      %1124 = vmatprep.subr.bf16.mxu0 0
      %1125 = vmatpush2.bf16.msra.mxu0 %v901
      %1126 = vmatprep.subr.bf16.mxu0 0
      %1127 = vmatpush2.bf16.msra.mxu0 %v900
      %1128 = vmatprep.subr.bf16.mxu0 0
      %1129 = vmatpush2.bf16.msra.mxu0 %v899
      %1130 = vmatprep.subr.bf16.mxu0 0
      %1131 = vmatpush2.bf16.msra.mxu0 %v898
      %1132 = vmatprep.subr.bf16.mxu0 0
      %1133 = vmatpush2.bf16.msra.mxu0 %v897
      %1134 = vmatprep.subr.bf16.mxu0 0
      %1135 = vmatpush2.bf16.msra.mxu0 %v896
      %1136 = vmatprep.subr.bf16.mxu0 0
      %1137 = vmatpush2.bf16.msra.mxu0 %v895
      %1138 = vmatprep.mubr.bf16.mxu0 %v405
      %1139 = vmatmul.mubr.bf16.gmra.mxu0 %v404
      %v1140 = vpop.f32.mrf.mxu0
      %v1141 = vadd.f32 %v1100, %v1140
      %v1142 = vpop.f32.mrf.mxu0
      %v1143 = vpop.f32.mrf.mxu0
      %v1144 = vadd.f32 %v1103, %v1143
      %v1145 = vpop.f32.mrf.mxu0
      %1146 = vdwg.mxu0
      %1147 = vmatprep.subr.bf16.mxu0 0
      %1148 = vmatpush1.bf16.msra.mxu0 %v910
      %1149 = vmatprep.subr.bf16.mxu0 0
      %1150 = vmatpush1.bf16.msra.mxu0 %v909
      %1151 = vmatprep.subr.bf16.mxu0 0
      %1152 = vmatpush1.bf16.msra.mxu0 %v908
      %1153 = vmatprep.subr.bf16.mxu0 0
      %1154 = vmatpush1.bf16.msra.mxu0 %v907
      %1155 = vmatprep.subr.bf16.mxu0 0
      %1156 = vmatpush1.bf16.msra.mxu0 %v906
      %1157 = vmatprep.subr.bf16.mxu0 0
      %1158 = vmatpush1.bf16.msra.mxu0 %v905
      %1159 = vmatprep.subr.bf16.mxu0 0
      %1160 = vmatpush1.bf16.msra.mxu0 %v904
      %1161 = vmatprep.subr.bf16.mxu0 0
      %1162 = vmatpush1.bf16.msra.mxu0 %v903
      %1163 = vmatprep.subr.bf16.mxu0 0
      %1164 = vmatpush2.bf16.msra.mxu0 0
      %1165 = vmatprep.subr.bf16.mxu0 0
      %1166 = vmatpush2.bf16.msra.mxu0 0
      %1167 = vmatprep.subr.bf16.mxu0 0
      %1168 = vmatpush2.bf16.msra.mxu0 0
      %1169 = vmatprep.subr.bf16.mxu0 0
      %1170 = vmatpush2.bf16.msra.mxu0 0
      %1171 = vmatprep.subr.bf16.mxu0 0
      %1172 = vmatpush2.bf16.msra.mxu0 0
      %1173 = vmatprep.subr.bf16.mxu0 0
      %1174 = vmatpush2.bf16.msra.mxu0 0
      %1175 = vmatprep.subr.bf16.mxu0 0
      %1176 = vmatpush2.bf16.msra.mxu0 0
      %1177 = vmatprep.subr.bf16.mxu0 0
      %1178 = vmatpush2.bf16.msra.mxu0 0
      %1179 = vmatprep.mubr.bf16.mxu0 0
      %1180 = vmatmul.mubr.bf16.gmra.mxu0 %v406
      %v1181 = vpop.f32.mrf.mxu0
      %v1182 = vadd.f32 %v1141, %v1181
      %v1183 = vpop.f32.mrf.mxu0
      %v1184 = vpop.f32.mrf.mxu0
      %v1185 = vadd.f32 %v1144, %v1184
      %v1186 = vpop.f32.mrf.mxu0
      %1187 = vdwg.mxu0
      %v1188 = vpack.c.bf16 %v1185, %v1182
      %v1190 = vunpack.c.l.b16 %v1188
      %v1191 = vunpack.c.h.b16 %v1188
      %v1192 = vpack.c.b16 %v1190, %v1190
      %v1193 = vpack.c.b16 %v1191, %v1191
      %1196 = vst [vmem:[%s177] sm:$0xf] %v1192
      %1197 = vst [vmem:[%s177 + $0x4] sm:$0xf] %v1193
      %v1198 = vadd.f32 %v1182, %v1185
      %v1199 = vrot.slane %v1198, 4
      %v1200 = vadd.f32 %v1198, %v1199
      %v1201 = vrot.slane %v1200, 2
      %v1202 = vadd.f32 %v1200, %v1201
      %v1203 = vrot.slane %v1202, 1
      %v1204 = vadd.f32 %v1202, %v1203
      %1205 = vst [vmem:[%s181] sm:$0x1] %v1204
      %v1206 = vmul.f32 %v1182, %v1182
      %v1207 = vmul.f32 %v1185, %v1185
      %v1208 = vadd.f32 %v1206, %v1207
      %v1209 = vrot.slane %v1208, 4
      %v1210 = vadd.f32 %v1208, %v1209
      %v1211 = vrot.slane %v1210, 2
      %v1212 = vadd.f32 %v1210, %v1211
      %v1213 = vrot.slane %v1212, 1
      %v1214 = vadd.f32 %v1212, %v1213
      %1215 = vst [vmem:[%s181 + $0x1] sm:$0x1] %v1214
      %p1216 = scmp.lt.s32.totalorder %s15, 1
      %s1217 = scalar_select %p1216, %s15, 1
      %s1218 = smul.addr %s1217, 2
      %s1219 = smul.addr %s1218, 4
      %s1220 = scalar_lea.vmem %s2, %s1219
      %p1221 = scmp.lt.s32.totalorder %s15, 1
      %s1222 = scalar_select %p1221, %s15, 1
      %s1223 = smul.addr %s1222, 2
      %s1224 = scalar_lea.vmem %s3, %s1223
      // Predicated region
      $region29: #{incept_b_forward.7} parent=27 // pred_check
        %p1225 = pneg %p80
      $region30: #{incept_b_forward.7} parent=27 // pred_check_branch
        %1227 = sbr.rel (%p1225) target = $region32
      $region31: #{incept_b_forward.7} parent=27 // pred_region
        _
      $region32: #{incept_b_forward.7} parent=27 // pred_fallthru
        _
      // Predicated region
      $region33: #{incept_b_forward.7} parent=27 // pred_check
        %p1228 = pneg %p106
      $region34: #{incept_b_forward.7} parent=27 // pred_check_branch
        %1230 = sbr.rel (%p1228) target = $region36
      $region35: #{incept_b_forward.7} parent=27 // pred_region
        _
      $region36: #{incept_b_forward.7} parent=27 // pred_fallthru
        _
    $region28: #{incept_b_forward.7} parent=5 // pred_fallthru
      _
    %p1231 = scmp.le.s32.totalorder 2, %s10
    // Predicated region
    $region37: #{incept_b_forward.7} parent=5 // pred_check
      %p1232 = pneg %p1231
    $region38: #{incept_b_forward.7} parent=5 // pred_check_branch
      %1234 = sbr.rel (%p1232) target = $region40
    $region39: #{incept_b_forward.7} parent=5 // pred_region
      %s1235 = ssub.s32 %s10, 2
      // Predicated region
      $region41: #{incept_b_forward.7} parent=39 // pred_check
        %p1236 = pneg %p86
      $region42: #{incept_b_forward.7} parent=39 // pred_check_branch
        %1238 = sbr.rel (%p1236) target = $region44
      $region43: #{incept_b_forward.7} parent=39 // pred_region
        %p1239 = scmp.lt.s32.totalorder %s16, 1
        %s1240 = scalar_select %p1239, %s16, 1
        %s1241 = smul.addr %s1240, 2
        %s1242 = smul.addr %s1241, 4
        %s1243 = scalar_lea.vmem %s2, %s1242
      $region44: #{incept_b_forward.7} parent=39 // pred_fallthru
        _
      // Predicated region
      $region45: #{incept_b_forward.7} parent=39 // pred_check
        %p1244 = pneg %p112
      $region46: #{incept_b_forward.7} parent=39 // pred_check_branch
        %1246 = sbr.rel (%p1244) target = $region48
      $region47: #{incept_b_forward.7} parent=39 // pred_region
        %p1247 = scmp.lt.s32.totalorder %s16, 1
        %s1248 = scalar_select %p1247, %s16, 1
        %s1249 = smul.addr %s1248, 2
        %s1250 = scalar_lea.vmem %s3, %s1249
      $region48: #{incept_b_forward.7} parent=39 // pred_fallthru
        _
    $region40: #{incept_b_forward.7} parent=5 // pred_fallthru
      _
  $region6: #{incept_b_forward.7} parent=0 // loop_footer
    %s14 = sadd.s32 1, %s10
  $region7: #{incept_b_forward.7} parent=0 // loop_footer_branch
    %9 = sbr.rel target = $region3
  $region8: #{incept_b_forward.7} parent=0 // loop_exit
    _

// kernel: incept_b_forward.9
$region0: #{incept_b_forward.9}
  #allocation0 [shape = 'u32[]', space=smem, size = 0x4, offset = 0x4, fixed_abs, tag = 'smem constant byte address 0x4 - core index']
  #allocation1 [shape = 'u32[144,128]{1,0:T(1,128)}', space=vmem, size = 0x12000, scoped, tag = 'internal scratch']
  %s0 = inlined_call_operand.vmem [shape: bf16[32,384], index: 0, kind: input, shape index: {}]
  %s1 = inlined_call_operand.vmem [shape: bf16[32,384], index: 1, kind: input, shape index: {}]
  %s2 = inlined_call_operand.vmem [shape: f32[2,384], index: 2, kind: input, shape index: {}]
  %s3 = inlined_call_operand.vmem [shape: f32[2,384], index: 3, kind: input, shape index: {}]
  %s4 = inlined_call_operand.vmem [shape: f32[32,768], index: 4, kind: output, shape index: {}]
  %s5 = sld [smem:[#allocation0]]
  $region26: #{incept_b_forward.9} parent=0
    _
  %s7 = ssub.s32 1, %s5
  %s8 = scalar_select 0, %s7, %s5
  // Predicated region
  $region2: #{incept_b_forward.9} parent=0 // pred_check
    _
  $region3: #{incept_b_forward.9} parent=0 // pred_check_branch
    %10 = sbr.rel (0) target = $region5
  $region4: #{incept_b_forward.9} parent=0 // pred_region
    _
  $region5: #{incept_b_forward.9} parent=0 // pred_fallthru
    _
  // Predicated region
  $region6: #{incept_b_forward.9} parent=0 // pred_check
    _
  $region7: #{incept_b_forward.9} parent=0 // pred_check_branch
    %12 = sbr.rel (0) target = $region9
  $region8: #{incept_b_forward.9} parent=0 // pred_region
    _
  $region9: #{incept_b_forward.9} parent=0 // pred_fallthru
    _
  // Predicated region
  $region10: #{incept_b_forward.9} parent=0 // pred_check
    _
  $region11: #{incept_b_forward.9} parent=0 // pred_check_branch
    %14 = sbr.rel (0) target = $region13
  $region12: #{incept_b_forward.9} parent=0 // pred_region
    _
  $region13: #{incept_b_forward.9} parent=0 // pred_fallthru
    _
  // Predicated region
  $region14: #{incept_b_forward.9} parent=0 // pred_check
    _
  $region15: #{incept_b_forward.9} parent=0 // pred_check_branch
    %16 = sbr.rel (0) target = $region17
  $region16: #{incept_b_forward.9} parent=0 // pred_region
    _
  $region17: #{incept_b_forward.9} parent=0 // pred_fallthru
    _
  %v17 = vld [vmem:[%s0] sm:$0xff]
  %v18 = vld [vmem:[%s0 + $0x8] sm:$0xf]
  %v19 = vld [vmem:[%s0 + $0xc] sm:$0xff]
  %v20 = vld [vmem:[%s0 + $0x14] sm:$0xf]
  %v21 = vld [vmem:[%s0 + $0x18] sm:$0xff]
  %v22 = vld [vmem:[%s0 + $0x20] sm:$0xf]
  %v23 = vld [vmem:[%s0 + $0x24] sm:$0xff]
  %v24 = vld [vmem:[%s0 + $0x2c] sm:$0xf]
  %v25 = vunpack.c.l.bf16 %v17
  %v26 = vunpack.c.h.bf16 %v17
  %v27 = vunpack.c.l.bf16 %v18
  %v28 = vunpack.c.l.bf16 %v19
  %v29 = vunpack.c.h.bf16 %v19
  %v30 = vunpack.c.l.bf16 %v20
  %v31 = vunpack.c.l.bf16 %v21
  %v32 = vunpack.c.h.bf16 %v21
  %v33 = vunpack.c.l.bf16 %v22
  %v34 = vunpack.c.l.bf16 %v23
  %v35 = vunpack.c.h.bf16 %v23
  %v36 = vunpack.c.l.bf16 %v24
  %v37 = vld [vmem:[%s2] ss:$2 sm:$0x7]
  %v39 = vlaneseq
  %v40 = vshrl.u32 %v39, 7
  %v41 = vsub.s32 0, %v40
  %v42 = vrot.slane %v37, %v41
  %v43 = vlaneseq
  %v44 = vshrl.u32 %v43, 7
  %v45 = vsub.s32 1, %v44
  %v46 = vrot.slane %v37, %v45
  %v47 = vlaneseq
  %v48 = vshrl.u32 %v47, 7
  %v49 = vsub.s32 2, %v48
  %v50 = vrot.slane %v37, %v49
  %v54 = vmul.f32 %v25, %v42
  %v55 = vmul.f32 %v26, %v46
  %v56 = vmul.f32 %v27, %v50
  %v57 = vmul.f32 %v28, %v42
  %v58 = vmul.f32 %v29, %v46
  %v59 = vmul.f32 %v30, %v50
  %v60 = vmul.f32 %v31, %v42
  %v61 = vmul.f32 %v32, %v46
  %v62 = vmul.f32 %v33, %v50
  %v63 = vmul.f32 %v34, %v42
  %v64 = vmul.f32 %v35, %v46
  %v65 = vmul.f32 %v36, %v50
  %s66 = scalar_lea.vmem %s2, 1
  %v67 = vld [vmem:[%s66] ss:$2 sm:$0x7]
  %v69 = vlaneseq
  %v70 = vshrl.u32 %v69, 7
  %v71 = vsub.s32 0, %v70
  %v72 = vrot.slane %v67, %v71
  %v73 = vlaneseq
  %v74 = vshrl.u32 %v73, 7
  %v75 = vsub.s32 1, %v74
  %v76 = vrot.slane %v67, %v75
  %v77 = vlaneseq
  %v78 = vshrl.u32 %v77, 7
  %v79 = vsub.s32 2, %v78
  %v80 = vrot.slane %v67, %v79
  %v84 = vadd.f32 %v54, %v72
  %v85 = vadd.f32 %v55, %v76
  %v86 = vadd.f32 %v56, %v80
  %v87 = vadd.f32 %v57, %v72
  %v88 = vadd.f32 %v58, %v76
  %v89 = vadd.f32 %v59, %v80
  %v90 = vadd.f32 %v60, %v72
  %v91 = vadd.f32 %v61, %v76
  %v92 = vadd.f32 %v62, %v80
  %v93 = vadd.f32 %v63, %v72
  %v94 = vadd.f32 %v64, %v76
  %v95 = vadd.f32 %v65, %v80
  %96 = vst [vmem:[%s4] sm:$0xff] %v84
  %97 = vst [vmem:[%s4 + $0x8] sm:$0xff] %v85
  %98 = vst [vmem:[%s4 + $0x10] sm:$0xff] %v86
  %99 = vst [vmem:[%s4 + $0x30] sm:$0xff] %v87
  %100 = vst [vmem:[%s4 + $0x38] sm:$0xff] %v88
  %101 = vst [vmem:[%s4 + $0x40] sm:$0xff] %v89
  %102 = vst [vmem:[%s4 + $0x60] sm:$0xff] %v90
  %103 = vst [vmem:[%s4 + $0x68] sm:$0xff] %v91
  %104 = vst [vmem:[%s4 + $0x70] sm:$0xff] %v92
  %105 = vst [vmem:[%s4 + $0x90] sm:$0xff] %v93
  %106 = vst [vmem:[%s4 + $0x98] sm:$0xff] %v94
  %107 = vst [vmem:[%s4 + $0xa0] sm:$0xff] %v95
  %v108 = vld [vmem:[%s1] sm:$0xff]
  %v109 = vld [vmem:[%s1 + $0x8] sm:$0xf]
  %v110 = vld [vmem:[%s1 + $0xc] sm:$0xff]
  %v111 = vld [vmem:[%s1 + $0x14] sm:$0xf]
  %v112 = vld [vmem:[%s1 + $0x18] sm:$0xff]
  %v113 = vld [vmem:[%s1 + $0x20] sm:$0xf]
  %v114 = vld [vmem:[%s1 + $0x24] sm:$0xff]
  %v115 = vld [vmem:[%s1 + $0x2c] sm:$0xf]
  %v116 = vunpack.c.l.bf16 %v108
  %v117 = vunpack.c.h.bf16 %v108
  %v118 = vunpack.c.l.bf16 %v109
  %v119 = vunpack.c.l.bf16 %v110
  %v120 = vunpack.c.h.bf16 %v110
  %v121 = vunpack.c.l.bf16 %v111
  %v122 = vunpack.c.l.bf16 %v112
  %v123 = vunpack.c.h.bf16 %v112
  %v124 = vunpack.c.l.bf16 %v113
  %v125 = vunpack.c.l.bf16 %v114
  %v126 = vunpack.c.h.bf16 %v114
  %v127 = vunpack.c.l.bf16 %v115
  %v128 = vld [vmem:[%s3] ss:$2 sm:$0x7]
  %v130 = vlaneseq
  %v131 = vshrl.u32 %v130, 7
  %v132 = vsub.s32 0, %v131
  %v133 = vrot.slane %v128, %v132
  %v134 = vlaneseq
  %v135 = vshrl.u32 %v134, 7
  %v136 = vsub.s32 1, %v135
  %v137 = vrot.slane %v128, %v136
  %v138 = vlaneseq
  %v139 = vshrl.u32 %v138, 7
  %v140 = vsub.s32 2, %v139
  %v141 = vrot.slane %v128, %v140
  %v145 = vmul.f32 %v116, %v133
  %v146 = vmul.f32 %v117, %v137
  %v147 = vmul.f32 %v118, %v141
  %v148 = vmul.f32 %v119, %v133
  %v149 = vmul.f32 %v120, %v137
  %v150 = vmul.f32 %v121, %v141
  %v151 = vmul.f32 %v122, %v133
  %v152 = vmul.f32 %v123, %v137
  %v153 = vmul.f32 %v124, %v141
  %v154 = vmul.f32 %v125, %v133
  %v155 = vmul.f32 %v126, %v137
  %v156 = vmul.f32 %v127, %v141
  %s157 = scalar_lea.vmem %s3, 1
  %v158 = vld [vmem:[%s157] ss:$2 sm:$0x7]
  %v160 = vlaneseq
  %v161 = vshrl.u32 %v160, 7
  %v162 = vsub.s32 0, %v161
  %v163 = vrot.slane %v158, %v162
  %v164 = vlaneseq
  %v165 = vshrl.u32 %v164, 7
  %v166 = vsub.s32 1, %v165
  %v167 = vrot.slane %v158, %v166
  %v168 = vlaneseq
  %v169 = vshrl.u32 %v168, 7
  %v170 = vsub.s32 2, %v169
  %v171 = vrot.slane %v158, %v170
  %v175 = vadd.f32 %v145, %v163
  %v176 = vadd.f32 %v146, %v167
  %v177 = vadd.f32 %v147, %v171
  %v178 = vadd.f32 %v148, %v163
  %v179 = vadd.f32 %v149, %v167
  %v180 = vadd.f32 %v150, %v171
  %v181 = vadd.f32 %v151, %v163
  %v182 = vadd.f32 %v152, %v167
  %v183 = vadd.f32 %v153, %v171
  %v184 = vadd.f32 %v154, %v163
  %v185 = vadd.f32 %v155, %v167
  %v186 = vadd.f32 %v156, %v171
  %187 = vst [vmem:[%s4 + $0x18] sm:$0xff] %v175
  %188 = vst [vmem:[%s4 + $0x20] sm:$0xff] %v176
  %189 = vst [vmem:[%s4 + $0x28] sm:$0xff] %v177
  %190 = vst [vmem:[%s4 + $0x48] sm:$0xff] %v178
  %191 = vst [vmem:[%s4 + $0x50] sm:$0xff] %v179
  %192 = vst [vmem:[%s4 + $0x58] sm:$0xff] %v180
  %193 = vst [vmem:[%s4 + $0x78] sm:$0xff] %v181
  %194 = vst [vmem:[%s4 + $0x80] sm:$0xff] %v182
  %195 = vst [vmem:[%s4 + $0x88] sm:$0xff] %v183
  %196 = vst [vmem:[%s4 + $0xa8] sm:$0xff] %v184
  %197 = vst [vmem:[%s4 + $0xb0] sm:$0xff] %v185
  %198 = vst [vmem:[%s4 + $0xb8] sm:$0xff] %v186
  // Predicated region
  $region18: #{incept_b_forward.9} parent=0 // pred_check
    _
  $region19: #{incept_b_forward.9} parent=0 // pred_check_branch
    %200 = sbr.rel (0) target = $region21
  $region20: #{incept_b_forward.9} parent=0 // pred_region
    _
  $region21: #{incept_b_forward.9} parent=0 // pred_fallthru
    _
  // Predicated region
  $region22: #{incept_b_forward.9} parent=0 // pred_check
    _
  $region23: #{incept_b_forward.9} parent=0 // pred_check_branch
    %202 = sbr.rel (0) target = $region25
  $region24: #{incept_b_forward.9} parent=0 // pred_region
    _
  $region25: #{incept_b_forward.9} parent=0 // pred_fallthru
    _

// kernel: incept_b_forward.5
$region0: #{incept_b_forward.5}
  #allocation0 [shape = 'u32[]', space=smem, size = 0x4, offset = 0x4, fixed_abs, tag = 'smem constant byte address 0x4 - core index']
  #allocation1 [shape = 'u32[144,128]{1,0:T(1,128)}', space=vmem, size = 0x12000, scoped, tag = 'internal scratch']
  #allocation2 [shape = 'f32[16,144]{1,0:T(8,128)}', space=vmem, size = 0x4000, scoped, tag = 'scratch operand']
  %s0 = inlined_call_operand.vmem [shape: f32[2,2,2,5,5,16], index: 0, kind: input, shape index: {}]
  %s1 = inlined_call_operand.vmem [shape: bf16[144,384], index: 1, kind: input, shape index: {}]
  %s2 = inlined_call_operand.vmem [shape: bf16[2,16,384], index: 2, kind: output, shape index: {0}]
  %s3 = inlined_call_operand.vmem [shape: f32[2,2,384], index: 3, kind: output, shape index: {1}]
  %s4 = inlined_call_operand.vmem [shape: f32[2,4,4,16], index: 4, kind: output, shape index: {2}]
  %5 = xla_tuple %s2, %s3, %s4
  %s6 = sld [smem:[#allocation0]]
  $region57: #{incept_b_forward.5} parent=0
    _
  %s8 = ssub.s32 1, %s6
  %s9 = scalar_select 0, %s8, %s6
  loop: start=0, step=1, limit=4
  $region2: #{incept_b_forward.5} parent=0 // loop_pre_header
    _
  $region3: #{incept_b_forward.5} parent=0 // loop_header
    %s11 = sphi 0, %s15
    %p12 = scmp.ge.s32.totalorder %s11, 4
    %s21 = sphi 0, %s23
    %s24 = sphi 0, %s21
    %s25 = sphi 0, %s24
    %s41 = sphi 0, %s25
    %s45 = sphi 0, %s45
    %s47 = sphi 0, %s45
    %s48 = sphi 0, %s47
    %s62 = sphi 0, %s48
    %s68 = sphi 0, %s70
    %s71 = sphi 0, %s68
    %s72 = sphi 0, %s71
    %s88 = sphi 0, %s72
    %s94 = sphi 0, %s96
    %s97 = sphi 0, %s94
    %s98 = sphi 0, %s97
    %s114 = sphi 0, %s98
    %s120 = sphi 0, %s122
    %s123 = sphi 0, %s120
    %s124 = sphi 0, %s123
    %s140 = sphi 0, %s124
  $region4: #{incept_b_forward.5} parent=0 // loop_header_branch
    %14 = sbr.rel (%p12) target = $region8
  $region5: #{incept_b_forward.5} parent=0 // loop_body
    %s16 = ssub.s32 %s11, 1
    %s17 = ssub.s32 %s11, 2
    %s18 = sadd.s32 %s11, 1
    %s19 = ssub.s32 %s11, %s18
    %p20 = scmp.eq.s32.totalorder %s19, 0
    %s22 = sadd.s32 %s21, 1
    %s23 = scalar_select %p20, %s21, %s22
    %p26 = pneg %p20
    %p27 = scmp.eq.s32.totalorder %s11, 1
    %p28 = por %p26, %p27
    %p29 = scmp.ne.s32.totalorder %s21, %s24
    %p30 = scmp.eq.s32.totalorder %s11, 0
    %p31 = por %p29, %p30
    %p32 = scmp.ne.s32.totalorder %s21, %s24
    %p33 = scmp.eq.s32.totalorder %s16, 1
    %p34 = por %p32, %p33
    %p35 = scmp.ne.s32.totalorder %s24, %s25
    %p36 = scmp.eq.s32.totalorder %s16, 0
    %p37 = por %p35, %p36
    %p38 = scmp.ne.s32.totalorder %s24, %s25
    %p39 = scmp.eq.s32.totalorder %s17, 1
    %p40 = por %p38, %p39
    %p42 = scmp.ne.s32.totalorder %s25, %s41
    %p43 = scmp.eq.s32.totalorder %s17, 0
    %p44 = por %p42, %p43
    %s46 = sadd.s32 %s45, 1
    %p49 = scmp.eq.s32.totalorder %s11, 1
    %p50 = scmp.ne.s32.totalorder %s45, %s47
    %p51 = scmp.eq.s32.totalorder %s11, 0
    %p52 = por %p50, %p51
    %p53 = scmp.ne.s32.totalorder %s45, %s47
    %p54 = scmp.eq.s32.totalorder %s16, 1
    %p55 = por %p53, %p54
    %p56 = scmp.ne.s32.totalorder %s47, %s48
    %p57 = scmp.eq.s32.totalorder %s16, 0
    %p58 = por %p56, %p57
    %p59 = scmp.ne.s32.totalorder %s47, %s48
    %p60 = scmp.eq.s32.totalorder %s17, 1
    %p61 = por %p59, %p60
    %p63 = scmp.ne.s32.totalorder %s48, %s62
    %p64 = scmp.eq.s32.totalorder %s17, 0
    %p65 = por %p63, %p64
    %s66 = ssub.s32 %s11, %s18
    %p67 = scmp.eq.s32.totalorder %s66, 0
    %s69 = sadd.s32 %s68, 1
    %s70 = scalar_select %p67, %s68, %s69
    %p73 = pneg %p67
    %p74 = scmp.eq.s32.totalorder %s11, 1
    %p75 = por %p73, %p74
    %p76 = scmp.ne.s32.totalorder %s68, %s71
    %p77 = scmp.eq.s32.totalorder %s11, 0
    %p78 = por %p76, %p77
    %p79 = scmp.ne.s32.totalorder %s68, %s71
    %p80 = scmp.eq.s32.totalorder %s16, 1
    %p81 = por %p79, %p80
    %p82 = scmp.ne.s32.totalorder %s71, %s72
    %p83 = scmp.eq.s32.totalorder %s16, 0
    %p84 = por %p82, %p83
    %p85 = scmp.ne.s32.totalorder %s71, %s72
    %p86 = scmp.eq.s32.totalorder %s17, 1
    %p87 = por %p85, %p86
    %p89 = scmp.ne.s32.totalorder %s72, %s88
    %p90 = scmp.eq.s32.totalorder %s17, 0
    %p91 = por %p89, %p90
    %s92 = ssub.s32 %s11, %s18
    %p93 = scmp.eq.s32.totalorder %s92, 0
    %s95 = sadd.s32 %s94, 1
    %s96 = scalar_select %p93, %s94, %s95
    %p99 = pneg %p93
    %p100 = scmp.eq.s32.totalorder %s11, 1
    %p101 = por %p99, %p100
    %p102 = scmp.ne.s32.totalorder %s94, %s97
    %p103 = scmp.eq.s32.totalorder %s11, 0
    %p104 = por %p102, %p103
    %p105 = scmp.ne.s32.totalorder %s94, %s97
    %p106 = scmp.eq.s32.totalorder %s16, 1
    %p107 = por %p105, %p106
    %p108 = scmp.ne.s32.totalorder %s97, %s98
    %p109 = scmp.eq.s32.totalorder %s16, 0
    %p110 = por %p108, %p109
    %p111 = scmp.ne.s32.totalorder %s97, %s98
    %p112 = scmp.eq.s32.totalorder %s17, 1
    %p113 = por %p111, %p112
    %p115 = scmp.ne.s32.totalorder %s98, %s114
    %p116 = scmp.eq.s32.totalorder %s17, 0
    %p117 = por %p115, %p116
    %s118 = ssub.s32 %s11, %s18
    %p119 = scmp.eq.s32.totalorder %s118, 0
    %s121 = sadd.s32 %s120, 1
    %s122 = scalar_select %p119, %s120, %s121
    %p125 = pneg %p119
    %p126 = scmp.eq.s32.totalorder %s11, 1
    %p127 = por %p125, %p126
    %p128 = scmp.ne.s32.totalorder %s120, %s123
    %p129 = scmp.eq.s32.totalorder %s11, 0
    %p130 = por %p128, %p129
    %p131 = scmp.ne.s32.totalorder %s120, %s123
    %p132 = scmp.eq.s32.totalorder %s16, 1
    %p133 = por %p131, %p132
    %p134 = scmp.ne.s32.totalorder %s123, %s124
    %p135 = scmp.eq.s32.totalorder %s16, 0
    %p136 = por %p134, %p135
    %p137 = scmp.ne.s32.totalorder %s123, %s124
    %p138 = scmp.eq.s32.totalorder %s17, 1
    %p139 = por %p137, %p138
    %p141 = scmp.ne.s32.totalorder %s124, %s140
    %p142 = scmp.eq.s32.totalorder %s17, 0
    %p143 = por %p141, %p142
    %p144 = scmp.le.s32.totalorder 1, %s11
    %p145 = scmp.lt.s32.totalorder %s11, 3
    %p146 = pnand %p144, %p145
    %p147 = pneg %p146
    // Predicated region
    $region9: #{incept_b_forward.5} parent=5 // pred_check
      _
    $region10: #{incept_b_forward.5} parent=5 // pred_check_branch
      %149 = sbr.rel (%p146) target = $region12
    $region11: #{incept_b_forward.5} parent=5 // pred_region
      %s150 = ssub.s32 %s11, 1
      // Predicated region
      $region13: #{incept_b_forward.5} parent=11 // pred_check
        %p151 = pneg %p58
      $region14: #{incept_b_forward.5} parent=11 // pred_check_branch
        %153 = sbr.rel (%p151) target = $region16
      $region15: #{incept_b_forward.5} parent=11 // pred_region
        _
      $region16: #{incept_b_forward.5} parent=11 // pred_fallthru
        _
    $region12: #{incept_b_forward.5} parent=5 // pred_fallthru
      _
    %p154 = scmp.lt.s32.totalorder %s11, 2
    // Predicated region
    $region17: #{incept_b_forward.5} parent=5 // pred_check
      %p155 = pneg %p154
    $region18: #{incept_b_forward.5} parent=5 // pred_check_branch
      %157 = sbr.rel (%p155) target = $region20
    $region19: #{incept_b_forward.5} parent=5 // pred_region
      // Predicated region
      $region21: #{incept_b_forward.5} parent=19 // pred_check
        %p158 = pneg %p31
      $region22: #{incept_b_forward.5} parent=19 // pred_check_branch
        %160 = sbr.rel (%p158) target = $region24
      $region23: #{incept_b_forward.5} parent=19 // pred_region
        %p161 = scmp.lt.s32.totalorder %s11, 1
        %s162 = scalar_select %p161, %s11, 1
        %s163 = smul.addr %s162, 20
        %s164 = smul.addr %s163, 8
        %s165 = scalar_lea.vmem %s0, %s164
      $region24: #{incept_b_forward.5} parent=19 // pred_fallthru
        _
    $region20: #{incept_b_forward.5} parent=5 // pred_fallthru
      _
    %p166 = scmp.le.s32.totalorder 1, %s11
    %p167 = scmp.lt.s32.totalorder %s11, 3
    %p168 = pnand %p166, %p167
    %p169 = pneg %p168
    // Predicated region
    $region25: #{incept_b_forward.5} parent=5 // pred_check
      _
    $region26: #{incept_b_forward.5} parent=5 // pred_check_branch
      %171 = sbr.rel (%p168) target = $region28
    $region27: #{incept_b_forward.5} parent=5 // pred_region
      %s172 = ssub.s32 %s11, 1
      %p173 = scmp.lt.s32.totalorder %s16, 1
      %s174 = scalar_select %p173, %s16, 1
      %s175 = smul.addr %s174, 20
      %s176 = smul.addr %s175, 8
      %s177 = scalar_lea.vmem %s0, %s176
      %p178 = pneg %p37
      %p179 = pneg %p34
      %p180 = pneg %p58
      %p181 = pneg %p55
      %p182 = pneg %p84
      %p183 = pneg %p81
      %p184 = scmp.lt.s32.totalorder %s16, 1
      %s185 = scalar_select %p184, %s16, 1
      %s186 = smul.addr %s185, 6
      %s187 = smul.addr %s186, 4
      %s188 = scalar_lea.vmem %s2, %s187
      %p189 = pneg %p110
      %p190 = pneg %p107
      %p191 = scmp.lt.s32.totalorder %s16, 1
      %s192 = scalar_select %p191, %s16, 1
      %s193 = smul.addr %s192, 3
      %s194 = smul.addr %s193, 2
      %s195 = scalar_lea.vmem %s3, %s194
      %p196 = pneg %p136
      %p197 = pneg %p133
      %p198 = scmp.lt.s32.totalorder %s16, 1
      %s199 = scalar_select %p198, %s16, 1
      %s200 = smul.addr %s199, 4
      %s201 = smul.addr %s200, 4
      %s202 = scalar_lea.vmem %s4, %s201
      %p203 = scmp.lt.s32.totalorder %s16, 1
      %s204 = scalar_select %p203, %s16, 1
      %s205 = smul.addr %s204, 20
      %s206 = smul.addr %s205, 8
      %s207 = scalar_lea.vmem %s0, %s206
      %p208 = scmp.lt.s32.totalorder %s16, 1
      %s209 = scalar_select %p208, %s16, 1
      %s210 = smul.addr %s209, 6
      %s211 = smul.addr %s210, 4
      %s212 = scalar_lea.vmem %s2, %s211
      %p213 = scmp.lt.s32.totalorder %s16, 1
      %s214 = scalar_select %p213, %s16, 1
      %s215 = smul.addr %s214, 3
      %s216 = smul.addr %s215, 2
      %s217 = scalar_lea.vmem %s3, %s216
      %p218 = scmp.lt.s32.totalorder %s16, 1
      %s219 = scalar_select %p218, %s16, 1
      %s220 = smul.addr %s219, 4
      %s221 = smul.addr %s220, 4
      %s222 = scalar_lea.vmem %s4, %s221
      %v224 = vld [vmem:[%s207] sm:$0xf]
      %vm225 = vcmask 125952
      %226 = vst.msk [vmem:[#allocation2] sm:$0xf] %vm225, %v224
      %s227 = scalar_lea.vmem %s207, 40
      %v228 = vld [vmem:[%s227] sm:$0xf]
      %230 = vrot.lane.b32.xlu0 %v228, 16
      %v231 = vpop.permute.xlu0 %230
      %vm233 = vcmask 257152
      %234 = vst.msk [vmem:[#allocation2] sm:$0xf] %vm233, %v231
      %v235 = vld [vmem:[%s207 + $0x1] sm:$0xf]
      %237 = vrot.lane.b32.xlu0 %v235, 32
      %v238 = vpop.permute.xlu0 %237
      %vm240 = vcmask 388352
      %241 = vst.msk [vmem:[#allocation2] sm:$0xf] %vm240, %v238
      %s242 = scalar_lea.vmem %s207, 80
      %v243 = vld [vmem:[%s242] sm:$0xf]
      %245 = vrot.lane.b32.xlu0 %v243, 48
      %v246 = vpop.permute.xlu0 %245
      %vm248 = vcmask 519552
      %249 = vst.msk [vmem:[#allocation2] sm:$0xf] %vm248, %v246
      %s250 = scalar_lea.vmem %s207, 120
      %v251 = vld [vmem:[%s250] sm:$0xf]
      %253 = vrot.lane.b32.xlu0 %v251, 64
      %v254 = vpop.permute.xlu0 %253
      %vm256 = vcmask 650752
      %257 = vst.msk [vmem:[#allocation2] sm:$0xf] %vm256, %v254
      %v258 = vld [vmem:[%s242 + $0x1] sm:$0xf]
      %260 = vrot.lane.b32.xlu0 %v258, 80
      %v261 = vpop.permute.xlu0 %260
      %vm263 = vcmask 781952
      %264 = vst.msk [vmem:[#allocation2] sm:$0xf] %vm263, %v261
      %s265 = scalar_lea.vmem %s207, 8
      %v266 = vld [vmem:[%s265] sm:$0xf]
      %268 = vrot.lane.b32.xlu0 %v266, 96
      %v269 = vpop.permute.xlu0 %268
      %vm271 = vcmask 913152
      %272 = vst.msk [vmem:[#allocation2] sm:$0xf] %vm271, %v269
      %s273 = scalar_lea.vmem %s207, 48
      %v274 = vld [vmem:[%s273] sm:$0xf]
      %276 = vrot.lane.b32.xlu0 %v274, 112
      %v277 = vpop.permute.xlu0 %276
      %vm279 = vcmask 1044352
      %280 = vst.msk [vmem:[#allocation2] sm:$0xf] %vm279, %v277
      %v281 = vld [vmem:[%s265 + $0x1] sm:$0xf]
      %282 = vst.msk [vmem:[#allocation2 + $0x8] sm:$0xf] %vm225, %v281
      %v283 = vld [vmem:[%s265] sm:$0xf]
      %v285 = vrot.slane %v283, 4
      %vm287 = vcmask 130052
      %288 = vst.msk [vmem:[#allocation2] sm:$0xf0] %vm287, %v285
      %v289 = vld [vmem:[%s273] sm:$0xf]
      %v291 = vrot.slane %v289, 4
      %292 = vrot.lane.b32.xlu0 %v291, 16
      %v293 = vpop.permute.xlu0 %292
      %vm295 = vcmask 261252
      %296 = vst.msk [vmem:[#allocation2] sm:$0xf0] %vm295, %v293
      %v297 = vld [vmem:[%s265 + $0x1] sm:$0xf]
      %v299 = vrot.slane %v297, 4
      %300 = vrot.lane.b32.xlu0 %v299, 32
      %v301 = vpop.permute.xlu0 %300
      %vm303 = vcmask 392452
      %304 = vst.msk [vmem:[#allocation2] sm:$0xf0] %vm303, %v301
      %s305 = scalar_lea.vmem %s207, 88
      %v306 = vld [vmem:[%s305] sm:$0xf]
      %v308 = vrot.slane %v306, 4
      %309 = vrot.lane.b32.xlu0 %v308, 48
      %v310 = vpop.permute.xlu0 %309
      %vm312 = vcmask 523652
      %313 = vst.msk [vmem:[#allocation2] sm:$0xf0] %vm312, %v310
      %s314 = scalar_lea.vmem %s207, 128
      %v315 = vld [vmem:[%s314] sm:$0xf]
      %v317 = vrot.slane %v315, 4
      %318 = vrot.lane.b32.xlu0 %v317, 64
      %v319 = vpop.permute.xlu0 %318
      %vm321 = vcmask 654852
      %322 = vst.msk [vmem:[#allocation2] sm:$0xf0] %vm321, %v319
      %v323 = vld [vmem:[%s305 + $0x1] sm:$0xf]
      %v325 = vrot.slane %v323, 4
      %326 = vrot.lane.b32.xlu0 %v325, 80
      %v327 = vpop.permute.xlu0 %326
      %vm329 = vcmask 786052
      %330 = vst.msk [vmem:[#allocation2] sm:$0xf0] %vm329, %v327
      %s331 = scalar_lea.vmem %s207, 16
      %v332 = vld [vmem:[%s331] sm:$0xf]
      %v334 = vrot.slane %v332, 4
      %335 = vrot.lane.b32.xlu0 %v334, 96
      %v336 = vpop.permute.xlu0 %335
      %vm338 = vcmask 917252
      %339 = vst.msk [vmem:[#allocation2] sm:$0xf0] %vm338, %v336
      %s340 = scalar_lea.vmem %s207, 56
      %v341 = vld [vmem:[%s340] sm:$0xf]
      %v343 = vrot.slane %v341, 4
      %344 = vrot.lane.b32.xlu0 %v343, 112
      %v345 = vpop.permute.xlu0 %344
      %vm347 = vcmask 1048452
      %348 = vst.msk [vmem:[#allocation2] sm:$0xf0] %vm347, %v345
      %v349 = vld [vmem:[%s331 + $0x1] sm:$0xf]
      %v351 = vrot.slane %v349, 4
      %353 = vst.msk [vmem:[#allocation2 + $0x8] sm:$0xf0] %vm287, %v351
      %v354 = vld [vmem:[%s331] sm:$0xf]
      %355 = vst.msk [vmem:[#allocation2 + $0x10] sm:$0xf] %vm225, %v354
      %v356 = vld [vmem:[%s340] sm:$0xf]
      %358 = vrot.lane.b32.xlu0 %v356, 16
      %v359 = vpop.permute.xlu0 %358
      %361 = vst.msk [vmem:[#allocation2 + $0x10] sm:$0xf] %vm233, %v359
      %v362 = vld [vmem:[%s331 + $0x1] sm:$0xf]
      %364 = vrot.lane.b32.xlu0 %v362, 32
      %v365 = vpop.permute.xlu0 %364
      %367 = vst.msk [vmem:[#allocation2 + $0x10] sm:$0xf] %vm240, %v365
      %s368 = scalar_lea.vmem %s207, 96
      %v369 = vld [vmem:[%s368] sm:$0xf]
      %371 = vrot.lane.b32.xlu0 %v369, 48
      %v372 = vpop.permute.xlu0 %371
      %374 = vst.msk [vmem:[#allocation2 + $0x10] sm:$0xf] %vm248, %v372
      %s375 = scalar_lea.vmem %s207, 136
      %v376 = vld [vmem:[%s375] sm:$0xf]
      %378 = vrot.lane.b32.xlu0 %v376, 64
      %v379 = vpop.permute.xlu0 %378
      %381 = vst.msk [vmem:[#allocation2 + $0x10] sm:$0xf] %vm256, %v379
      %v382 = vld [vmem:[%s368 + $0x1] sm:$0xf]
      %384 = vrot.lane.b32.xlu0 %v382, 80
      %v385 = vpop.permute.xlu0 %384
      %387 = vst.msk [vmem:[#allocation2 + $0x10] sm:$0xf] %vm263, %v385
      %s388 = scalar_lea.vmem %s207, 24
      %v389 = vld [vmem:[%s388] sm:$0xf]
      %391 = vrot.lane.b32.xlu0 %v389, 96
      %v392 = vpop.permute.xlu0 %391
      %394 = vst.msk [vmem:[#allocation2 + $0x10] sm:$0xf] %vm271, %v392
      %s395 = scalar_lea.vmem %s207, 64
      %v396 = vld [vmem:[%s395] sm:$0xf]
      %398 = vrot.lane.b32.xlu0 %v396, 112
      %v399 = vpop.permute.xlu0 %398
      %401 = vst.msk [vmem:[#allocation2 + $0x10] sm:$0xf] %vm279, %v399
      %v402 = vld [vmem:[%s388 + $0x1] sm:$0xf]
      %403 = vst.msk [vmem:[#allocation2 + $0x18] sm:$0xf] %vm225, %v402
      %v404 = vld [vmem:[%s388] sm:$0xf]
      %v406 = vrot.slane %v404, 4
      %408 = vst.msk [vmem:[#allocation2 + $0x10] sm:$0xf0] %vm287, %v406
      %v409 = vld [vmem:[%s395] sm:$0xf]
      %v411 = vrot.slane %v409, 4
      %412 = vrot.lane.b32.xlu0 %v411, 16
      %v413 = vpop.permute.xlu0 %412
      %415 = vst.msk [vmem:[#allocation2 + $0x10] sm:$0xf0] %vm295, %v413
      %v416 = vld [vmem:[%s388 + $0x1] sm:$0xf]
      %v418 = vrot.slane %v416, 4
      %419 = vrot.lane.b32.xlu0 %v418, 32
      %v420 = vpop.permute.xlu0 %419
      %422 = vst.msk [vmem:[#allocation2 + $0x10] sm:$0xf0] %vm303, %v420
      %s423 = scalar_lea.vmem %s207, 104
      %v424 = vld [vmem:[%s423] sm:$0xf]
      %v426 = vrot.slane %v424, 4
      %427 = vrot.lane.b32.xlu0 %v426, 48
      %v428 = vpop.permute.xlu0 %427
      %430 = vst.msk [vmem:[#allocation2 + $0x10] sm:$0xf0] %vm312, %v428
      %s431 = scalar_lea.vmem %s207, 144
      %v432 = vld [vmem:[%s431] sm:$0xf]
      %v434 = vrot.slane %v432, 4
      %435 = vrot.lane.b32.xlu0 %v434, 64
      %v436 = vpop.permute.xlu0 %435
      %438 = vst.msk [vmem:[#allocation2 + $0x10] sm:$0xf0] %vm321, %v436
      %v439 = vld [vmem:[%s423 + $0x1] sm:$0xf]
      %v441 = vrot.slane %v439, 4
      %442 = vrot.lane.b32.xlu0 %v441, 80
      %v443 = vpop.permute.xlu0 %442
      %445 = vst.msk [vmem:[#allocation2 + $0x10] sm:$0xf0] %vm329, %v443
      %s446 = scalar_lea.vmem %s207, 32
      %v447 = vld [vmem:[%s446] sm:$0xf]
      %v449 = vrot.slane %v447, 4
      %450 = vrot.lane.b32.xlu0 %v449, 96
      %v451 = vpop.permute.xlu0 %450
      %453 = vst.msk [vmem:[#allocation2 + $0x10] sm:$0xf0] %vm338, %v451
      %s454 = scalar_lea.vmem %s207, 72
      %v455 = vld [vmem:[%s454] sm:$0xf]
      %v457 = vrot.slane %v455, 4
      %458 = vrot.lane.b32.xlu0 %v457, 112
      %v459 = vpop.permute.xlu0 %458
      %461 = vst.msk [vmem:[#allocation2 + $0x10] sm:$0xf0] %vm347, %v459
      %v462 = vld [vmem:[%s446 + $0x1] sm:$0xf]
      %v464 = vrot.slane %v462, 4
      %466 = vst.msk [vmem:[#allocation2 + $0x18] sm:$0xf0] %vm287, %v464
      %v467 = vld [vmem:[#allocation2] sm:$0xff]
      %v468 = vld [vmem:[#allocation2 + $0x8] sm:$0xff]
      %v469 = vld [vmem:[#allocation2 + $0x10] sm:$0xff]
      %v470 = vld [vmem:[#allocation2 + $0x18] sm:$0xff]
      %v471 = vpack.c.bf16 %v469, %v467
      %v472 = vpack.c.bf16 %v470, %v468
      %v473 = vld [vmem:[%s1] sm:$0xff]
      %v474 = vld [vmem:[%s1 + $0x8] sm:$0xf]
      %v475 = vld [vmem:[%s1 + $0xc] sm:$0xff]
      %v476 = vld [vmem:[%s1 + $0x14] sm:$0xf]
      %v477 = vld [vmem:[%s1 + $0x18] sm:$0xff]
      %v478 = vld [vmem:[%s1 + $0x20] sm:$0xf]
      %v479 = vld [vmem:[%s1 + $0x24] sm:$0xff]
      %v480 = vld [vmem:[%s1 + $0x2c] sm:$0xf]
      %v481 = vld [vmem:[%s1 + $0x30] sm:$0xff]
      %v482 = vld [vmem:[%s1 + $0x38] sm:$0xf]
      %v483 = vld [vmem:[%s1 + $0x3c] sm:$0xff]
      %v484 = vld [vmem:[%s1 + $0x44] sm:$0xf]
      %v485 = vld [vmem:[%s1 + $0x48] sm:$0xff]
      %v486 = vld [vmem:[%s1 + $0x50] sm:$0xf]
      %v487 = vld [vmem:[%s1 + $0x54] sm:$0xff]
      %v488 = vld [vmem:[%s1 + $0x5c] sm:$0xf]
      %v489 = vld [vmem:[%s1 + $0x60] sm:$0xff]
      %v490 = vld [vmem:[%s1 + $0x68] sm:$0xf]
      %v491 = vld [vmem:[%s1 + $0x6c] sm:$0xff]
      %v492 = vld [vmem:[%s1 + $0x74] sm:$0xf]
      %v493 = vld [vmem:[%s1 + $0x78] sm:$0xff]
      %v494 = vld [vmem:[%s1 + $0x80] sm:$0xf]
      %v495 = vld [vmem:[%s1 + $0x84] sm:$0xff]
      %v496 = vld [vmem:[%s1 + $0x8c] sm:$0xf]
      %v497 = vld [vmem:[%s1 + $0x90] sm:$0xff]
      %v498 = vld [vmem:[%s1 + $0x98] sm:$0xf]
      %v499 = vld [vmem:[%s1 + $0x9c] sm:$0xff]
      %v500 = vld [vmem:[%s1 + $0xa4] sm:$0xf]
      %v501 = vld [vmem:[%s1 + $0xa8] sm:$0xff]
      %v502 = vld [vmem:[%s1 + $0xb0] sm:$0xf]
      %v503 = vld [vmem:[%s1 + $0xb4] sm:$0xff]
      %v504 = vld [vmem:[%s1 + $0xbc] sm:$0xf]
      %v505 = vld [vmem:[%s1 + $0xc0] sm:$0xff]
      %v506 = vld [vmem:[%s1 + $0xc8] sm:$0xf]
      %v507 = vld [vmem:[%s1 + $0xcc] sm:$0xff]
      %v508 = vld [vmem:[%s1 + $0xd4] sm:$0xf]
      %v545 = vunpack.c.l.b16 %v473
      %v546 = vunpack.c.h.b16 %v473
      %v547 = vunpack.c.l.b16 %v474
      %v548 = vunpack.c.l.b16 %v475
      %v549 = vunpack.c.h.b16 %v475
      %v550 = vunpack.c.l.b16 %v476
      %v551 = vunpack.c.l.b16 %v477
      %v552 = vunpack.c.h.b16 %v477
      %v553 = vunpack.c.l.b16 %v478
      %v554 = vunpack.c.l.b16 %v479
      %v555 = vunpack.c.h.b16 %v479
      %v556 = vunpack.c.l.b16 %v480
      %v557 = vunpack.c.l.b16 %v481
      %v558 = vunpack.c.h.b16 %v481
      %v559 = vunpack.c.l.b16 %v482
      %v560 = vunpack.c.l.b16 %v483
      %v561 = vunpack.c.h.b16 %v483
      %v562 = vunpack.c.l.b16 %v484
      %v563 = vunpack.c.l.b16 %v485
      %v564 = vunpack.c.h.b16 %v485
      %v565 = vunpack.c.l.b16 %v486
      %v566 = vunpack.c.l.b16 %v487
      %v567 = vunpack.c.h.b16 %v487
      %v568 = vunpack.c.l.b16 %v488
      %v569 = vunpack.c.l.b16 %v489
      %v570 = vunpack.c.h.b16 %v489
      %v571 = vunpack.c.l.b16 %v490
      %v572 = vunpack.c.l.b16 %v491
      %v573 = vunpack.c.h.b16 %v491
      %v574 = vunpack.c.l.b16 %v492
      %v575 = vunpack.c.l.b16 %v493
      %v576 = vunpack.c.h.b16 %v493
      %v577 = vunpack.c.l.b16 %v494
      %v578 = vunpack.c.l.b16 %v495
      %v579 = vunpack.c.h.b16 %v495
      %v580 = vunpack.c.l.b16 %v496
      %v581 = vunpack.c.l.b16 %v497
      %v582 = vunpack.c.h.b16 %v497
      %v583 = vunpack.c.l.b16 %v498
      %v584 = vunpack.c.l.b16 %v499
      %v585 = vunpack.c.h.b16 %v499
      %v586 = vunpack.c.l.b16 %v500
      %v587 = vunpack.c.l.b16 %v501
      %v588 = vunpack.c.h.b16 %v501
      %v589 = vunpack.c.l.b16 %v502
      %v590 = vunpack.c.l.b16 %v503
      %v591 = vunpack.c.h.b16 %v503
      %v592 = vunpack.c.l.b16 %v504
      %v593 = vunpack.c.l.b16 %v505
      %v594 = vunpack.c.h.b16 %v505
      %v595 = vunpack.c.l.b16 %v506
      %v596 = vunpack.c.l.b16 %v507
      %v597 = vunpack.c.h.b16 %v507
      %v598 = vunpack.c.l.b16 %v508
      %v599 = vpack.c.b16 %v548, %v545
      %v600 = vpack.c.b16 %v549, %v546
      %v601 = vpack.c.b16 %v550, %v547
      %v602 = vpack.c.b16 %v554, %v551
      %v603 = vpack.c.b16 %v555, %v552
      %v604 = vpack.c.b16 %v556, %v553
      %v605 = vpack.c.b16 %v560, %v557
      %v606 = vpack.c.b16 %v561, %v558
      %v607 = vpack.c.b16 %v562, %v559
      %v608 = vpack.c.b16 %v566, %v563
      %v609 = vpack.c.b16 %v567, %v564
      %v610 = vpack.c.b16 %v568, %v565
      %v611 = vpack.c.b16 %v572, %v569
      %v612 = vpack.c.b16 %v573, %v570
      %v613 = vpack.c.b16 %v574, %v571
      %v614 = vpack.c.b16 %v578, %v575
      %v615 = vpack.c.b16 %v579, %v576
      %v616 = vpack.c.b16 %v580, %v577
      %v617 = vpack.c.b16 %v584, %v581
      %v618 = vpack.c.b16 %v585, %v582
      %v619 = vpack.c.b16 %v586, %v583
      %v620 = vpack.c.b16 %v590, %v587
      %v621 = vpack.c.b16 %v591, %v588
      %v622 = vpack.c.b16 %v592, %v589
      %v623 = vpack.c.b16 %v596, %v593
      %v624 = vpack.c.b16 %v597, %v594
      %v625 = vpack.c.b16 %v598, %v595
      %vm653 = vcmask 130048
      %v655 = vsel %vm653, %v472, 0
      %657 = vmatprep.subr.bf16.mxu0 %v621
      %658 = vmatpush1.bf16.msra.mxu0 %v620
      %659 = vmatprep.subr.bf16.mxu0 %v618
      %660 = vmatpush1.bf16.msra.mxu0 %v617
      %661 = vmatprep.subr.bf16.mxu0 %v615
      %662 = vmatpush1.bf16.msra.mxu0 %v614
      %663 = vmatprep.subr.bf16.mxu0 %v612
      %664 = vmatpush1.bf16.msra.mxu0 %v611
      %665 = vmatprep.subr.bf16.mxu0 %v609
      %666 = vmatpush1.bf16.msra.mxu0 %v608
      %667 = vmatprep.subr.bf16.mxu0 %v606
      %668 = vmatpush1.bf16.msra.mxu0 %v605
      %669 = vmatprep.subr.bf16.mxu0 %v603
      %670 = vmatpush1.bf16.msra.mxu0 %v602
      %671 = vmatprep.subr.bf16.mxu0 %v600
      %672 = vmatpush1.bf16.msra.mxu0 %v599
      %673 = vmatprep.subr.bf16.mxu0 0
      %674 = vmatpush2.bf16.msra.mxu0 0
      %675 = vmatprep.subr.bf16.mxu0 0
      %676 = vmatpush2.bf16.msra.mxu0 0
      %677 = vmatprep.subr.bf16.mxu0 0
      %678 = vmatpush2.bf16.msra.mxu0 0
      %679 = vmatprep.subr.bf16.mxu0 0
      %680 = vmatpush2.bf16.msra.mxu0 0
      %681 = vmatprep.subr.bf16.mxu0 0
      %682 = vmatpush2.bf16.msra.mxu0 0
      %683 = vmatprep.subr.bf16.mxu0 0
      %684 = vmatpush2.bf16.msra.mxu0 0
      %685 = vmatprep.subr.bf16.mxu0 0
      %686 = vmatpush2.bf16.msra.mxu0 0
      %687 = vmatprep.subr.bf16.mxu0 %v624
      %688 = vmatpush2.bf16.msra.mxu0 %v623
      %689 = vmatprep.mubr.bf16.mxu0 %v655
      %690 = vmatmul.mubr.bf16.gmra.mxu0 %v471
      %v691 = vpop.f32.mrf.mxu0
      %v692 = vadd.f32 0.0, %v691
      %v693 = vpop.f32.mrf.mxu0
      %v694 = vadd.f32 0.0, %v693
      %v695 = vpop.f32.mrf.mxu0
      %v696 = vadd.f32 0.0, %v695
      %v697 = vpop.f32.mrf.mxu0
      %v698 = vadd.f32 0.0, %v697
      %699 = vdwg.mxu0
      %700 = vmatprep.subr.bf16.mxu0 0
      %701 = vmatpush1.bf16.msra.mxu0 %v622
      %702 = vmatprep.subr.bf16.mxu0 0
      %703 = vmatpush1.bf16.msra.mxu0 %v619
      %704 = vmatprep.subr.bf16.mxu0 0
      %705 = vmatpush1.bf16.msra.mxu0 %v616
      %706 = vmatprep.subr.bf16.mxu0 0
      %707 = vmatpush1.bf16.msra.mxu0 %v613
      %708 = vmatprep.subr.bf16.mxu0 0
      %709 = vmatpush1.bf16.msra.mxu0 %v610
      %710 = vmatprep.subr.bf16.mxu0 0
      %711 = vmatpush1.bf16.msra.mxu0 %v607
      %712 = vmatprep.subr.bf16.mxu0 0
      %713 = vmatpush1.bf16.msra.mxu0 %v604
      %714 = vmatprep.subr.bf16.mxu0 0
      %715 = vmatpush1.bf16.msra.mxu0 %v601
      %716 = vmatprep.subr.bf16.mxu0 0
      %717 = vmatpush2.bf16.msra.mxu0 0
      %718 = vmatprep.subr.bf16.mxu0 0
      %719 = vmatpush2.bf16.msra.mxu0 0
      %720 = vmatprep.subr.bf16.mxu0 0
      %721 = vmatpush2.bf16.msra.mxu0 0
      %722 = vmatprep.subr.bf16.mxu0 0
      %723 = vmatpush2.bf16.msra.mxu0 0
      %724 = vmatprep.subr.bf16.mxu0 0
      %725 = vmatpush2.bf16.msra.mxu0 0
      %726 = vmatprep.subr.bf16.mxu0 0
      %727 = vmatpush2.bf16.msra.mxu0 0
      %728 = vmatprep.subr.bf16.mxu0 0
      %729 = vmatpush2.bf16.msra.mxu0 0
      %730 = vmatprep.subr.bf16.mxu0 0
      %731 = vmatpush2.bf16.msra.mxu0 %v625
      %732 = vmatprep.mubr.bf16.mxu0 %v655
      %733 = vmatmul.mubr.bf16.gmra.mxu0 %v471
      %v734 = vpop.f32.mrf.mxu0
      %v735 = vadd.f32 0.0, %v734
      %v736 = vpop.f32.mrf.mxu0
      %v737 = vpop.f32.mrf.mxu0
      %v738 = vadd.f32 0.0, %v737
      %v739 = vpop.f32.mrf.mxu0
      %740 = vdwg.mxu0
      %v741 = vpack.c.bf16 %v696, %v692
      %v742 = vpack.c.bf16 %v698, %v694
      %v743 = vpack.c.bf16 %v738, %v735
      %v747 = vunpack.c.l.b16 %v741
      %v748 = vunpack.c.l.b16 %v742
      %v749 = vunpack.c.l.b16 %v743
      %v750 = vunpack.c.h.b16 %v741
      %v751 = vunpack.c.h.b16 %v742
      %v752 = vunpack.c.h.b16 %v743
      %v753 = vpack.c.b16 %v748, %v747
      %v754 = vpack.c.b16 %v749, %v749
      %v755 = vpack.c.b16 %v751, %v750
      %v756 = vpack.c.b16 %v752, %v752
      %761 = vst [vmem:[%s212] sm:$0xff] %v753
      %762 = vst [vmem:[%s212 + $0x8] sm:$0xf] %v754
      %763 = vst [vmem:[%s212 + $0xc] sm:$0xff] %v755
      %764 = vst [vmem:[%s212 + $0x14] sm:$0xf] %v756
      %v765 = vadd.f32 %v692, %v696
      %v766 = vrot.slane %v765, 4
      %v767 = vadd.f32 %v765, %v766
      %v768 = vrot.slane %v767, 2
      %v769 = vadd.f32 %v767, %v768
      %v770 = vrot.slane %v769, 1
      %v771 = vadd.f32 %v769, %v770
      %v772 = vadd.f32 %v694, %v698
      %v773 = vrot.slane %v772, 4
      %v774 = vadd.f32 %v772, %v773
      %v775 = vrot.slane %v774, 2
      %v776 = vadd.f32 %v774, %v775
      %v777 = vrot.slane %v776, 1
      %v778 = vadd.f32 %v776, %v777
      %v779 = vadd.f32 %v735, %v738
      %v780 = vrot.slane %v779, 4
      %v781 = vadd.f32 %v779, %v780
      %v782 = vrot.slane %v781, 2
      %v783 = vadd.f32 %v781, %v782
      %v784 = vrot.slane %v783, 1
      %v785 = vadd.f32 %v783, %v784
      %v789 = vcombine.low %v771, %v778
      %v791 = vunpack.c.l.s4 1966171168
      %v792 = vunpack.c.0.s8 %v791
      %v793 = vlaneseq
      %v794 = vshrl.u32 %v793, 7
      %v795 = vsub.s32 %v792, %v794
      %v796 = vrot.slane %v789, %v795
      %v798 = vunpack.c.l.s4 1966171168
      %v799 = vunpack.c.0.s8 %v798
      %v800 = vlaneseq
      %v801 = vshrl.u32 %v800, 7
      %v802 = vsub.s32 %v799, %v801
      %v803 = vrot.slane %v785, %v802
      %v804 = vcombine.low %v796, %v803
      %v806 = vunpack.c.l.s4 1966171168
      %v807 = vunpack.c.0.s8 %v806
      %v808 = vlaneseq
      %v809 = vshrl.u32 %v808, 7
      %v810 = vsub.s32 %v807, %v809
      %v811 = vrot.slane %v804, %v810
      %v813 = vlaneseq
      %vm814 = vcmp.ge.s32.totalorder %v813, 0
      %vm815 = vcmp.lt.s32.totalorder %v813, 384
      %vm816 = vmand %vm814, %vm815
      %817 = vst.msk [vmem:[%s217] ss:$2 sm:$0x7] %vm816, %v811
      %v818 = vmul.f32 %v692, %v692
      %v819 = vmul.f32 %v694, %v694
      %v820 = vmul.f32 %v735, %v735
      %v821 = vmul.f32 %v696, %v696
      %v822 = vmul.f32 %v698, %v698
      %v823 = vmul.f32 %v738, %v738
      %v824 = vadd.f32 %v818, %v821
      %v825 = vrot.slane %v824, 4
      %v826 = vadd.f32 %v824, %v825
      %v827 = vrot.slane %v826, 2
      %v828 = vadd.f32 %v826, %v827
      %v829 = vrot.slane %v828, 1
      %v830 = vadd.f32 %v828, %v829
      %v831 = vadd.f32 %v819, %v822
      %v832 = vrot.slane %v831, 4
      %v833 = vadd.f32 %v831, %v832
      %v834 = vrot.slane %v833, 2
      %v835 = vadd.f32 %v833, %v834
      %v836 = vrot.slane %v835, 1
      %v837 = vadd.f32 %v835, %v836
      %v838 = vadd.f32 %v820, %v823
      %v839 = vrot.slane %v838, 4
      %v840 = vadd.f32 %v838, %v839
      %v841 = vrot.slane %v840, 2
      %v842 = vadd.f32 %v840, %v841
      %v843 = vrot.slane %v842, 1
      %v844 = vadd.f32 %v842, %v843
      %v848 = vcombine.low %v830, %v837
      %v850 = vunpack.c.l.s4 1966171168
      %v851 = vunpack.c.0.s8 %v850
      %v852 = vlaneseq
      %v853 = vshrl.u32 %v852, 7
      %v854 = vsub.s32 %v851, %v853
      %v855 = vrot.slane %v848, %v854
      %v857 = vunpack.c.l.s4 1966171168
      %v858 = vunpack.c.0.s8 %v857
      %v859 = vlaneseq
      %v860 = vshrl.u32 %v859, 7
      %v861 = vsub.s32 %v858, %v860
      %v862 = vrot.slane %v844, %v861
      %v863 = vcombine.low %v855, %v862
      %v865 = vunpack.c.l.s4 1966171168
      %v866 = vunpack.c.0.s8 %v865
      %v867 = vlaneseq
      %v868 = vshrl.u32 %v867, 7
      %v869 = vsub.s32 %v866, %v868
      %v870 = vrot.slane %v863, %v869
      %s872 = scalar_lea.vmem %s217, 1
      %873 = vst.msk [vmem:[%s872] ss:$2 sm:$0x7] %vm816, %v870
      %v874 = vld [vmem:[%s207] sm:$0xf]
      %v875 = vld [vmem:[%s207 + $0x8] sm:$0xf]
      %v876 = vld [vmem:[%s207 + $0x10] sm:$0xf]
      %v877 = vld [vmem:[%s207 + $0x18] sm:$0xf]
      %v878 = vld [vmem:[%s227] sm:$0xf]
      %v879 = vld [vmem:[%s227 + $0x8] sm:$0xf]
      %v880 = vld [vmem:[%s227 + $0x10] sm:$0xf]
      %v881 = vld [vmem:[%s227 + $0x18] sm:$0xf]
      %v882 = vmax.f32 %v874, %v878
      %v883 = vmax.f32 %v875, %v879
      %v884 = vmax.f32 %v876, %v880
      %v885 = vmax.f32 %v877, %v881
      %v886 = vld [vmem:[%s207 + $0x1] sm:$0xf]
      %v887 = vld [vmem:[%s207 + $0x9] sm:$0xf]
      %v888 = vld [vmem:[%s207 + $0x11] sm:$0xf]
      %v889 = vld [vmem:[%s207 + $0x19] sm:$0xf]
      %v890 = vmax.f32 %v882, %v886
      %v891 = vmax.f32 %v883, %v887
      %v892 = vmax.f32 %v884, %v888
      %v893 = vmax.f32 %v885, %v889
      %v894 = vld [vmem:[%s242] sm:$0xf]
      %v895 = vld [vmem:[%s242 + $0x8] sm:$0xf]
      %v896 = vld [vmem:[%s242 + $0x10] sm:$0xf]
      %v897 = vld [vmem:[%s242 + $0x18] sm:$0xf]
      %v898 = vmax.f32 %v890, %v894
      %v899 = vmax.f32 %v891, %v895
      %v900 = vmax.f32 %v892, %v896
      %v901 = vmax.f32 %v893, %v897
      %v902 = vld [vmem:[%s250] sm:$0xf]
      %v903 = vld [vmem:[%s250 + $0x8] sm:$0xf]
      %v904 = vld [vmem:[%s250 + $0x10] sm:$0xf]
      %v905 = vld [vmem:[%s250 + $0x18] sm:$0xf]
      %v906 = vmax.f32 %v898, %v902
      %v907 = vmax.f32 %v899, %v903
      %v908 = vmax.f32 %v900, %v904
      %v909 = vmax.f32 %v901, %v905
      %v910 = vld [vmem:[%s242 + $0x1] sm:$0xf]
      %v911 = vld [vmem:[%s242 + $0x9] sm:$0xf]
      %v912 = vld [vmem:[%s242 + $0x11] sm:$0xf]
      %v913 = vld [vmem:[%s242 + $0x19] sm:$0xf]
      %v914 = vmax.f32 %v906, %v910
      %v915 = vmax.f32 %v907, %v911
      %v916 = vmax.f32 %v908, %v912
      %v917 = vmax.f32 %v909, %v913
      %v918 = vld [vmem:[%s265] sm:$0xf]
      %v919 = vld [vmem:[%s265 + $0x8] sm:$0xf]
      %v920 = vld [vmem:[%s265 + $0x10] sm:$0xf]
      %v921 = vld [vmem:[%s265 + $0x18] sm:$0xf]
      %v922 = vmax.f32 %v914, %v918
      %v923 = vmax.f32 %v915, %v919
      %v924 = vmax.f32 %v916, %v920
      %v925 = vmax.f32 %v917, %v921
      %v926 = vld [vmem:[%s273] sm:$0xf]
      %v927 = vld [vmem:[%s273 + $0x8] sm:$0xf]
      %v928 = vld [vmem:[%s273 + $0x10] sm:$0xf]
      %v929 = vld [vmem:[%s273 + $0x18] sm:$0xf]
      %v930 = vmax.f32 %v922, %v926
      %v931 = vmax.f32 %v923, %v927
      %v932 = vmax.f32 %v924, %v928
      %v933 = vmax.f32 %v925, %v929
      %v934 = vld [vmem:[%s265 + $0x1] sm:$0xf]
      %v935 = vld [vmem:[%s265 + $0x9] sm:$0xf]
      %v936 = vld [vmem:[%s265 + $0x11] sm:$0xf]
      %v937 = vld [vmem:[%s265 + $0x19] sm:$0xf]
      %v938 = vmax.f32 %v930, %v934
      %v939 = vmax.f32 %v931, %v935
      %v940 = vmax.f32 %v932, %v936
      %v941 = vmax.f32 %v933, %v937
      %942 = vst.msk [vmem:[%s222] sm:$0xf] %vm225, %v938
      %943 = vst.msk [vmem:[%s222 + $0x4] sm:$0xf] %vm225, %v939
      %944 = vst.msk [vmem:[%s222 + $0x8] sm:$0xf] %vm225, %v940
      %945 = vst.msk [vmem:[%s222 + $0xc] sm:$0xf] %vm225, %v941
      %p946 = scmp.lt.s32.totalorder %s16, 1
      %s947 = scalar_select %p946, %s16, 1
      %s948 = smul.addr %s947, 6
      %s949 = smul.addr %s948, 4
      %s950 = scalar_lea.vmem %s2, %s949
      %p951 = scmp.lt.s32.totalorder %s16, 1
      %s952 = scalar_select %p951, %s16, 1
      %s953 = smul.addr %s952, 3
      %s954 = smul.addr %s953, 2
      %s955 = scalar_lea.vmem %s3, %s954
      %p956 = scmp.lt.s32.totalorder %s16, 1
      %s957 = scalar_select %p956, %s16, 1
      %s958 = smul.addr %s957, 4
      %s959 = smul.addr %s958, 4
      %s960 = scalar_lea.vmem %s4, %s959
      // Predicated region
      $region29: #{incept_b_forward.5} parent=27 // pred_check
        %p961 = pneg %p81
      $region30: #{incept_b_forward.5} parent=27 // pred_check_branch
        %963 = sbr.rel (%p961) target = $region32
      $region31: #{incept_b_forward.5} parent=27 // pred_region
        _
      $region32: #{incept_b_forward.5} parent=27 // pred_fallthru
        _
      // Predicated region
      $region33: #{incept_b_forward.5} parent=27 // pred_check
        %p964 = pneg %p107
      $region34: #{incept_b_forward.5} parent=27 // pred_check_branch
        %966 = sbr.rel (%p964) target = $region36
      $region35: #{incept_b_forward.5} parent=27 // pred_region
        _
      $region36: #{incept_b_forward.5} parent=27 // pred_fallthru
        _
      // Predicated region
      $region37: #{incept_b_forward.5} parent=27 // pred_check
        %p967 = pneg %p133
      $region38: #{incept_b_forward.5} parent=27 // pred_check_branch
        %969 = sbr.rel (%p967) target = $region40
      $region39: #{incept_b_forward.5} parent=27 // pred_region
        _
      $region40: #{incept_b_forward.5} parent=27 // pred_fallthru
        _
    $region28: #{incept_b_forward.5} parent=5 // pred_fallthru
      _
    %p970 = scmp.le.s32.totalorder 2, %s11
    // Predicated region
    $region41: #{incept_b_forward.5} parent=5 // pred_check
      %p971 = pneg %p970
    $region42: #{incept_b_forward.5} parent=5 // pred_check_branch
      %973 = sbr.rel (%p971) target = $region44
    $region43: #{incept_b_forward.5} parent=5 // pred_region
      %s974 = ssub.s32 %s11, 2
      // Predicated region
      $region45: #{incept_b_forward.5} parent=43 // pred_check
        %p975 = pneg %p87
      $region46: #{incept_b_forward.5} parent=43 // pred_check_branch
        %977 = sbr.rel (%p975) target = $region48
      $region47: #{incept_b_forward.5} parent=43 // pred_region
        %p978 = scmp.lt.s32.totalorder %s17, 1
        %s979 = scalar_select %p978, %s17, 1
        %s980 = smul.addr %s979, 6
        %s981 = smul.addr %s980, 4
        %s982 = scalar_lea.vmem %s2, %s981
      $region48: #{incept_b_forward.5} parent=43 // pred_fallthru
        _
      // Predicated region
      $region49: #{incept_b_forward.5} parent=43 // pred_check
        %p983 = pneg %p113
      $region50: #{incept_b_forward.5} parent=43 // pred_check_branch
        %985 = sbr.rel (%p983) target = $region52
      $region51: #{incept_b_forward.5} parent=43 // pred_region
        %p986 = scmp.lt.s32.totalorder %s17, 1
        %s987 = scalar_select %p986, %s17, 1
        %s988 = smul.addr %s987, 3
        %s989 = smul.addr %s988, 2
        %s990 = scalar_lea.vmem %s3, %s989
      $region52: #{incept_b_forward.5} parent=43 // pred_fallthru
        _
      // Predicated region
      $region53: #{incept_b_forward.5} parent=43 // pred_check
        %p991 = pneg %p139
      $region54: #{incept_b_forward.5} parent=43 // pred_check_branch
        %993 = sbr.rel (%p991) target = $region56
      $region55: #{incept_b_forward.5} parent=43 // pred_region
        %p994 = scmp.lt.s32.totalorder %s17, 1
        %s995 = scalar_select %p994, %s17, 1
        %s996 = smul.addr %s995, 4
        %s997 = smul.addr %s996, 4
        %s998 = scalar_lea.vmem %s4, %s997
      $region56: #{incept_b_forward.5} parent=43 // pred_fallthru
        _
    $region44: #{incept_b_forward.5} parent=5 // pred_fallthru
      _
  $region6: #{incept_b_forward.5} parent=0 // loop_footer
    %s15 = sadd.s32 1, %s11
  $region7: #{incept_b_forward.5} parent=0 // loop_footer_branch
    %10 = sbr.rel target = $region3
  $region8: #{incept_b_forward.5} parent=0 // loop_exit
    _

</llo_original>
